<compile_context>
chip_gen: v6e
topology: v6e:2x2x1
jax: 0.10.0
libtpu: 0.0.40
codegen_flags: <defaults>
</compile_context>

<pallas_src>
import functools

import jax
import jax.numpy as jnp
from jax.experimental import pallas as pl
from jax.experimental.pallas import tpu as pltpu


MATMUL_DTYPE = jnp.float32   # set to jnp.bfloat16 on v6e/v7x for MXU throughput
LANE = 128
SUBLANE = 8


def _round_up(x, m):
    return (x + m - 1) // m * m


def _mm(a, b):
    """MXU matmul with f32 accumulation (operand casts are no-ops in the f32 path)."""
    return jnp.dot(a.astype(MATMUL_DTYPE), b.astype(MATMUL_DTYPE),
                   preferred_element_type=jnp.float32)


# ----------------------------------------------------------------------------
# Fused multi-layer GRU kernel (one batch tile per grid step).
#   refs layout: x, then per layer (wi_cat, wh_cat, bi_merged, bhn),
#                then outputs (out, state), then scratch (gi).
#   x      : (T, Bt, E)        embedded input, time-major
#   wi_cat : (in, 3*Hp)        per-gate [r|z|n] input weights, lane-padded
#   wh_cat : (Hp, 3*Hp)        per-gate [r|z|n] hidden weights, lane-padded
#   bi     : (1, 3*Hp)         b_ir+b_hr | b_iz+b_hz | b_in
#   bhn    : (1, Hp)           hidden-side n-gate bias (added before r*)
#   out    : (T, Bt, Hp)       top-layer hidden at every step (padded)
#   state  : (L, Bt, Hp)       final hidden per layer (padded)
#   gi     : (T, Bt, 3*Hp)     hoisted time-parallel input projection (scratch)
# ----------------------------------------------------------------------------
def gru_stack_kernel(*refs, num_layers):
    x_ref = refs[0]
    layer_refs = refs[1:1 + 4 * num_layers]
    out_ref = refs[1 + 4 * num_layers]
    state_ref = refs[2 + 4 * num_layers]
    gi_s = refs[3 + 4 * num_layers]

    T, Bt, Hp = out_ref.shape
    h0 = jnp.zeros((Bt, Hp), jnp.float32)          # nn.GRU default initial state

    for l in range(num_layers):                    # static layer loop, slab stays in VMEM
        wi_ref, wh_ref, bi_ref, bhn_ref = layer_refs[4 * l: 4 * l + 4]

        src_ref = x_ref if l == 0 else out_ref     # layer l>0 reads previous output block
        in_dim = src_ref.shape[-1]
        # Merging (T, Bt) is a layout no-op because Bt % 8 == 0 (no VMEM relayout).
        x_all = src_ref[...].reshape(T * Bt, in_dim)
        # Hoisted, time-parallel fused-gate projection: one MXU matmul, M = T*Bt, N = 3*Hp.
        gi_s[...] = (_mm(x_all, wi_ref[...]) + bi_ref[...]).reshape(T, Bt, 3 * Hp)

        wh = wh_ref[...].astype(MATMUL_DTYPE)               # hoisted (no per-step cast)
        bhn = jnp.broadcast_to(bhn_ref[...], (Bt, Hp))      # hoisted broadcast

        def step(t, h, wh=wh, bhn=bhn):
            gi = gi_s[t]                                    # (Bt, 3Hp)
            gh = _mm(h, wh)                                 # single fused-gate matmul
            # Gate slices are lane-aligned (Hp is a multiple of 128).
            r = jax.nn.sigmoid(gi[:, 0:Hp] + gh[:, 0:Hp])
            z = jax.nn.sigmoid(gi[:, Hp:2 * Hp] + gh[:, Hp:2 * Hp])
            n = jnp.tanh(gi[:, 2 * Hp:3 * Hp] + r * (gh[:, 2 * Hp:3 * Hp] + bhn))
            h_new = (1.0 - z) * n + z * h
            out_ref[t] = h_new                              # unmasked (Bt, 128k) store
            return h_new

        # Full unroll for short sequences so adjacent steps' MXU/EUP work interleaves.
        h_last = jax.lax.fori_loop(0, T, step, h0,
                                   unroll=True if T <= 16 else 4)
        state_ref[l] = h_last


# ----------------------------------------------------------------------------
def _pick_batch_tile(B):
    if B % SUBLANE != 0:
        return B
    for cand in (64, 32, 16, 8):
        if B % cand == 0:
            return cand
    return B


def run_gru_stack(x_tbe, layer_args, num_layers, Hp, B_tile):
    T, B, E = x_tbe.shape
    nb = B // B_tile
    L = num_layers

    # Explicit VMEM budget (double-buffered blocks + resident weights + scratch),
    # with lane padding of the small-E input block accounted for.
    weight_bytes = sum(int(a.size) * a.dtype.itemsize for a in layer_args)
    est = (2 * (T * B_tile * _round_up(E, LANE) * 4
                + T * B_tile * Hp * 4
                + L * B_tile * Hp * 4
                + weight_bytes)
           + T * B_tile * 3 * Hp * 4)
    vmem_limit = int(min(64 << 20, max(32 << 20, 2 * est)))

    in_specs = [pl.BlockSpec((T, B_tile, E), lambda b: (0, b, 0))]
    for a in layer_args:
        in_specs.append(pl.BlockSpec(a.shape, lambda b: (0, 0)))   # resident weights

    out_specs = (pl.BlockSpec((T, B_tile, Hp), lambda b: (0, b, 0)),
                 pl.BlockSpec((L, B_tile, Hp), lambda b: (0, b, 0)))

    kernel = functools.partial(gru_stack_kernel, num_layers=L)
    return pl.pallas_call(
        kernel,
        out_shape=(jax.ShapeDtypeStruct((T, B, Hp), jnp.float32),
                   jax.ShapeDtypeStruct((L, B, Hp), jnp.float32)),
        grid_spec=pltpu.PrefetchScalarGridSpec(
            num_scalar_prefetch=0,
            grid=(nb,),
            in_specs=in_specs,
            out_specs=out_specs,
            scratch_shapes=[pltpu.VMEM((T, B_tile, 3 * Hp), jnp.float32)]),
        compiler_params=pltpu.CompilerParams(
            dimension_semantics=("parallel",),
            vmem_limit_bytes=vmem_limit),
    )(x_tbe, *layer_args)


# ----------------------------------------------------------------------------
# Wrapper: build gate-concatenated, lane-padded weights once (outside the kernel).
# Padded hidden lanes carry exact zeros through the recurrence (zero cols/rows/biases
# => r=z=0.5, n=0, h stays 0), so slicing back to H at the end is exact.
# ----------------------------------------------------------------------------
def _prep_layer_params(lp, H, Hp, in_dim, pad_in):
    w_ih = lp["w_ih"].astype(jnp.float32)   # (3H, in)  rows = [r; z; n]
    w_hh = lp["w_hh"].astype(jnp.float32)   # (3H, H)
    b_ih = lp["b_ih"].astype(jnp.float32)   # (3H,)
    b_hh = lp["b_hh"].astype(jnp.float32)   # (3H,)
    in_rows = Hp if pad_in else in_dim

    wi = jnp.zeros((in_rows, 3 * Hp), jnp.float32)
    wh = jnp.zeros((Hp, 3 * Hp), jnp.float32)
    bi = jnp.zeros((1, 3 * Hp), jnp.float32)
    for g in range(3):
        wi = wi.at[:in_dim, g * Hp:g * Hp + H].set(w_ih[g * H:(g + 1) * H].T)
        wh = wh.at[:H, g * Hp:g * Hp + H].set(w_hh[g * H:(g + 1) * H].T)
    bi = bi.at[0, 0:H].set(b_ih[0:H] + b_hh[0:H])                  # r gate (merged)
    bi = bi.at[0, Hp:Hp + H].set(b_ih[H:2 * H] + b_hh[H:2 * H])    # z gate (merged)
    bi = bi.at[0, 2 * Hp:2 * Hp + H].set(b_ih[2 * H:3 * H])        # n gate, input side
    bhn = jnp.zeros((1, Hp), jnp.float32).at[0, 0:H].set(b_hh[2 * H:3 * H])

    if MATMUL_DTYPE != jnp.float32:        # pre-cast once (no in-loop weight casts)
        wi = wi.astype(MATMUL_DTYPE)
        wh = wh.astype(MATMUL_DTYPE)
    return wi, wh, bi, bhn


def seq2seq_encoder_forward(params, X):
    """X: (B, T) int32 token ids.  Returns (output (T,B,H), state (L,B,H))."""
    emb = params["embedding"].astype(jnp.float32)
    x = emb[X.T]                                   # (T, B, E) time-major gather
    H = params["layers"][0]["w_hh"].shape[-1]
    Hp = _round_up(H, LANE)
    L = len(params["layers"])
    E = emb.shape[-1]
    B = X.shape[0]

    layer_args = []
    for l, lp in enumerate(params["layers"]):
        in_dim = E if l == 0 else H
        layer_args.extend(_prep_layer_params(lp, H, Hp, in_dim, pad_in=(l > 0)))

    if MATMUL_DTYPE != jnp.float32:
        x = x.astype(MATMUL_DTYPE)                 # halves the x DMA on v6e/v7x

    B_tile = _pick_batch_tile(B)
    out_p, state_p = run_gru_stack(x, layer_args, L, Hp, B_tile)
    return out_p[:, :, :H], state_p[:, :, :H]


# ----------------------------------------------------------------------------
# Pure-JAX reference (PyTorch nn.GRU math, canonical param layout)
# ----------------------------------------------------------------------------
def _ref_gru_layer(x_tbe, h0, w_ih, w_hh, b_ih, b_hh):
    def cell(h, x):
        gi = x @ w_ih.T + b_ih
        gh = h @ w_hh.T + b_hh
        i_r, i_z, i_n = jnp.split(gi, 3, axis=-1)
        h_r, h_z, h_n = jnp.split(gh, 3, axis=-1)
        r = jax.nn.sigmoid(i_r + h_r)
        z = jax.nn.sigmoid(i_z + h_z)
        n = jnp.tanh(i_n + r * h_n)
        h_new = (1.0 - z) * n + z * h
        return h_new, h_new
    h_fin, ys = jax.lax.scan(cell, h0, x_tbe)
    return ys, h_fin


def _ref_forward(params, X):
    x = params["embedding"][X.T]
    B = X.shape[0]
    H = params["layers"][0]["w_hh"].shape[-1]
    states = []
    for lp in params["layers"]:
        h0 = jnp.zeros((B, H), jnp.float32)
        x, h_fin = _ref_gru_layer(x, h0, lp["w_ih"], lp["w_hh"],
                                  lp["b_ih"], lp["b_hh"])
        states.append(h_fin)
    return x, jnp.stack(states, axis=0)


# ----------------------------------------------------------------------------
def make_params(key, vocab, E, H, num_layers):
    s = 0.1
    ks = jax.random.split(key, 1 + 4 * num_layers)
    params = {"embedding": s * jax.random.normal(ks[0], (vocab, E), jnp.float32),
              "layers": []}
    for l in range(num_layers):
        in_size = E if l == 0 else H
        k0, k1, k2, k3 = ks[1 + 4 * l: 5 + 4 * l]
        params["layers"].append({
            "w_ih": s * jax.random.normal(k0, (3 * H, in_size), jnp.float32),
            "w_hh": s * jax.random.normal(k1, (3 * H, H), jnp.float32),
            "b_ih": s * jax.random.normal(k2, (3 * H,), jnp.float32),
            "b_hh": s * jax.random.normal(k3, (3 * H,), jnp.float32),
        })
    return params


if __name__ == "__main__":
    B, T, E, H, V, L = 8, 8, 32, 32, 40, 2
    key = jax.random.PRNGKey(0)
    kp, kx = jax.random.split(key, 2)
    params = make_params(kp, V, E, H, L)
    X = jax.random.randint(kx, (B, T), 0, V, dtype=jnp.int32)

    fwd = jax.jit(seq2seq_encoder_forward)
    out, state = fwd(params, X)
    jax.block_until_ready((out, state))

    ref_out, ref_state = _ref_forward(params, X)
    assert out.shape == (T, B, H) and state.shape == (L, B, H)
    assert jnp.allclose(out, ref_out, atol=1e-3, rtol=1e-3)
    assert jnp.allclose(state, ref_state, atol=1e-3, rtol=1e-3)

    print("KERNEL_OK")
</pallas_src>

<mosaic_0001>
module attributes {stable_mosaic.version = 11 : i64} {
  func.func @gru_stack_kernel(%arg0: i32, %arg1: memref<8x8x32xf32, #tpu.memory_space<vmem>>, %arg2: memref<32x384xf32, #tpu.memory_space<vmem>>, %arg3: memref<128x384xf32, #tpu.memory_space<vmem>>, %arg4: memref<1x384xf32, #tpu.memory_space<vmem>>, %arg5: memref<1x128xf32, #tpu.memory_space<vmem>>, %arg6: memref<128x384xf32, #tpu.memory_space<vmem>>, %arg7: memref<128x384xf32, #tpu.memory_space<vmem>>, %arg8: memref<1x384xf32, #tpu.memory_space<vmem>>, %arg9: memref<1x128xf32, #tpu.memory_space<vmem>>, %arg10: memref<8x8x128xf32, #tpu.memory_space<vmem>>, %arg11: memref<2x8x128xf32, #tpu.memory_space<vmem>>, %arg12: memref<8x8x384xf32, #tpu.memory_space<vmem>>) attributes {dimension_semantics = [#tpu.dimension_semantics<parallel>], iteration_bounds = array<i64: 1>, scalar_prefetch = 0 : i64, scratch_operands = 1 : i64, tpu.core_type = #tpu.core_type<tc>, window_params = [{transform_indices = @transform_0, window_bounds = array<i64: 8, 8, 32>}, {pipeline_mode = #tpu.pipeline_mode<synchronous>, transform_indices = @transform_1, window_bounds = array<i64: 32, 384>}, {pipeline_mode = #tpu.pipeline_mode<synchronous>, transform_indices = @transform_2, window_bounds = array<i64: 128, 384>}, {pipeline_mode = #tpu.pipeline_mode<synchronous>, transform_indices = @transform_3, window_bounds = array<i64: 1, 384>}, {pipeline_mode = #tpu.pipeline_mode<synchronous>, transform_indices = @transform_4, window_bounds = array<i64: 1, 128>}, {pipeline_mode = #tpu.pipeline_mode<synchronous>, transform_indices = @transform_5, window_bounds = array<i64: 128, 384>}, {pipeline_mode = #tpu.pipeline_mode<synchronous>, transform_indices = @transform_6, window_bounds = array<i64: 128, 384>}, {pipeline_mode = #tpu.pipeline_mode<synchronous>, transform_indices = @transform_7, window_bounds = array<i64: 1, 384>}, {pipeline_mode = #tpu.pipeline_mode<synchronous>, transform_indices = @transform_8, window_bounds = array<i64: 1, 128>}, {transform_indices = @transform_9, window_bounds = array<i64: 8, 8, 128>}, {transform_indices = @transform_10, window_bounds = array<i64: 2, 8, 128>}]} {
    %cst = arith.constant 0.000000e+00 : f32
    %0 = vector.broadcast %cst : f32 to vector<8x128xf32>
    %c0 = arith.constant 0 : index
    %c0_0 = arith.constant 0 : index
    %c0_1 = arith.constant 0 : index
    %1 = vector.load %arg1[%c0, %c0_0, %c0_1] : memref<8x8x32xf32, #tpu.memory_space<vmem>>, vector<8x8x32xf32>
    %2 = vector.shape_cast %1 : vector<8x8x32xf32> to vector<64x32xf32>
    %c0_2 = arith.constant 0 : index
    %c0_3 = arith.constant 0 : index
    %3 = vector.load %arg2[%c0_2, %c0_3] : memref<32x384xf32, #tpu.memory_space<vmem>>, vector<32x384xf32>
    %cst_4 = arith.constant dense<0.000000e+00> : vector<64x384xf32>
    %4 = tpu.matmul %2, %3, %cst_4 {dimension_numbers = #tpu.dot_dimension_numbers<[1], [0], [0], [1], [0, 0, 1, 1], [], []>} : vector<64x32xf32>, vector<32x384xf32>, vector<64x384xf32> -> vector<64x384xf32>
    %c0_5 = arith.constant 0 : index
    %c0_6 = arith.constant 0 : index
    %5 = vector.load %arg4[%c0_5, %c0_6] : memref<1x384xf32, #tpu.memory_space<vmem>>, vector<1x384xf32>
    %6 = vector.broadcast %5 : vector<1x384xf32> to vector<64x384xf32>
    %7 = arith.addf %4, %6 : vector<64x384xf32>
    %8 = vector.shape_cast %7 : vector<64x384xf32> to vector<8x8x384xf32>
    %c0_7 = arith.constant 0 : index
    %c0_8 = arith.constant 0 : index
    %c0_9 = arith.constant 0 : index
    %9 = vector.load %arg12[%c0_7, %c0_8, %c0_9] : memref<8x8x384xf32, #tpu.memory_space<vmem>>, vector<8x8x384xf32>
    tpu.vector_store %arg12[%c0_7, %c0_8, %c0_9], %8 {strides = array<i32>} : memref<8x8x384xf32, #tpu.memory_space<vmem>>, vector<8x8x384xf32>,
    %c0_10 = arith.constant 0 : index
    %c0_11 = arith.constant 0 : index
    %10 = vector.load %arg3[%c0_10, %c0_11] : memref<128x384xf32, #tpu.memory_space<vmem>>, vector<128x384xf32>
    %c0_12 = arith.constant 0 : index
    %c0_13 = arith.constant 0 : index
    %11 = vector.load %arg5[%c0_12, %c0_13] : memref<1x128xf32, #tpu.memory_space<vmem>>, vector<1x128xf32>
    %12 = vector.shape_cast %11 : vector<1x128xf32> to vector<1x128xf32>
    %13 = vector.broadcast %12 : vector<1x128xf32> to vector<8x128xf32>
    %c0_i32 = arith.constant 0 : i32
    %14 = arith.index_cast %c0_i32 : i32 to index
    %c0_14 = arith.constant 0 : index
    %c0_15 = arith.constant 0 : index
    %15 = vector.load %arg12[%14, %c0_14, %c0_15] : memref<8x8x384xf32, #tpu.memory_space<vmem>>, vector<1x8x384xf32>
    %16 = vector.shape_cast %15 : vector<1x8x384xf32> to vector<8x384xf32>
    %cst_16 = arith.constant dense<0.000000e+00> : vector<8x384xf32>
    %17 = tpu.matmul %0, %10, %cst_16 {dimension_numbers = #tpu.dot_dimension_numbers<[1], [0], [0], [1], [0, 0, 1, 1], [], []>} : vector<8x128xf32>, vector<128x384xf32>, vector<8x384xf32> -> vector<8x384xf32>
    %18 = vector.extract_strided_slice %16 {offsets = [0, 0], sizes = [8, 128], strides = [1, 1]} : vector<8x384xf32> to vector<8x128xf32>
    %19 = vector.extract_strided_slice %17 {offsets = [0, 0], sizes = [8, 128], strides = [1, 1]} : vector<8x384xf32> to vector<8x128xf32>
    %20 = arith.addf %18, %19 : vector<8x128xf32>
    %21 = arith.negf %20 : vector<8x128xf32>
    %22 = math.exp %21 : vector<8x128xf32>
    %cst_17 = arith.constant 1.000000e+00 : f32
    %23 = vector.broadcast %cst_17 : f32 to vector<8x128xf32>
    %24 = arith.addf %23, %22 : vector<8x128xf32>
    %25 = arith.divf %23, %24 : vector<8x128xf32>
    %26 = vector.extract_strided_slice %16 {offsets = [0, 128], sizes = [8, 128], strides = [1, 1]} : vector<8x384xf32> to vector<8x128xf32>
    %27 = vector.extract_strided_slice %17 {offsets = [0, 128], sizes = [8, 128], strides = [1, 1]} : vector<8x384xf32> to vector<8x128xf32>
    %28 = arith.addf %26, %27 : vector<8x128xf32>
    %29 = arith.negf %28 : vector<8x128xf32>
    %30 = math.exp %29 : vector<8x128xf32>
    %cst_18 = arith.constant 1.000000e+00 : f32
    %31 = vector.broadcast %cst_18 : f32 to vector<8x128xf32>
    %32 = arith.addf %31, %30 : vector<8x128xf32>
    %33 = arith.divf %31, %32 : vector<8x128xf32>
    %34 = vector.extract_strided_slice %16 {offsets = [0, 256], sizes = [8, 128], strides = [1, 1]} : vector<8x384xf32> to vector<8x128xf32>
    %35 = vector.extract_strided_slice %17 {offsets = [0, 256], sizes = [8, 128], strides = [1, 1]} : vector<8x384xf32> to vector<8x128xf32>
    %36 = arith.addf %35, %13 : vector<8x128xf32>
    %37 = arith.mulf %25, %36 : vector<8x128xf32>
    %38 = arith.addf %34, %37 : vector<8x128xf32>
    %39 = math.tanh %38 : vector<8x128xf32>
    %cst_19 = arith.constant 1.000000e+00 : f32
    %40 = vector.broadcast %cst_19 : f32 to vector<8x128xf32>
    %41 = arith.subf %40, %33 : vector<8x128xf32>
    %42 = arith.mulf %41, %39 : vector<8x128xf32>
    %43 = arith.mulf %33, %0 : vector<8x128xf32>
    %44 = arith.addf %42, %43 : vector<8x128xf32>
    %45 = arith.index_cast %c0_i32 : i32 to index
    %c0_20 = arith.constant 0 : index
    %c0_21 = arith.constant 0 : index
    %46 = vector.load %arg10[%45, %c0_20, %c0_21] : memref<8x8x128xf32, #tpu.memory_space<vmem>>, vector<1x8x128xf32>
    %47 = vector.shape_cast %46 : vector<1x8x128xf32> to vector<8x128xf32>
    %48 = vector.shape_cast %44 : vector<8x128xf32> to vector<1x8x128xf32>
    tpu.vector_store %arg10[%45, %c0_20, %c0_21], %48 {strides = array<i32>} : memref<8x8x128xf32, #tpu.memory_space<vmem>>, vector<1x8x128xf32>,
    %c1_i32 = arith.constant 1 : i32
    %49 = arith.index_cast %c1_i32 : i32 to index
    %c0_22 = arith.constant 0 : index
    %c0_23 = arith.constant 0 : index
    %50 = vector.load %arg12[%49, %c0_22, %c0_23] : memref<8x8x384xf32, #tpu.memory_space<vmem>>, vector<1x8x384xf32>
    %51 = vector.shape_cast %50 : vector<1x8x384xf32> to vector<8x384xf32>
    %cst_24 = arith.constant dense<0.000000e+00> : vector<8x384xf32>
    %52 = tpu.matmul %44, %10, %cst_24 {dimension_numbers = #tpu.dot_dimension_numbers<[1], [0], [0], [1], [0, 0, 1, 1], [], []>} : vector<8x128xf32>, vector<128x384xf32>, vector<8x384xf32> -> vector<8x384xf32>
    %53 = vector.extract_strided_slice %51 {offsets = [0, 0], sizes = [8, 128], strides = [1, 1]} : vector<8x384xf32> to vector<8x128xf32>
    %54 = vector.extract_strided_slice %52 {offsets = [0, 0], sizes = [8, 128], strides = [1, 1]} : vector<8x384xf32> to vector<8x128xf32>
    %55 = arith.addf %53, %54 : vector<8x128xf32>
    %56 = arith.negf %55 : vector<8x128xf32>
    %57 = math.exp %56 : vector<8x128xf32>
    %cst_25 = arith.constant 1.000000e+00 : f32
    %58 = vector.broadcast %cst_25 : f32 to vector<8x128xf32>
    %59 = arith.addf %58, %57 : vector<8x128xf32>
    %60 = arith.divf %58, %59 : vector<8x128xf32>
    %61 = vector.extract_strided_slice %51 {offsets = [0, 128], sizes = [8, 128], strides = [1, 1]} : vector<8x384xf32> to vector<8x128xf32>
    %62 = vector.extract_strided_slice %52 {offsets = [0, 128], sizes = [8, 128], strides = [1, 1]} : vector<8x384xf32> to vector<8x128xf32>
    %63 = arith.addf %61, %62 : vector<8x128xf32>
    %64 = arith.negf %63 : vector<8x128xf32>
    %65 = math.exp %64 : vector<8x128xf32>
    %cst_26 = arith.constant 1.000000e+00 : f32
    %66 = vector.broadcast %cst_26 : f32 to vector<8x128xf32>
    %67 = arith.addf %66, %65 : vector<8x128xf32>
    %68 = arith.divf %66, %67 : vector<8x128xf32>
    %69 = vector.extract_strided_slice %51 {offsets = [0, 256], sizes = [8, 128], strides = [1, 1]} : vector<8x384xf32> to vector<8x128xf32>
    %70 = vector.extract_strided_slice %52 {offsets = [0, 256], sizes = [8, 128], strides = [1, 1]} : vector<8x384xf32> to vector<8x128xf32>
    %71 = arith.addf %70, %13 : vector<8x128xf32>
    %72 = arith.mulf %60, %71 : vector<8x128xf32>
    %73 = arith.addf %69, %72 : vector<8x128xf32>
    %74 = math.tanh %73 : vector<8x128xf32>
    %cst_27 = arith.constant 1.000000e+00 : f32
    %75 = vector.broadcast %cst_27 : f32 to vector<8x128xf32>
    %76 = arith.subf %75, %68 : vector<8x128xf32>
    %77 = arith.mulf %76, %74 : vector<8x128xf32>
    %78 = arith.mulf %68, %44 : vector<8x128xf32>
    %79 = arith.addf %77, %78 : vector<8x128xf32>
    %80 = arith.index_cast %c1_i32 : i32 to index
    %c0_28 = arith.constant 0 : index
    %c0_29 = arith.constant 0 : index
    %81 = vector.load %arg10[%80, %c0_28, %c0_29] : memref<8x8x128xf32, #tpu.memory_space<vmem>>, vector<1x8x128xf32>
    %82 = vector.shape_cast %81 : vector<1x8x128xf32> to vector<8x128xf32>
    %83 = vector.shape_cast %79 : vector<8x128xf32> to vector<1x8x128xf32>
    tpu.vector_store %arg10[%80, %c0_28, %c0_29], %83 {strides = array<i32>} : memref<8x8x128xf32, #tpu.memory_space<vmem>>, vector<1x8x128xf32>,
    %c2_i32 = arith.constant 2 : i32
    %84 = arith.index_cast %c2_i32 : i32 to index
    %c0_30 = arith.constant 0 : index
    %c0_31 = arith.constant 0 : index
    %85 = vector.load %arg12[%84, %c0_30, %c0_31] : memref<8x8x384xf32, #tpu.memory_space<vmem>>, vector<1x8x384xf32>
    %86 = vector.shape_cast %85 : vector<1x8x384xf32> to vector<8x384xf32>
    %cst_32 = arith.constant dense<0.000000e+00> : vector<8x384xf32>
    %87 = tpu.matmul %79, %10, %cst_32 {dimension_numbers = #tpu.dot_dimension_numbers<[1], [0], [0], [1], [0, 0, 1, 1], [], []>} : vector<8x128xf32>, vector<128x384xf32>, vector<8x384xf32> -> vector<8x384xf32>
    %88 = vector.extract_strided_slice %86 {offsets = [0, 0], sizes = [8, 128], strides = [1, 1]} : vector<8x384xf32> to vector<8x128xf32>
    %89 = vector.extract_strided_slice %87 {offsets = [0, 0], sizes = [8, 128], strides = [1, 1]} : vector<8x384xf32> to vector<8x128xf32>
    %90 = arith.addf %88, %89 : vector<8x128xf32>
    %91 = arith.negf %90 : vector<8x128xf32>
    %92 = math.exp %91 : vector<8x128xf32>
    %cst_33 = arith.constant 1.000000e+00 : f32
    %93 = vector.broadcast %cst_33 : f32 to vector<8x128xf32>
    %94 = arith.addf %93, %92 : vector<8x128xf32>
    %95 = arith.divf %93, %94 : vector<8x128xf32>
    %96 = vector.extract_strided_slice %86 {offsets = [0, 128], sizes = [8, 128], strides = [1, 1]} : vector<8x384xf32> to vector<8x128xf32>
    %97 = vector.extract_strided_slice %87 {offsets = [0, 128], sizes = [8, 128], strides = [1, 1]} : vector<8x384xf32> to vector<8x128xf32>
    %98 = arith.addf %96, %97 : vector<8x128xf32>
    %99 = arith.negf %98 : vector<8x128xf32>
    %100 = math.exp %99 : vector<8x128xf32>
    %cst_34 = arith.constant 1.000000e+00 : f32
    %101 = vector.broadcast %cst_34 : f32 to vector<8x128xf32>
    %102 = arith.addf %101, %100 : vector<8x128xf32>
    %103 = arith.divf %101, %102 : vector<8x128xf32>
    %104 = vector.extract_strided_slice %86 {offsets = [0, 256], sizes = [8, 128], strides = [1, 1]} : vector<8x384xf32> to vector<8x128xf32>
    %105 = vector.extract_strided_slice %87 {offsets = [0, 256], sizes = [8, 128], strides = [1, 1]} : vector<8x384xf32> to vector<8x128xf32>
    %106 = arith.addf %105, %13 : vector<8x128xf32>
    %107 = arith.mulf %95, %106 : vector<8x128xf32>
    %108 = arith.addf %104, %107 : vector<8x128xf32>
    %109 = math.tanh %108 : vector<8x128xf32>
    %cst_35 = arith.constant 1.000000e+00 : f32
    %110 = vector.broadcast %cst_35 : f32 to vector<8x128xf32>
    %111 = arith.subf %110, %103 : vector<8x128xf32>
    %112 = arith.mulf %111, %109 : vector<8x128xf32>
    %113 = arith.mulf %103, %79 : vector<8x128xf32>
    %114 = arith.addf %112, %113 : vector<8x128xf32>
    %115 = arith.index_cast %c2_i32 : i32 to index
    %c0_36 = arith.constant 0 : index
    %c0_37 = arith.constant 0 : index
    %116 = vector.load %arg10[%115, %c0_36, %c0_37] : memref<8x8x128xf32, #tpu.memory_space<vmem>>, vector<1x8x128xf32>
    %117 = vector.shape_cast %116 : vector<1x8x128xf32> to vector<8x128xf32>
    %118 = vector.shape_cast %114 : vector<8x128xf32> to vector<1x8x128xf32>
    tpu.vector_store %arg10[%115, %c0_36, %c0_37], %118 {strides = array<i32>} : memref<8x8x128xf32, #tpu.memory_space<vmem>>, vector<1x8x128xf32>,
    %c3_i32 = arith.constant 3 : i32
    %119 = arith.index_cast %c3_i32 : i32 to index
    %c0_38 = arith.constant 0 : index
    %c0_39 = arith.constant 0 : index
    %120 = vector.load %arg12[%119, %c0_38, %c0_39] : memref<8x8x384xf32, #tpu.memory_space<vmem>>, vector<1x8x384xf32>
    %121 = vector.shape_cast %120 : vector<1x8x384xf32> to vector<8x384xf32>
    %cst_40 = arith.constant dense<0.000000e+00> : vector<8x384xf32>
    %122 = tpu.matmul %114, %10, %cst_40 {dimension_numbers = #tpu.dot_dimension_numbers<[1], [0], [0], [1], [0, 0, 1, 1], [], []>} : vector<8x128xf32>, vector<128x384xf32>, vector<8x384xf32> -> vector<8x384xf32>
    %123 = vector.extract_strided_slice %121 {offsets = [0, 0], sizes = [8, 128], strides = [1, 1]} : vector<8x384xf32> to vector<8x128xf32>
    %124 = vector.extract_strided_slice %122 {offsets = [0, 0], sizes = [8, 128], strides = [1, 1]} : vector<8x384xf32> to vector<8x128xf32>
    %125 = arith.addf %123, %124 : vector<8x128xf32>
    %126 = arith.negf %125 : vector<8x128xf32>
    %127 = math.exp %126 : vector<8x128xf32>
    %cst_41 = arith.constant 1.000000e+00 : f32
    %128 = vector.broadcast %cst_41 : f32 to vector<8x128xf32>
    %129 = arith.addf %128, %127 : vector<8x128xf32>
    %130 = arith.divf %128, %129 : vector<8x128xf32>
    %131 = vector.extract_strided_slice %121 {offsets = [0, 128], sizes = [8, 128], strides = [1, 1]} : vector<8x384xf32> to vector<8x128xf32>
    %132 = vector.extract_strided_slice %122 {offsets = [0, 128], sizes = [8, 128], strides = [1, 1]} : vector<8x384xf32> to vector<8x128xf32>
    %133 = arith.addf %131, %132 : vector<8x128xf32>
    %134 = arith.negf %133 : vector<8x128xf32>
    %135 = math.exp %134 : vector<8x128xf32>
    %cst_42 = arith.constant 1.000000e+00 : f32
    %136 = vector.broadcast %cst_42 : f32 to vector<8x128xf32>
    %137 = arith.addf %136, %135 : vector<8x128xf32>
    %138 = arith.divf %136, %137 : vector<8x128xf32>
    %139 = vector.extract_strided_slice %121 {offsets = [0, 256], sizes = [8, 128], strides = [1, 1]} : vector<8x384xf32> to vector<8x128xf32>
    %140 = vector.extract_strided_slice %122 {offsets = [0, 256], sizes = [8, 128], strides = [1, 1]} : vector<8x384xf32> to vector<8x128xf32>
    %141 = arith.addf %140, %13 : vector<8x128xf32>
    %142 = arith.mulf %130, %141 : vector<8x128xf32>
    %143 = arith.addf %139, %142 : vector<8x128xf32>
    %144 = math.tanh %143 : vector<8x128xf32>
    %cst_43 = arith.constant 1.000000e+00 : f32
    %145 = vector.broadcast %cst_43 : f32 to vector<8x128xf32>
    %146 = arith.subf %145, %138 : vector<8x128xf32>
    %147 = arith.mulf %146, %144 : vector<8x128xf32>
    %148 = arith.mulf %138, %114 : vector<8x128xf32>
    %149 = arith.addf %147, %148 : vector<8x128xf32>
    %150 = arith.index_cast %c3_i32 : i32 to index
    %c0_44 = arith.constant 0 : index
    %c0_45 = arith.constant 0 : index
    %151 = vector.load %arg10[%150, %c0_44, %c0_45] : memref<8x8x128xf32, #tpu.memory_space<vmem>>, vector<1x8x128xf32>
    %152 = vector.shape_cast %151 : vector<1x8x128xf32> to vector<8x128xf32>
    %153 = vector.shape_cast %149 : vector<8x128xf32> to vector<1x8x128xf32>
    tpu.vector_store %arg10[%150, %c0_44, %c0_45], %153 {strides = array<i32>} : memref<8x8x128xf32, #tpu.memory_space<vmem>>, vector<1x8x128xf32>,
    %c4_i32 = arith.constant 4 : i32
    %154 = arith.index_cast %c4_i32 : i32 to index
    %c0_46 = arith.constant 0 : index
    %c0_47 = arith.constant 0 : index
    %155 = vector.load %arg12[%154, %c0_46, %c0_47] : memref<8x8x384xf32, #tpu.memory_space<vmem>>, vector<1x8x384xf32>
    %156 = vector.shape_cast %155 : vector<1x8x384xf32> to vector<8x384xf32>
    %cst_48 = arith.constant dense<0.000000e+00> : vector<8x384xf32>
    %157 = tpu.matmul %149, %10, %cst_48 {dimension_numbers = #tpu.dot_dimension_numbers<[1], [0], [0], [1], [0, 0, 1, 1], [], []>} : vector<8x128xf32>, vector<128x384xf32>, vector<8x384xf32> -> vector<8x384xf32>
    %158 = vector.extract_strided_slice %156 {offsets = [0, 0], sizes = [8, 128], strides = [1, 1]} : vector<8x384xf32> to vector<8x128xf32>
    %159 = vector.extract_strided_slice %157 {offsets = [0, 0], sizes = [8, 128], strides = [1, 1]} : vector<8x384xf32> to vector<8x128xf32>
    %160 = arith.addf %158, %159 : vector<8x128xf32>
    %161 = arith.negf %160 : vector<8x128xf32>
    %162 = math.exp %161 : vector<8x128xf32>
    %cst_49 = arith.constant 1.000000e+00 : f32
    %163 = vector.broadcast %cst_49 : f32 to vector<8x128xf32>
    %164 = arith.addf %163, %162 : vector<8x128xf32>
    %165 = arith.divf %163, %164 : vector<8x128xf32>
    %166 = vector.extract_strided_slice %156 {offsets = [0, 128], sizes = [8, 128], strides = [1, 1]} : vector<8x384xf32> to vector<8x128xf32>
    %167 = vector.extract_strided_slice %157 {offsets = [0, 128], sizes = [8, 128], strides = [1, 1]} : vector<8x384xf32> to vector<8x128xf32>
    %168 = arith.addf %166, %167 : vector<8x128xf32>
    %169 = arith.negf %168 : vector<8x128xf32>
    %170 = math.exp %169 : vector<8x128xf32>
    %cst_50 = arith.constant 1.000000e+00 : f32
    %171 = vector.broadcast %cst_50 : f32 to vector<8x128xf32>
    %172 = arith.addf %171, %170 : vector<8x128xf32>
    %173 = arith.divf %171, %172 : vector<8x128xf32>
    %174 = vector.extract_strided_slice %156 {offsets = [0, 256], sizes = [8, 128], strides = [1, 1]} : vector<8x384xf32> to vector<8x128xf32>
    %175 = vector.extract_strided_slice %157 {offsets = [0, 256], sizes = [8, 128], strides = [1, 1]} : vector<8x384xf32> to vector<8x128xf32>
    %176 = arith.addf %175, %13 : vector<8x128xf32>
    %177 = arith.mulf %165, %176 : vector<8x128xf32>
    %178 = arith.addf %174, %177 : vector<8x128xf32>
    %179 = math.tanh %178 : vector<8x128xf32>
    %cst_51 = arith.constant 1.000000e+00 : f32
    %180 = vector.broadcast %cst_51 : f32 to vector<8x128xf32>
    %181 = arith.subf %180, %173 : vector<8x128xf32>
    %182 = arith.mulf %181, %179 : vector<8x128xf32>
    %183 = arith.mulf %173, %149 : vector<8x128xf32>
    %184 = arith.addf %182, %183 : vector<8x128xf32>
    %185 = arith.index_cast %c4_i32 : i32 to index
    %c0_52 = arith.constant 0 : index
    %c0_53 = arith.constant 0 : index
    %186 = vector.load %arg10[%185, %c0_52, %c0_53] : memref<8x8x128xf32, #tpu.memory_space<vmem>>, vector<1x8x128xf32>
    %187 = vector.shape_cast %186 : vector<1x8x128xf32> to vector<8x128xf32>
    %188 = vector.shape_cast %184 : vector<8x128xf32> to vector<1x8x128xf32>
    tpu.vector_store %arg10[%185, %c0_52, %c0_53], %188 {strides = array<i32>} : memref<8x8x128xf32, #tpu.memory_space<vmem>>, vector<1x8x128xf32>,
    %c5_i32 = arith.constant 5 : i32
    %189 = arith.index_cast %c5_i32 : i32 to index
    %c0_54 = arith.constant 0 : index
    %c0_55 = arith.constant 0 : index
    %190 = vector.load %arg12[%189, %c0_54, %c0_55] : memref<8x8x384xf32, #tpu.memory_space<vmem>>, vector<1x8x384xf32>
    %191 = vector.shape_cast %190 : vector<1x8x384xf32> to vector<8x384xf32>
    %cst_56 = arith.constant dense<0.000000e+00> : vector<8x384xf32>
    %192 = tpu.matmul %184, %10, %cst_56 {dimension_numbers = #tpu.dot_dimension_numbers<[1], [0], [0], [1], [0, 0, 1, 1], [], []>} : vector<8x128xf32>, vector<128x384xf32>, vector<8x384xf32> -> vector<8x384xf32>
    %193 = vector.extract_strided_slice %191 {offsets = [0, 0], sizes = [8, 128], strides = [1, 1]} : vector<8x384xf32> to vector<8x128xf32>
    %194 = vector.extract_strided_slice %192 {offsets = [0, 0], sizes = [8, 128], strides = [1, 1]} : vector<8x384xf32> to vector<8x128xf32>
    %195 = arith.addf %193, %194 : vector<8x128xf32>
    %196 = arith.negf %195 : vector<8x128xf32>
    %197 = math.exp %196 : vector<8x128xf32>
    %cst_57 = arith.constant 1.000000e+00 : f32
    %198 = vector.broadcast %cst_57 : f32 to vector<8x128xf32>
    %199 = arith.addf %198, %197 : vector<8x128xf32>
    %200 = arith.divf %198, %199 : vector<8x128xf32>
    %201 = vector.extract_strided_slice %191 {offsets = [0, 128], sizes = [8, 128], strides = [1, 1]} : vector<8x384xf32> to vector<8x128xf32>
    %202 = vector.extract_strided_slice %192 {offsets = [0, 128], sizes = [8, 128], strides = [1, 1]} : vector<8x384xf32> to vector<8x128xf32>
    %203 = arith.addf %201, %202 : vector<8x128xf32>
    %204 = arith.negf %203 : vector<8x128xf32>
    %205 = math.exp %204 : vector<8x128xf32>
    %cst_58 = arith.constant 1.000000e+00 : f32
    %206 = vector.broadcast %cst_58 : f32 to vector<8x128xf32>
    %207 = arith.addf %206, %205 : vector<8x128xf32>
    %208 = arith.divf %206, %207 : vector<8x128xf32>
    %209 = vector.extract_strided_slice %191 {offsets = [0, 256], sizes = [8, 128], strides = [1, 1]} : vector<8x384xf32> to vector<8x128xf32>
    %210 = vector.extract_strided_slice %192 {offsets = [0, 256], sizes = [8, 128], strides = [1, 1]} : vector<8x384xf32> to vector<8x128xf32>
    %211 = arith.addf %210, %13 : vector<8x128xf32>
    %212 = arith.mulf %200, %211 : vector<8x128xf32>
    %213 = arith.addf %209, %212 : vector<8x128xf32>
    %214 = math.tanh %213 : vector<8x128xf32>
    %cst_59 = arith.constant 1.000000e+00 : f32
    %215 = vector.broadcast %cst_59 : f32 to vector<8x128xf32>
    %216 = arith.subf %215, %208 : vector<8x128xf32>
    %217 = arith.mulf %216, %214 : vector<8x128xf32>
    %218 = arith.mulf %208, %184 : vector<8x128xf32>
    %219 = arith.addf %217, %218 : vector<8x128xf32>
    %220 = arith.index_cast %c5_i32 : i32 to index
    %c0_60 = arith.constant 0 : index
    %c0_61 = arith.constant 0 : index
    %221 = vector.load %arg10[%220, %c0_60, %c0_61] : memref<8x8x128xf32, #tpu.memory_space<vmem>>, vector<1x8x128xf32>
    %222 = vector.shape_cast %221 : vector<1x8x128xf32> to vector<8x128xf32>
    %223 = vector.shape_cast %219 : vector<8x128xf32> to vector<1x8x128xf32>
    tpu.vector_store %arg10[%220, %c0_60, %c0_61], %223 {strides = array<i32>} : memref<8x8x128xf32, #tpu.memory_space<vmem>>, vector<1x8x128xf32>,
    %c6_i32 = arith.constant 6 : i32
    %224 = arith.index_cast %c6_i32 : i32 to index
    %c0_62 = arith.constant 0 : index
    %c0_63 = arith.constant 0 : index
    %225 = vector.load %arg12[%224, %c0_62, %c0_63] : memref<8x8x384xf32, #tpu.memory_space<vmem>>, vector<1x8x384xf32>
    %226 = vector.shape_cast %225 : vector<1x8x384xf32> to vector<8x384xf32>
    %cst_64 = arith.constant dense<0.000000e+00> : vector<8x384xf32>
    %227 = tpu.matmul %219, %10, %cst_64 {dimension_numbers = #tpu.dot_dimension_numbers<[1], [0], [0], [1], [0, 0, 1, 1], [], []>} : vector<8x128xf32>, vector<128x384xf32>, vector<8x384xf32> -> vector<8x384xf32>
    %228 = vector.extract_strided_slice %226 {offsets = [0, 0], sizes = [8, 128], strides = [1, 1]} : vector<8x384xf32> to vector<8x128xf32>
    %229 = vector.extract_strided_slice %227 {offsets = [0, 0], sizes = [8, 128], strides = [1, 1]} : vector<8x384xf32> to vector<8x128xf32>
    %230 = arith.addf %228, %229 : vector<8x128xf32>
    %231 = arith.negf %230 : vector<8x128xf32>
    %232 = math.exp %231 : vector<8x128xf32>
    %cst_65 = arith.constant 1.000000e+00 : f32
    %233 = vector.broadcast %cst_65 : f32 to vector<8x128xf32>
    %234 = arith.addf %233, %232 : vector<8x128xf32>
    %235 = arith.divf %233, %234 : vector<8x128xf32>
    %236 = vector.extract_strided_slice %226 {offsets = [0, 128], sizes = [8, 128], strides = [1, 1]} : vector<8x384xf32> to vector<8x128xf32>
    %237 = vector.extract_strided_slice %227 {offsets = [0, 128], sizes = [8, 128], strides = [1, 1]} : vector<8x384xf32> to vector<8x128xf32>
    %238 = arith.addf %236, %237 : vector<8x128xf32>
    %239 = arith.negf %238 : vector<8x128xf32>
    %240 = math.exp %239 : vector<8x128xf32>
    %cst_66 = arith.constant 1.000000e+00 : f32
    %241 = vector.broadcast %cst_66 : f32 to vector<8x128xf32>
    %242 = arith.addf %241, %240 : vector<8x128xf32>
    %243 = arith.divf %241, %242 : vector<8x128xf32>
    %244 = vector.extract_strided_slice %226 {offsets = [0, 256], sizes = [8, 128], strides = [1, 1]} : vector<8x384xf32> to vector<8x128xf32>
    %245 = vector.extract_strided_slice %227 {offsets = [0, 256], sizes = [8, 128], strides = [1, 1]} : vector<8x384xf32> to vector<8x128xf32>
    %246 = arith.addf %245, %13 : vector<8x128xf32>
    %247 = arith.mulf %235, %246 : vector<8x128xf32>
    %248 = arith.addf %244, %247 : vector<8x128xf32>
    %249 = math.tanh %248 : vector<8x128xf32>
    %cst_67 = arith.constant 1.000000e+00 : f32
    %250 = vector.broadcast %cst_67 : f32 to vector<8x128xf32>
    %251 = arith.subf %250, %243 : vector<8x128xf32>
    %252 = arith.mulf %251, %249 : vector<8x128xf32>
    %253 = arith.mulf %243, %219 : vector<8x128xf32>
    %254 = arith.addf %252, %253 : vector<8x128xf32>
    %255 = arith.index_cast %c6_i32 : i32 to index
    %c0_68 = arith.constant 0 : index
    %c0_69 = arith.constant 0 : index
    %256 = vector.load %arg10[%255, %c0_68, %c0_69] : memref<8x8x128xf32, #tpu.memory_space<vmem>>, vector<1x8x128xf32>
    %257 = vector.shape_cast %256 : vector<1x8x128xf32> to vector<8x128xf32>
    %258 = vector.shape_cast %254 : vector<8x128xf32> to vector<1x8x128xf32>
    tpu.vector_store %arg10[%255, %c0_68, %c0_69], %258 {strides = array<i32>} : memref<8x8x128xf32, #tpu.memory_space<vmem>>, vector<1x8x128xf32>,
    %c7_i32 = arith.constant 7 : i32
    %259 = arith.index_cast %c7_i32 : i32 to index
    %c0_70 = arith.constant 0 : index
    %c0_71 = arith.constant 0 : index
    %260 = vector.load %arg12[%259, %c0_70, %c0_71] : memref<8x8x384xf32, #tpu.memory_space<vmem>>, vector<1x8x384xf32>
    %261 = vector.shape_cast %260 : vector<1x8x384xf32> to vector<8x384xf32>
    %cst_72 = arith.constant dense<0.000000e+00> : vector<8x384xf32>
    %262 = tpu.matmul %254, %10, %cst_72 {dimension_numbers = #tpu.dot_dimension_numbers<[1], [0], [0], [1], [0, 0, 1, 1], [], []>} : vector<8x128xf32>, vector<128x384xf32>, vector<8x384xf32> -> vector<8x384xf32>
    %263 = vector.extract_strided_slice %261 {offsets = [0, 0], sizes = [8, 128], strides = [1, 1]} : vector<8x384xf32> to vector<8x128xf32>
    %264 = vector.extract_strided_slice %262 {offsets = [0, 0], sizes = [8, 128], strides = [1, 1]} : vector<8x384xf32> to vector<8x128xf32>
    %265 = arith.addf %263, %264 : vector<8x128xf32>
    %266 = arith.negf %265 : vector<8x128xf32>
    %267 = math.exp %266 : vector<8x128xf32>
    %cst_73 = arith.constant 1.000000e+00 : f32
    %268 = vector.broadcast %cst_73 : f32 to vector<8x128xf32>
    %269 = arith.addf %268, %267 : vector<8x128xf32>
    %270 = arith.divf %268, %269 : vector<8x128xf32>
    %271 = vector.extract_strided_slice %261 {offsets = [0, 128], sizes = [8, 128], strides = [1, 1]} : vector<8x384xf32> to vector<8x128xf32>
    %272 = vector.extract_strided_slice %262 {offsets = [0, 128], sizes = [8, 128], strides = [1, 1]} : vector<8x384xf32> to vector<8x128xf32>
    %273 = arith.addf %271, %272 : vector<8x128xf32>
    %274 = arith.negf %273 : vector<8x128xf32>
    %275 = math.exp %274 : vector<8x128xf32>
    %cst_74 = arith.constant 1.000000e+00 : f32
    %276 = vector.broadcast %cst_74 : f32 to vector<8x128xf32>
    %277 = arith.addf %276, %275 : vector<8x128xf32>
    %278 = arith.divf %276, %277 : vector<8x128xf32>
    %279 = vector.extract_strided_slice %261 {offsets = [0, 256], sizes = [8, 128], strides = [1, 1]} : vector<8x384xf32> to vector<8x128xf32>
    %280 = vector.extract_strided_slice %262 {offsets = [0, 256], sizes = [8, 128], strides = [1, 1]} : vector<8x384xf32> to vector<8x128xf32>
    %281 = arith.addf %280, %13 : vector<8x128xf32>
    %282 = arith.mulf %270, %281 : vector<8x128xf32>
    %283 = arith.addf %279, %282 : vector<8x128xf32>
    %284 = math.tanh %283 : vector<8x128xf32>
    %cst_75 = arith.constant 1.000000e+00 : f32
    %285 = vector.broadcast %cst_75 : f32 to vector<8x128xf32>
    %286 = arith.subf %285, %278 : vector<8x128xf32>
    %287 = arith.mulf %286, %284 : vector<8x128xf32>
    %288 = arith.mulf %278, %254 : vector<8x128xf32>
    %289 = arith.addf %287, %288 : vector<8x128xf32>
    %290 = arith.index_cast %c7_i32 : i32 to index
    %c0_76 = arith.constant 0 : index
    %c0_77 = arith.constant 0 : index
    %291 = vector.load %arg10[%290, %c0_76, %c0_77] : memref<8x8x128xf32, #tpu.memory_space<vmem>>, vector<1x8x128xf32>
    %292 = vector.shape_cast %291 : vector<1x8x128xf32> to vector<8x128xf32>
    %293 = vector.shape_cast %289 : vector<8x128xf32> to vector<1x8x128xf32>
    tpu.vector_store %arg10[%290, %c0_76, %c0_77], %293 {strides = array<i32>} : memref<8x8x128xf32, #tpu.memory_space<vmem>>, vector<1x8x128xf32>,
    %c8_i32 = arith.constant 8 : i32
    %c0_78 = arith.constant 0 : index
    %c0_79 = arith.constant 0 : index
    %c0_80 = arith.constant 0 : index
    %294 = vector.load %arg11[%c0_78, %c0_79, %c0_80] : memref<2x8x128xf32, #tpu.memory_space<vmem>>, vector<1x8x128xf32>
    %295 = vector.shape_cast %294 : vector<1x8x128xf32> to vector<8x128xf32>
    %296 = vector.shape_cast %289 : vector<8x128xf32> to vector<1x8x128xf32>
    tpu.vector_store %arg11[%c0_78, %c0_79, %c0_80], %296 {strides = array<i32>} : memref<2x8x128xf32, #tpu.memory_space<vmem>>, vector<1x8x128xf32>,
    %c0_81 = arith.constant 0 : index
    %c0_82 = arith.constant 0 : index
    %c0_83 = arith.constant 0 : index
    %297 = vector.load %arg10[%c0_81, %c0_82, %c0_83] : memref<8x8x128xf32, #tpu.memory_space<vmem>>, vector<8x8x128xf32>
    %298 = vector.shape_cast %297 : vector<8x8x128xf32> to vector<64x128xf32>
    %c0_84 = arith.constant 0 : index
    %c0_85 = arith.constant 0 : index
    %299 = vector.load %arg6[%c0_84, %c0_85] : memref<128x384xf32, #tpu.memory_space<vmem>>, vector<128x384xf32>
    %cst_86 = arith.constant dense<0.000000e+00> : vector<64x384xf32>
    %300 = tpu.matmul %298, %299, %cst_86 {dimension_numbers = #tpu.dot_dimension_numbers<[1], [0], [0], [1], [0, 0, 1, 1], [], []>} : vector<64x128xf32>, vector<128x384xf32>, vector<64x384xf32> -> vector<64x384xf32>
    %c0_87 = arith.constant 0 : index
    %c0_88 = arith.constant 0 : index
    %301 = vector.load %arg8[%c0_87, %c0_88] : memref<1x384xf32, #tpu.memory_space<vmem>>, vector<1x384xf32>
    %302 = vector.broadcast %301 : vector<1x384xf32> to vector<64x384xf32>
    %303 = arith.addf %300, %302 : vector<64x384xf32>
    %304 = vector.shape_cast %303 : vector<64x384xf32> to vector<8x8x384xf32>
    %c0_89 = arith.constant 0 : index
    %c0_90 = arith.constant 0 : index
    %c0_91 = arith.constant 0 : index
    %305 = vector.load %arg12[%c0_89, %c0_90, %c0_91] : memref<8x8x384xf32, #tpu.memory_space<vmem>>, vector<8x8x384xf32>
    tpu.vector_store %arg12[%c0_89, %c0_90, %c0_91], %304 {strides = array<i32>} : memref<8x8x384xf32, #tpu.memory_space<vmem>>, vector<8x8x384xf32>,
    %c0_92 = arith.constant 0 : index
    %c0_93 = arith.constant 0 : index
    %306 = vector.load %arg7[%c0_92, %c0_93] : memref<128x384xf32, #tpu.memory_space<vmem>>, vector<128x384xf32>
    %c0_94 = arith.constant 0 : index
    %c0_95 = arith.constant 0 : index
    %307 = vector.load %arg9[%c0_94, %c0_95] : memref<1x128xf32, #tpu.memory_space<vmem>>, vector<1x128xf32>
    %308 = vector.shape_cast %307 : vector<1x128xf32> to vector<1x128xf32>
    %309 = vector.broadcast %308 : vector<1x128xf32> to vector<8x128xf32>
    %c0_i32_96 = arith.constant 0 : i32
    %310 = arith.index_cast %c0_i32_96 : i32 to index
    %c0_97 = arith.constant 0 : index
    %c0_98 = arith.constant 0 : index
    %311 = vector.load %arg12[%310, %c0_97, %c0_98] : memref<8x8x384xf32, #tpu.memory_space<vmem>>, vector<1x8x384xf32>
    %312 = vector.shape_cast %311 : vector<1x8x384xf32> to vector<8x384xf32>
    %cst_99 = arith.constant dense<0.000000e+00> : vector<8x384xf32>
    %313 = tpu.matmul %0, %306, %cst_99 {dimension_numbers = #tpu.dot_dimension_numbers<[1], [0], [0], [1], [0, 0, 1, 1], [], []>} : vector<8x128xf32>, vector<128x384xf32>, vector<8x384xf32> -> vector<8x384xf32>
    %314 = vector.extract_strided_slice %312 {offsets = [0, 0], sizes = [8, 128], strides = [1, 1]} : vector<8x384xf32> to vector<8x128xf32>
    %315 = vector.extract_strided_slice %313 {offsets = [0, 0], sizes = [8, 128], strides = [1, 1]} : vector<8x384xf32> to vector<8x128xf32>
    %316 = arith.addf %314, %315 : vector<8x128xf32>
    %317 = arith.negf %316 : vector<8x128xf32>
    %318 = math.exp %317 : vector<8x128xf32>
    %cst_100 = arith.constant 1.000000e+00 : f32
    %319 = vector.broadcast %cst_100 : f32 to vector<8x128xf32>
    %320 = arith.addf %319, %318 : vector<8x128xf32>
    %321 = arith.divf %319, %320 : vector<8x128xf32>
    %322 = vector.extract_strided_slice %312 {offsets = [0, 128], sizes = [8, 128], strides = [1, 1]} : vector<8x384xf32> to vector<8x128xf32>
    %323 = vector.extract_strided_slice %313 {offsets = [0, 128], sizes = [8, 128], strides = [1, 1]} : vector<8x384xf32> to vector<8x128xf32>
    %324 = arith.addf %322, %323 : vector<8x128xf32>
    %325 = arith.negf %324 : vector<8x128xf32>
    %326 = math.exp %325 : vector<8x128xf32>
    %cst_101 = arith.constant 1.000000e+00 : f32
    %327 = vector.broadcast %cst_101 : f32 to vector<8x128xf32>
    %328 = arith.addf %327, %326 : vector<8x128xf32>
    %329 = arith.divf %327, %328 : vector<8x128xf32>
    %330 = vector.extract_strided_slice %312 {offsets = [0, 256], sizes = [8, 128], strides = [1, 1]} : vector<8x384xf32> to vector<8x128xf32>
    %331 = vector.extract_strided_slice %313 {offsets = [0, 256], sizes = [8, 128], strides = [1, 1]} : vector<8x384xf32> to vector<8x128xf32>
    %332 = arith.addf %331, %309 : vector<8x128xf32>
    %333 = arith.mulf %321, %332 : vector<8x128xf32>
    %334 = arith.addf %330, %333 : vector<8x128xf32>
    %335 = math.tanh %334 : vector<8x128xf32>
    %cst_102 = arith.constant 1.000000e+00 : f32
    %336 = vector.broadcast %cst_102 : f32 to vector<8x128xf32>
    %337 = arith.subf %336, %329 : vector<8x128xf32>
    %338 = arith.mulf %337, %335 : vector<8x128xf32>
    %339 = arith.mulf %329, %0 : vector<8x128xf32>
    %340 = arith.addf %338, %339 : vector<8x128xf32>
    %341 = arith.index_cast %c0_i32_96 : i32 to index
    %c0_103 = arith.constant 0 : index
    %c0_104 = arith.constant 0 : index
    %342 = vector.load %arg10[%341, %c0_103, %c0_104] : memref<8x8x128xf32, #tpu.memory_space<vmem>>, vector<1x8x128xf32>
    %343 = vector.shape_cast %342 : vector<1x8x128xf32> to vector<8x128xf32>
    %344 = vector.shape_cast %340 : vector<8x128xf32> to vector<1x8x128xf32>
    tpu.vector_store %arg10[%341, %c0_103, %c0_104], %344 {strides = array<i32>} : memref<8x8x128xf32, #tpu.memory_space<vmem>>, vector<1x8x128xf32>,
    %c1_i32_105 = arith.constant 1 : i32
    %345 = arith.index_cast %c1_i32_105 : i32 to index
    %c0_106 = arith.constant 0 : index
    %c0_107 = arith.constant 0 : index
    %346 = vector.load %arg12[%345, %c0_106, %c0_107] : memref<8x8x384xf32, #tpu.memory_space<vmem>>, vector<1x8x384xf32>
    %347 = vector.shape_cast %346 : vector<1x8x384xf32> to vector<8x384xf32>
    %cst_108 = arith.constant dense<0.000000e+00> : vector<8x384xf32>
    %348 = tpu.matmul %340, %306, %cst_108 {dimension_numbers = #tpu.dot_dimension_numbers<[1], [0], [0], [1], [0, 0, 1, 1], [], []>} : vector<8x128xf32>, vector<128x384xf32>, vector<8x384xf32> -> vector<8x384xf32>
    %349 = vector.extract_strided_slice %347 {offsets = [0, 0], sizes = [8, 128], strides = [1, 1]} : vector<8x384xf32> to vector<8x128xf32>
    %350 = vector.extract_strided_slice %348 {offsets = [0, 0], sizes = [8, 128], strides = [1, 1]} : vector<8x384xf32> to vector<8x128xf32>
    %351 = arith.addf %349, %350 : vector<8x128xf32>
    %352 = arith.negf %351 : vector<8x128xf32>
    %353 = math.exp %352 : vector<8x128xf32>
    %cst_109 = arith.constant 1.000000e+00 : f32
    %354 = vector.broadcast %cst_109 : f32 to vector<8x128xf32>
    %355 = arith.addf %354, %353 : vector<8x128xf32>
    %356 = arith.divf %354, %355 : vector<8x128xf32>
    %357 = vector.extract_strided_slice %347 {offsets = [0, 128], sizes = [8, 128], strides = [1, 1]} : vector<8x384xf32> to vector<8x128xf32>
    %358 = vector.extract_strided_slice %348 {offsets = [0, 128], sizes = [8, 128], strides = [1, 1]} : vector<8x384xf32> to vector<8x128xf32>
    %359 = arith.addf %357, %358 : vector<8x128xf32>
    %360 = arith.negf %359 : vector<8x128xf32>
    %361 = math.exp %360 : vector<8x128xf32>
    %cst_110 = arith.constant 1.000000e+00 : f32
    %362 = vector.broadcast %cst_110 : f32 to vector<8x128xf32>
    %363 = arith.addf %362, %361 : vector<8x128xf32>
    %364 = arith.divf %362, %363 : vector<8x128xf32>
    %365 = vector.extract_strided_slice %347 {offsets = [0, 256], sizes = [8, 128], strides = [1, 1]} : vector<8x384xf32> to vector<8x128xf32>
    %366 = vector.extract_strided_slice %348 {offsets = [0, 256], sizes = [8, 128], strides = [1, 1]} : vector<8x384xf32> to vector<8x128xf32>
    %367 = arith.addf %366, %309 : vector<8x128xf32>
    %368 = arith.mulf %356, %367 : vector<8x128xf32>
    %369 = arith.addf %365, %368 : vector<8x128xf32>
    %370 = math.tanh %369 : vector<8x128xf32>
    %cst_111 = arith.constant 1.000000e+00 : f32
    %371 = vector.broadcast %cst_111 : f32 to vector<8x128xf32>
    %372 = arith.subf %371, %364 : vector<8x128xf32>
    %373 = arith.mulf %372, %370 : vector<8x128xf32>
    %374 = arith.mulf %364, %340 : vector<8x128xf32>
    %375 = arith.addf %373, %374 : vector<8x128xf32>
    %376 = arith.index_cast %c1_i32_105 : i32 to index
    %c0_112 = arith.constant 0 : index
    %c0_113 = arith.constant 0 : index
    %377 = vector.load %arg10[%376, %c0_112, %c0_113] : memref<8x8x128xf32, #tpu.memory_space<vmem>>, vector<1x8x128xf32>
    %378 = vector.shape_cast %377 : vector<1x8x128xf32> to vector<8x128xf32>
    %379 = vector.shape_cast %375 : vector<8x128xf32> to vector<1x8x128xf32>
    tpu.vector_store %arg10[%376, %c0_112, %c0_113], %379 {strides = array<i32>} : memref<8x8x128xf32, #tpu.memory_space<vmem>>, vector<1x8x128xf32>,
    %c2_i32_114 = arith.constant 2 : i32
    %380 = arith.index_cast %c2_i32_114 : i32 to index
    %c0_115 = arith.constant 0 : index
    %c0_116 = arith.constant 0 : index
    %381 = vector.load %arg12[%380, %c0_115, %c0_116] : memref<8x8x384xf32, #tpu.memory_space<vmem>>, vector<1x8x384xf32>
    %382 = vector.shape_cast %381 : vector<1x8x384xf32> to vector<8x384xf32>
    %cst_117 = arith.constant dense<0.000000e+00> : vector<8x384xf32>
    %383 = tpu.matmul %375, %306, %cst_117 {dimension_numbers = #tpu.dot_dimension_numbers<[1], [0], [0], [1], [0, 0, 1, 1], [], []>} : vector<8x128xf32>, vector<128x384xf32>, vector<8x384xf32> -> vector<8x384xf32>
    %384 = vector.extract_strided_slice %382 {offsets = [0, 0], sizes = [8, 128], strides = [1, 1]} : vector<8x384xf32> to vector<8x128xf32>
    %385 = vector.extract_strided_slice %383 {offsets = [0, 0], sizes = [8, 128], strides = [1, 1]} : vector<8x384xf32> to vector<8x128xf32>
    %386 = arith.addf %384, %385 : vector<8x128xf32>
    %387 = arith.negf %386 : vector<8x128xf32>
    %388 = math.exp %387 : vector<8x128xf32>
    %cst_118 = arith.constant 1.000000e+00 : f32
    %389 = vector.broadcast %cst_118 : f32 to vector<8x128xf32>
    %390 = arith.addf %389, %388 : vector<8x128xf32>
    %391 = arith.divf %389, %390 : vector<8x128xf32>
    %392 = vector.extract_strided_slice %382 {offsets = [0, 128], sizes = [8, 128], strides = [1, 1]} : vector<8x384xf32> to vector<8x128xf32>
    %393 = vector.extract_strided_slice %383 {offsets = [0, 128], sizes = [8, 128], strides = [1, 1]} : vector<8x384xf32> to vector<8x128xf32>
    %394 = arith.addf %392, %393 : vector<8x128xf32>
    %395 = arith.negf %394 : vector<8x128xf32>
    %396 = math.exp %395 : vector<8x128xf32>
    %cst_119 = arith.constant 1.000000e+00 : f32
    %397 = vector.broadcast %cst_119 : f32 to vector<8x128xf32>
    %398 = arith.addf %397, %396 : vector<8x128xf32>
    %399 = arith.divf %397, %398 : vector<8x128xf32>
    %400 = vector.extract_strided_slice %382 {offsets = [0, 256], sizes = [8, 128], strides = [1, 1]} : vector<8x384xf32> to vector<8x128xf32>
    %401 = vector.extract_strided_slice %383 {offsets = [0, 256], sizes = [8, 128], strides = [1, 1]} : vector<8x384xf32> to vector<8x128xf32>
    %402 = arith.addf %401, %309 : vector<8x128xf32>
    %403 = arith.mulf %391, %402 : vector<8x128xf32>
    %404 = arith.addf %400, %403 : vector<8x128xf32>
    %405 = math.tanh %404 : vector<8x128xf32>
    %cst_120 = arith.constant 1.000000e+00 : f32
    %406 = vector.broadcast %cst_120 : f32 to vector<8x128xf32>
    %407 = arith.subf %406, %399 : vector<8x128xf32>
    %408 = arith.mulf %407, %405 : vector<8x128xf32>
    %409 = arith.mulf %399, %375 : vector<8x128xf32>
    %410 = arith.addf %408, %409 : vector<8x128xf32>
    %411 = arith.index_cast %c2_i32_114 : i32 to index
    %c0_121 = arith.constant 0 : index
    %c0_122 = arith.constant 0 : index
    %412 = vector.load %arg10[%411, %c0_121, %c0_122] : memref<8x8x128xf32, #tpu.memory_space<vmem>>, vector<1x8x128xf32>
    %413 = vector.shape_cast %412 : vector<1x8x128xf32> to vector<8x128xf32>
    %414 = vector.shape_cast %410 : vector<8x128xf32> to vector<1x8x128xf32>
    tpu.vector_store %arg10[%411, %c0_121, %c0_122], %414 {strides = array<i32>} : memref<8x8x128xf32, #tpu.memory_space<vmem>>, vector<1x8x128xf32>,
    %c3_i32_123 = arith.constant 3 : i32
    %415 = arith.index_cast %c3_i32_123 : i32 to index
    %c0_124 = arith.constant 0 : index
    %c0_125 = arith.constant 0 : index
    %416 = vector.load %arg12[%415, %c0_124, %c0_125] : memref<8x8x384xf32, #tpu.memory_space<vmem>>, vector<1x8x384xf32>
    %417 = vector.shape_cast %416 : vector<1x8x384xf32> to vector<8x384xf32>
    %cst_126 = arith.constant dense<0.000000e+00> : vector<8x384xf32>
    %418 = tpu.matmul %410, %306, %cst_126 {dimension_numbers = #tpu.dot_dimension_numbers<[1], [0], [0], [1], [0, 0, 1, 1], [], []>} : vector<8x128xf32>, vector<128x384xf32>, vector<8x384xf32> -> vector<8x384xf32>
    %419 = vector.extract_strided_slice %417 {offsets = [0, 0], sizes = [8, 128], strides = [1, 1]} : vector<8x384xf32> to vector<8x128xf32>
    %420 = vector.extract_strided_slice %418 {offsets = [0, 0], sizes = [8, 128], strides = [1, 1]} : vector<8x384xf32> to vector<8x128xf32>
    %421 = arith.addf %419, %420 : vector<8x128xf32>
    %422 = arith.negf %421 : vector<8x128xf32>
    %423 = math.exp %422 : vector<8x128xf32>
    %cst_127 = arith.constant 1.000000e+00 : f32
    %424 = vector.broadcast %cst_127 : f32 to vector<8x128xf32>
    %425 = arith.addf %424, %423 : vector<8x128xf32>
    %426 = arith.divf %424, %425 : vector<8x128xf32>
    %427 = vector.extract_strided_slice %417 {offsets = [0, 128], sizes = [8, 128], strides = [1, 1]} : vector<8x384xf32> to vector<8x128xf32>
    %428 = vector.extract_strided_slice %418 {offsets = [0, 128], sizes = [8, 128], strides = [1, 1]} : vector<8x384xf32> to vector<8x128xf32>
    %429 = arith.addf %427, %428 : vector<8x128xf32>
    %430 = arith.negf %429 : vector<8x128xf32>
    %431 = math.exp %430 : vector<8x128xf32>
    %cst_128 = arith.constant 1.000000e+00 : f32
    %432 = vector.broadcast %cst_128 : f32 to vector<8x128xf32>
    %433 = arith.addf %432, %431 : vector<8x128xf32>
    %434 = arith.divf %432, %433 : vector<8x128xf32>
    %435 = vector.extract_strided_slice %417 {offsets = [0, 256], sizes = [8, 128], strides = [1, 1]} : vector<8x384xf32> to vector<8x128xf32>
    %436 = vector.extract_strided_slice %418 {offsets = [0, 256], sizes = [8, 128], strides = [1, 1]} : vector<8x384xf32> to vector<8x128xf32>
    %437 = arith.addf %436, %309 : vector<8x128xf32>
    %438 = arith.mulf %426, %437 : vector<8x128xf32>
    %439 = arith.addf %435, %438 : vector<8x128xf32>
    %440 = math.tanh %439 : vector<8x128xf32>
    %cst_129 = arith.constant 1.000000e+00 : f32
    %441 = vector.broadcast %cst_129 : f32 to vector<8x128xf32>
    %442 = arith.subf %441, %434 : vector<8x128xf32>
    %443 = arith.mulf %442, %440 : vector<8x128xf32>
    %444 = arith.mulf %434, %410 : vector<8x128xf32>
    %445 = arith.addf %443, %444 : vector<8x128xf32>
    %446 = arith.index_cast %c3_i32_123 : i32 to index
    %c0_130 = arith.constant 0 : index
    %c0_131 = arith.constant 0 : index
    %447 = vector.load %arg10[%446, %c0_130, %c0_131] : memref<8x8x128xf32, #tpu.memory_space<vmem>>, vector<1x8x128xf32>
    %448 = vector.shape_cast %447 : vector<1x8x128xf32> to vector<8x128xf32>
    %449 = vector.shape_cast %445 : vector<8x128xf32> to vector<1x8x128xf32>
    tpu.vector_store %arg10[%446, %c0_130, %c0_131], %449 {strides = array<i32>} : memref<8x8x128xf32, #tpu.memory_space<vmem>>, vector<1x8x128xf32>,
    %c4_i32_132 = arith.constant 4 : i32
    %450 = arith.index_cast %c4_i32_132 : i32 to index
    %c0_133 = arith.constant 0 : index
    %c0_134 = arith.constant 0 : index
    %451 = vector.load %arg12[%450, %c0_133, %c0_134] : memref<8x8x384xf32, #tpu.memory_space<vmem>>, vector<1x8x384xf32>
    %452 = vector.shape_cast %451 : vector<1x8x384xf32> to vector<8x384xf32>
    %cst_135 = arith.constant dense<0.000000e+00> : vector<8x384xf32>
    %453 = tpu.matmul %445, %306, %cst_135 {dimension_numbers = #tpu.dot_dimension_numbers<[1], [0], [0], [1], [0, 0, 1, 1], [], []>} : vector<8x128xf32>, vector<128x384xf32>, vector<8x384xf32> -> vector<8x384xf32>
    %454 = vector.extract_strided_slice %452 {offsets = [0, 0], sizes = [8, 128], strides = [1, 1]} : vector<8x384xf32> to vector<8x128xf32>
    %455 = vector.extract_strided_slice %453 {offsets = [0, 0], sizes = [8, 128], strides = [1, 1]} : vector<8x384xf32> to vector<8x128xf32>
    %456 = arith.addf %454, %455 : vector<8x128xf32>
    %457 = arith.negf %456 : vector<8x128xf32>
    %458 = math.exp %457 : vector<8x128xf32>
    %cst_136 = arith.constant 1.000000e+00 : f32
    %459 = vector.broadcast %cst_136 : f32 to vector<8x128xf32>
    %460 = arith.addf %459, %458 : vector<8x128xf32>
    %461 = arith.divf %459, %460 : vector<8x128xf32>
    %462 = vector.extract_strided_slice %452 {offsets = [0, 128], sizes = [8, 128], strides = [1, 1]} : vector<8x384xf32> to vector<8x128xf32>
    %463 = vector.extract_strided_slice %453 {offsets = [0, 128], sizes = [8, 128], strides = [1, 1]} : vector<8x384xf32> to vector<8x128xf32>
    %464 = arith.addf %462, %463 : vector<8x128xf32>
    %465 = arith.negf %464 : vector<8x128xf32>
    %466 = math.exp %465 : vector<8x128xf32>
    %cst_137 = arith.constant 1.000000e+00 : f32
    %467 = vector.broadcast %cst_137 : f32 to vector<8x128xf32>
    %468 = arith.addf %467, %466 : vector<8x128xf32>
    %469 = arith.divf %467, %468 : vector<8x128xf32>
    %470 = vector.extract_strided_slice %452 {offsets = [0, 256], sizes = [8, 128], strides = [1, 1]} : vector<8x384xf32> to vector<8x128xf32>
    %471 = vector.extract_strided_slice %453 {offsets = [0, 256], sizes = [8, 128], strides = [1, 1]} : vector<8x384xf32> to vector<8x128xf32>
    %472 = arith.addf %471, %309 : vector<8x128xf32>
    %473 = arith.mulf %461, %472 : vector<8x128xf32>
    %474 = arith.addf %470, %473 : vector<8x128xf32>
    %475 = math.tanh %474 : vector<8x128xf32>
    %cst_138 = arith.constant 1.000000e+00 : f32
    %476 = vector.broadcast %cst_138 : f32 to vector<8x128xf32>
    %477 = arith.subf %476, %469 : vector<8x128xf32>
    %478 = arith.mulf %477, %475 : vector<8x128xf32>
    %479 = arith.mulf %469, %445 : vector<8x128xf32>
    %480 = arith.addf %478, %479 : vector<8x128xf32>
    %481 = arith.index_cast %c4_i32_132 : i32 to index
    %c0_139 = arith.constant 0 : index
    %c0_140 = arith.constant 0 : index
    %482 = vector.load %arg10[%481, %c0_139, %c0_140] : memref<8x8x128xf32, #tpu.memory_space<vmem>>, vector<1x8x128xf32>
    %483 = vector.shape_cast %482 : vector<1x8x128xf32> to vector<8x128xf32>
    %484 = vector.shape_cast %480 : vector<8x128xf32> to vector<1x8x128xf32>
    tpu.vector_store %arg10[%481, %c0_139, %c0_140], %484 {strides = array<i32>} : memref<8x8x128xf32, #tpu.memory_space<vmem>>, vector<1x8x128xf32>,
    %c5_i32_141 = arith.constant 5 : i32
    %485 = arith.index_cast %c5_i32_141 : i32 to index
    %c0_142 = arith.constant 0 : index
    %c0_143 = arith.constant 0 : index
    %486 = vector.load %arg12[%485, %c0_142, %c0_143] : memref<8x8x384xf32, #tpu.memory_space<vmem>>, vector<1x8x384xf32>
    %487 = vector.shape_cast %486 : vector<1x8x384xf32> to vector<8x384xf32>
    %cst_144 = arith.constant dense<0.000000e+00> : vector<8x384xf32>
    %488 = tpu.matmul %480, %306, %cst_144 {dimension_numbers = #tpu.dot_dimension_numbers<[1], [0], [0], [1], [0, 0, 1, 1], [], []>} : vector<8x128xf32>, vector<128x384xf32>, vector<8x384xf32> -> vector<8x384xf32>
    %489 = vector.extract_strided_slice %487 {offsets = [0, 0], sizes = [8, 128], strides = [1, 1]} : vector<8x384xf32> to vector<8x128xf32>
    %490 = vector.extract_strided_slice %488 {offsets = [0, 0], sizes = [8, 128], strides = [1, 1]} : vector<8x384xf32> to vector<8x128xf32>
    %491 = arith.addf %489, %490 : vector<8x128xf32>
    %492 = arith.negf %491 : vector<8x128xf32>
    %493 = math.exp %492 : vector<8x128xf32>
    %cst_145 = arith.constant 1.000000e+00 : f32
    %494 = vector.broadcast %cst_145 : f32 to vector<8x128xf32>
    %495 = arith.addf %494, %493 : vector<8x128xf32>
    %496 = arith.divf %494, %495 : vector<8x128xf32>
    %497 = vector.extract_strided_slice %487 {offsets = [0, 128], sizes = [8, 128], strides = [1, 1]} : vector<8x384xf32> to vector<8x128xf32>
    %498 = vector.extract_strided_slice %488 {offsets = [0, 128], sizes = [8, 128], strides = [1, 1]} : vector<8x384xf32> to vector<8x128xf32>
    %499 = arith.addf %497, %498 : vector<8x128xf32>
    %500 = arith.negf %499 : vector<8x128xf32>
    %501 = math.exp %500 : vector<8x128xf32>
    %cst_146 = arith.constant 1.000000e+00 : f32
    %502 = vector.broadcast %cst_146 : f32 to vector<8x128xf32>
    %503 = arith.addf %502, %501 : vector<8x128xf32>
    %504 = arith.divf %502, %503 : vector<8x128xf32>
    %505 = vector.extract_strided_slice %487 {offsets = [0, 256], sizes = [8, 128], strides = [1, 1]} : vector<8x384xf32> to vector<8x128xf32>
    %506 = vector.extract_strided_slice %488 {offsets = [0, 256], sizes = [8, 128], strides = [1, 1]} : vector<8x384xf32> to vector<8x128xf32>
    %507 = arith.addf %506, %309 : vector<8x128xf32>
    %508 = arith.mulf %496, %507 : vector<8x128xf32>
    %509 = arith.addf %505, %508 : vector<8x128xf32>
    %510 = math.tanh %509 : vector<8x128xf32>
    %cst_147 = arith.constant 1.000000e+00 : f32
    %511 = vector.broadcast %cst_147 : f32 to vector<8x128xf32>
    %512 = arith.subf %511, %504 : vector<8x128xf32>
    %513 = arith.mulf %512, %510 : vector<8x128xf32>
    %514 = arith.mulf %504, %480 : vector<8x128xf32>
    %515 = arith.addf %513, %514 : vector<8x128xf32>
    %516 = arith.index_cast %c5_i32_141 : i32 to index
    %c0_148 = arith.constant 0 : index
    %c0_149 = arith.constant 0 : index
    %517 = vector.load %arg10[%516, %c0_148, %c0_149] : memref<8x8x128xf32, #tpu.memory_space<vmem>>, vector<1x8x128xf32>
    %518 = vector.shape_cast %517 : vector<1x8x128xf32> to vector<8x128xf32>
    %519 = vector.shape_cast %515 : vector<8x128xf32> to vector<1x8x128xf32>
    tpu.vector_store %arg10[%516, %c0_148, %c0_149], %519 {strides = array<i32>} : memref<8x8x128xf32, #tpu.memory_space<vmem>>, vector<1x8x128xf32>,
    %c6_i32_150 = arith.constant 6 : i32
    %520 = arith.index_cast %c6_i32_150 : i32 to index
    %c0_151 = arith.constant 0 : index
    %c0_152 = arith.constant 0 : index
    %521 = vector.load %arg12[%520, %c0_151, %c0_152] : memref<8x8x384xf32, #tpu.memory_space<vmem>>, vector<1x8x384xf32>
    %522 = vector.shape_cast %521 : vector<1x8x384xf32> to vector<8x384xf32>
    %cst_153 = arith.constant dense<0.000000e+00> : vector<8x384xf32>
    %523 = tpu.matmul %515, %306, %cst_153 {dimension_numbers = #tpu.dot_dimension_numbers<[1], [0], [0], [1], [0, 0, 1, 1], [], []>} : vector<8x128xf32>, vector<128x384xf32>, vector<8x384xf32> -> vector<8x384xf32>
    %524 = vector.extract_strided_slice %522 {offsets = [0, 0], sizes = [8, 128], strides = [1, 1]} : vector<8x384xf32> to vector<8x128xf32>
    %525 = vector.extract_strided_slice %523 {offsets = [0, 0], sizes = [8, 128], strides = [1, 1]} : vector<8x384xf32> to vector<8x128xf32>
    %526 = arith.addf %524, %525 : vector<8x128xf32>
    %527 = arith.negf %526 : vector<8x128xf32>
    %528 = math.exp %527 : vector<8x128xf32>
    %cst_154 = arith.constant 1.000000e+00 : f32
    %529 = vector.broadcast %cst_154 : f32 to vector<8x128xf32>
    %530 = arith.addf %529, %528 : vector<8x128xf32>
    %531 = arith.divf %529, %530 : vector<8x128xf32>
    %532 = vector.extract_strided_slice %522 {offsets = [0, 128], sizes = [8, 128], strides = [1, 1]} : vector<8x384xf32> to vector<8x128xf32>
    %533 = vector.extract_strided_slice %523 {offsets = [0, 128], sizes = [8, 128], strides = [1, 1]} : vector<8x384xf32> to vector<8x128xf32>
    %534 = arith.addf %532, %533 : vector<8x128xf32>
    %535 = arith.negf %534 : vector<8x128xf32>
    %536 = math.exp %535 : vector<8x128xf32>
    %cst_155 = arith.constant 1.000000e+00 : f32
    %537 = vector.broadcast %cst_155 : f32 to vector<8x128xf32>
    %538 = arith.addf %537, %536 : vector<8x128xf32>
    %539 = arith.divf %537, %538 : vector<8x128xf32>
    %540 = vector.extract_strided_slice %522 {offsets = [0, 256], sizes = [8, 128], strides = [1, 1]} : vector<8x384xf32> to vector<8x128xf32>
    %541 = vector.extract_strided_slice %523 {offsets = [0, 256], sizes = [8, 128], strides = [1, 1]} : vector<8x384xf32> to vector<8x128xf32>
    %542 = arith.addf %541, %309 : vector<8x128xf32>
    %543 = arith.mulf %531, %542 : vector<8x128xf32>
    %544 = arith.addf %540, %543 : vector<8x128xf32>
    %545 = math.tanh %544 : vector<8x128xf32>
    %cst_156 = arith.constant 1.000000e+00 : f32
    %546 = vector.broadcast %cst_156 : f32 to vector<8x128xf32>
    %547 = arith.subf %546, %539 : vector<8x128xf32>
    %548 = arith.mulf %547, %545 : vector<8x128xf32>
    %549 = arith.mulf %539, %515 : vector<8x128xf32>
    %550 = arith.addf %548, %549 : vector<8x128xf32>
    %551 = arith.index_cast %c6_i32_150 : i32 to index
    %c0_157 = arith.constant 0 : index
    %c0_158 = arith.constant 0 : index
    %552 = vector.load %arg10[%551, %c0_157, %c0_158] : memref<8x8x128xf32, #tpu.memory_space<vmem>>, vector<1x8x128xf32>
    %553 = vector.shape_cast %552 : vector<1x8x128xf32> to vector<8x128xf32>
    %554 = vector.shape_cast %550 : vector<8x128xf32> to vector<1x8x128xf32>
    tpu.vector_store %arg10[%551, %c0_157, %c0_158], %554 {strides = array<i32>} : memref<8x8x128xf32, #tpu.memory_space<vmem>>, vector<1x8x128xf32>,
    %c7_i32_159 = arith.constant 7 : i32
    %555 = arith.index_cast %c7_i32_159 : i32 to index
    %c0_160 = arith.constant 0 : index
    %c0_161 = arith.constant 0 : index
    %556 = vector.load %arg12[%555, %c0_160, %c0_161] : memref<8x8x384xf32, #tpu.memory_space<vmem>>, vector<1x8x384xf32>
    %557 = vector.shape_cast %556 : vector<1x8x384xf32> to vector<8x384xf32>
    %cst_162 = arith.constant dense<0.000000e+00> : vector<8x384xf32>
    %558 = tpu.matmul %550, %306, %cst_162 {dimension_numbers = #tpu.dot_dimension_numbers<[1], [0], [0], [1], [0, 0, 1, 1], [], []>} : vector<8x128xf32>, vector<128x384xf32>, vector<8x384xf32> -> vector<8x384xf32>
    %559 = vector.extract_strided_slice %557 {offsets = [0, 0], sizes = [8, 128], strides = [1, 1]} : vector<8x384xf32> to vector<8x128xf32>
    %560 = vector.extract_strided_slice %558 {offsets = [0, 0], sizes = [8, 128], strides = [1, 1]} : vector<8x384xf32> to vector<8x128xf32>
    %561 = arith.addf %559, %560 : vector<8x128xf32>
    %562 = arith.negf %561 : vector<8x128xf32>
    %563 = math.exp %562 : vector<8x128xf32>
    %cst_163 = arith.constant 1.000000e+00 : f32
    %564 = vector.broadcast %cst_163 : f32 to vector<8x128xf32>
    %565 = arith.addf %564, %563 : vector<8x128xf32>
    %566 = arith.divf %564, %565 : vector<8x128xf32>
    %567 = vector.extract_strided_slice %557 {offsets = [0, 128], sizes = [8, 128], strides = [1, 1]} : vector<8x384xf32> to vector<8x128xf32>
    %568 = vector.extract_strided_slice %558 {offsets = [0, 128], sizes = [8, 128], strides = [1, 1]} : vector<8x384xf32> to vector<8x128xf32>
    %569 = arith.addf %567, %568 : vector<8x128xf32>
    %570 = arith.negf %569 : vector<8x128xf32>
    %571 = math.exp %570 : vector<8x128xf32>
    %cst_164 = arith.constant 1.000000e+00 : f32
    %572 = vector.broadcast %cst_164 : f32 to vector<8x128xf32>
    %573 = arith.addf %572, %571 : vector<8x128xf32>
    %574 = arith.divf %572, %573 : vector<8x128xf32>
    %575 = vector.extract_strided_slice %557 {offsets = [0, 256], sizes = [8, 128], strides = [1, 1]} : vector<8x384xf32> to vector<8x128xf32>
    %576 = vector.extract_strided_slice %558 {offsets = [0, 256], sizes = [8, 128], strides = [1, 1]} : vector<8x384xf32> to vector<8x128xf32>
    %577 = arith.addf %576, %309 : vector<8x128xf32>
    %578 = arith.mulf %566, %577 : vector<8x128xf32>
    %579 = arith.addf %575, %578 : vector<8x128xf32>
    %580 = math.tanh %579 : vector<8x128xf32>
    %cst_165 = arith.constant 1.000000e+00 : f32
    %581 = vector.broadcast %cst_165 : f32 to vector<8x128xf32>
    %582 = arith.subf %581, %574 : vector<8x128xf32>
    %583 = arith.mulf %582, %580 : vector<8x128xf32>
    %584 = arith.mulf %574, %550 : vector<8x128xf32>
    %585 = arith.addf %583, %584 : vector<8x128xf32>
    %586 = arith.index_cast %c7_i32_159 : i32 to index
    %c0_166 = arith.constant 0 : index
    %c0_167 = arith.constant 0 : index
    %587 = vector.load %arg10[%586, %c0_166, %c0_167] : memref<8x8x128xf32, #tpu.memory_space<vmem>>, vector<1x8x128xf32>
    %588 = vector.shape_cast %587 : vector<1x8x128xf32> to vector<8x128xf32>
    %589 = vector.shape_cast %585 : vector<8x128xf32> to vector<1x8x128xf32>
    tpu.vector_store %arg10[%586, %c0_166, %c0_167], %589 {strides = array<i32>} : memref<8x8x128xf32, #tpu.memory_space<vmem>>, vector<1x8x128xf32>,
    %c8_i32_168 = arith.constant 8 : i32
    %c1 = arith.constant 1 : index
    %c0_169 = arith.constant 0 : index
    %c0_170 = arith.constant 0 : index
    %590 = vector.load %arg11[%c1, %c0_169, %c0_170] : memref<2x8x128xf32, #tpu.memory_space<vmem>>, vector<1x8x128xf32>
    %591 = vector.shape_cast %590 : vector<1x8x128xf32> to vector<8x128xf32>
    %592 = vector.shape_cast %585 : vector<8x128xf32> to vector<1x8x128xf32>
    tpu.vector_store %arg11[%c1, %c0_169, %c0_170], %592 {strides = array<i32>} : memref<2x8x128xf32, #tpu.memory_space<vmem>>, vector<1x8x128xf32>,
    return
  }
  func.func @transform_0(%arg0: i32) -> (i32, i32, i32) {
    %c0_i32 = arith.constant 0 : i32
    %c0_i32_0 = arith.constant 0 : i32
    %c0_i32_1 = arith.constant 0 : i32
    return %c0_i32, %arg0, %c0_i32_0 : i32, i32, i32
  }
  func.func @transform_1(%arg0: i32) -> (i32, i32) {
    %c0_i32 = arith.constant 0 : i32
    %c0_i32_0 = arith.constant 0 : i32
    %c0_i32_1 = arith.constant 0 : i32
    return %c0_i32, %c0_i32_0 : i32, i32
  }
  func.func @transform_2(%arg0: i32) -> (i32, i32) {
    %c0_i32 = arith.constant 0 : i32
    %c0_i32_0 = arith.constant 0 : i32
    %c0_i32_1 = arith.constant 0 : i32
    return %c0_i32, %c0_i32_0 : i32, i32
  }
  func.func @transform_3(%arg0: i32) -> (i32, i32) {
    %c0_i32 = arith.constant 0 : i32
    %c0_i32_0 = arith.constant 0 : i32
    %c0_i32_1 = arith.constant 0 : i32
    return %c0_i32, %c0_i32_0 : i32, i32
  }
  func.func @transform_4(%arg0: i32) -> (i32, i32) {
    %c0_i32 = arith.constant 0 : i32
    %c0_i32_0 = arith.constant 0 : i32
    %c0_i32_1 = arith.constant 0 : i32
    return %c0_i32, %c0_i32_0 : i32, i32
  }
  func.func @transform_5(%arg0: i32) -> (i32, i32) {
    %c0_i32 = arith.constant 0 : i32
    %c0_i32_0 = arith.constant 0 : i32
    %c0_i32_1 = arith.constant 0 : i32
    return %c0_i32, %c0_i32_0 : i32, i32
  }
  func.func @transform_6(%arg0: i32) -> (i32, i32) {
    %c0_i32 = arith.constant 0 : i32
    %c0_i32_0 = arith.constant 0 : i32
    %c0_i32_1 = arith.constant 0 : i32
    return %c0_i32, %c0_i32_0 : i32, i32
  }
  func.func @transform_7(%arg0: i32) -> (i32, i32) {
    %c0_i32 = arith.constant 0 : i32
    %c0_i32_0 = arith.constant 0 : i32
    %c0_i32_1 = arith.constant 0 : i32
    return %c0_i32, %c0_i32_0 : i32, i32
  }
  func.func @transform_8(%arg0: i32) -> (i32, i32) {
    %c0_i32 = arith.constant 0 : i32
    %c0_i32_0 = arith.constant 0 : i32
    %c0_i32_1 = arith.constant 0 : i32
    return %c0_i32, %c0_i32_0 : i32, i32
  }
  func.func @transform_9(%arg0: i32) -> (i32, i32, i32) {
    %c0_i32 = arith.constant 0 : i32
    %c0_i32_0 = arith.constant 0 : i32
    %c0_i32_1 = arith.constant 0 : i32
    return %c0_i32, %arg0, %c0_i32_0 : i32, i32, i32
  }
  func.func @transform_10(%arg0: i32) -> (i32, i32, i32) {
    %c0_i32 = arith.constant 0 : i32
    %c0_i32_0 = arith.constant 0 : i32
    %c0_i32_1 = arith.constant 0 : i32
    return %c0_i32, %arg0, %c0_i32_0 : i32, i32, i32
  }
}

</mosaic_0001>

<llo_original>
// kernel: seq2seq_encoder_forward.1
$region0: #{seq2seq_encoder_forward.1}
  #allocation0 [shape = 'u32[]', space=smem, size = 0x4, offset = 0x4, fixed_abs, tag = 'smem constant byte address 0x4 - core index']
  #allocation1 [shape = 'u32[144,128]{1,0:T(1,128)}', space=vmem, size = 0x12000, scoped, tag = 'internal scratch']
  #allocation2 [shape = 'f32[8,8,384]{2,1,0:T(8,128)}', space=vmem, size = 0x18000, scoped, tag = 'scratch operand']
  %s0 = inlined_call_operand.vmem [shape: f32[8,8,32], index: 0, kind: input, shape index: {}]
  %s1 = inlined_call_operand.vmem [shape: f32[32,384], index: 1, kind: input, shape index: {}]
  %s2 = inlined_call_operand.vmem [shape: f32[128,384], index: 2, kind: input, shape index: {}]
  %s3 = inlined_call_operand.vmem [shape: f32[1,384], index: 3, kind: input, shape index: {}]
  %s4 = inlined_call_operand.vmem [shape: f32[1,128], index: 4, kind: input, shape index: {}]
  %s5 = inlined_call_operand.vmem [shape: f32[128,384], index: 5, kind: input, shape index: {}]
  %s6 = inlined_call_operand.vmem [shape: f32[128,384], index: 6, kind: input, shape index: {}]
  %s7 = inlined_call_operand.vmem [shape: f32[1,384], index: 7, kind: input, shape index: {}]
  %s8 = inlined_call_operand.vmem [shape: f32[1,128], index: 8, kind: input, shape index: {}]
  %s9 = inlined_call_operand.hbm [shape: f32[8,8,128], index: 9, kind: output, shape index: {0}]
  %s10 = inlined_call_operand.hbm [shape: f32[2,8,128], index: 10, kind: output, shape index: {1}]
  %11 = xla_tuple %s9, %s10
  %s12 = sld [smem:[#allocation0]]
  $region54: #{seq2seq_encoder_forward.1} parent=0
    _
  %s14 = ssub.s32 1, %s12
  %s15 = scalar_select 0, %s14, %s12
  $region1: #{seq2seq_encoder_forward.1} parent=0
    #allocation3 [shape = 'u8[32768]{0}', space=vmem, size = 0x8000, scoped, tag = 'output window, operand 0, single buffered']
    #allocation4 [shape = 's32[1]{0}', space=sflag, size = 0x4, scoped, tag = 'scoped memory for seq2seq_encoder_forward.1']
    #allocation5 [shape = 'u8[8192]{0}', space=vmem, size = 0x2000, scoped, tag = 'output window, operand 1, single buffered']
    #allocation6 [shape = 's32[1]{0}', space=sflag, size = 0x4, scoped, tag = 'scoped memory for seq2seq_encoder_forward.1']
    %16 = vsyncpa [#allocation4], 0
    %17 = vsyncpa [#allocation6], 0
    // Predicated region
    $region2: #{seq2seq_encoder_forward.1} parent=1 // pred_check
      _
    $region3: #{seq2seq_encoder_forward.1} parent=1 // pred_check_branch
      %19 = sbr.rel (0) target = $region5
    $region4: #{seq2seq_encoder_forward.1} parent=1 // pred_region
      _
    $region5: #{seq2seq_encoder_forward.1} parent=1 // pred_fallthru
      _
    // Predicated region
    $region6: #{seq2seq_encoder_forward.1} parent=1 // pred_check
      _
    $region7: #{seq2seq_encoder_forward.1} parent=1 // pred_check_branch
      %21 = sbr.rel (0) target = $region9
    $region8: #{seq2seq_encoder_forward.1} parent=1 // pred_region
      _
    $region9: #{seq2seq_encoder_forward.1} parent=1 // pred_fallthru
      _
    // Predicated region
    $region10: #{seq2seq_encoder_forward.1} parent=1 // pred_check
      _
    $region11: #{seq2seq_encoder_forward.1} parent=1 // pred_check_branch
      %23 = sbr.rel (0) target = $region13
    $region12: #{seq2seq_encoder_forward.1} parent=1 // pred_region
      _
    $region13: #{seq2seq_encoder_forward.1} parent=1 // pred_fallthru
      _
    // Predicated region
    $region14: #{seq2seq_encoder_forward.1} parent=1 // pred_check
      _
    $region15: #{seq2seq_encoder_forward.1} parent=1 // pred_check_branch
      %25 = sbr.rel (0) target = $region17
    $region16: #{seq2seq_encoder_forward.1} parent=1 // pred_region
      _
    $region17: #{seq2seq_encoder_forward.1} parent=1 // pred_fallthru
      _
    // Predicated region
    $region18: #{seq2seq_encoder_forward.1} parent=1 // pred_check
      _
    $region19: #{seq2seq_encoder_forward.1} parent=1 // pred_check_branch
      %27 = sbr.rel (0) target = $region21
    $region20: #{seq2seq_encoder_forward.1} parent=1 // pred_region
      _
    $region21: #{seq2seq_encoder_forward.1} parent=1 // pred_fallthru
      _
    // Predicated region
    $region22: #{seq2seq_encoder_forward.1} parent=1 // pred_check
      _
    $region23: #{seq2seq_encoder_forward.1} parent=1 // pred_check_branch
      %29 = sbr.rel (0) target = $region25
    $region24: #{seq2seq_encoder_forward.1} parent=1 // pred_region
      _
    $region25: #{seq2seq_encoder_forward.1} parent=1 // pred_fallthru
      _
    // Predicated region
    $region26: #{seq2seq_encoder_forward.1} parent=1 // pred_check
      _
    $region27: #{seq2seq_encoder_forward.1} parent=1 // pred_check_branch
      %31 = sbr.rel (0) target = $region29
    $region28: #{seq2seq_encoder_forward.1} parent=1 // pred_region
      _
    $region29: #{seq2seq_encoder_forward.1} parent=1 // pred_fallthru
      _
    // Predicated region
    $region30: #{seq2seq_encoder_forward.1} parent=1 // pred_check
      _
    $region31: #{seq2seq_encoder_forward.1} parent=1 // pred_check_branch
      %33 = sbr.rel (0) target = $region33
    $region32: #{seq2seq_encoder_forward.1} parent=1 // pred_region
      _
    $region33: #{seq2seq_encoder_forward.1} parent=1 // pred_fallthru
      _
    // Predicated region
    $region34: #{seq2seq_encoder_forward.1} parent=1 // pred_check
      _
    $region35: #{seq2seq_encoder_forward.1} parent=1 // pred_check_branch
      %35 = sbr.rel (0) target = $region37
    $region36: #{seq2seq_encoder_forward.1} parent=1 // pred_region
      _
    $region37: #{seq2seq_encoder_forward.1} parent=1 // pred_fallthru
      _
    %v36 = vld [vmem:[%s0] sm:$0xff]
    %v37 = vld [vmem:[%s0 + $0x8] sm:$0xff]
    %v38 = vld [vmem:[%s0 + $0x10] sm:$0xff]
    %v39 = vld [vmem:[%s0 + $0x18] sm:$0xff]
    %v40 = vld [vmem:[%s0 + $0x20] sm:$0xff]
    %v41 = vld [vmem:[%s0 + $0x28] sm:$0xff]
    %v42 = vld [vmem:[%s0 + $0x30] sm:$0xff]
    %v43 = vld [vmem:[%s0 + $0x38] sm:$0xff]
    %v44 = vld [vmem:[%s1] sm:$0xff]
    %v45 = vld [vmem:[%s1 + $0x8] sm:$0xff]
    %v46 = vld [vmem:[%s1 + $0x10] sm:$0xff]
    %v47 = vld [vmem:[%s1 + $0x18] sm:$0xff]
    %v48 = vld [vmem:[%s1 + $0x20] sm:$0xff]
    %v49 = vld [vmem:[%s1 + $0x28] sm:$0xff]
    %v50 = vld [vmem:[%s1 + $0x30] sm:$0xff]
    %v51 = vld [vmem:[%s1 + $0x38] sm:$0xff]
    %v52 = vld [vmem:[%s1 + $0x40] sm:$0xff]
    %v53 = vld [vmem:[%s1 + $0x48] sm:$0xff]
    %v54 = vld [vmem:[%s1 + $0x50] sm:$0xff]
    %v55 = vld [vmem:[%s1 + $0x58] sm:$0xff]
    %v56 = vld [vmem:[%s3] sm:$0x7]
    %v58 = vlaneseq
    %v59 = vshrl.u32 %v58, 7
    %v60 = vsub.s32 0, %v59
    %v61 = vrot.slane %v56, %v60
    %v62 = vlaneseq
    %v63 = vshrl.u32 %v62, 7
    %v64 = vsub.s32 1, %v63
    %v65 = vrot.slane %v56, %v64
    %v66 = vlaneseq
    %v67 = vshrl.u32 %v66, 7
    %v68 = vsub.s32 2, %v67
    %v69 = vrot.slane %v56, %v68
    %vm73 = vcmask 261120
    %v75 = vsel %vm73, %v36, 0
    %v78 = vsel %vm73, %v37, 0
    %v81 = vsel %vm73, %v38, 0
    %v84 = vsel %vm73, %v39, 0
    %v87 = vsel %vm73, %v40, 0
    %v90 = vsel %vm73, %v41, 0
    %v93 = vsel %vm73, %v42, 0
    %v96 = vsel %vm73, %v43, 0
    %98 = vmatprep.subr.mxu0 0.0
    %99 = vmatpush1.msra.mxu0 0.0
    %100 = vmatprep.subr.mxu0 0.0
    %101 = vmatpush1.msra.mxu0 0.0
    %102 = vmatprep.subr.mxu0 0.0
    %103 = vmatpush1.msra.mxu0 0.0
    %104 = vmatprep.subr.mxu0 0.0
    %105 = vmatpush1.msra.mxu0 0.0
    %106 = vmatprep.subr.mxu0 0.0
    %107 = vmatpush1.msra.mxu0 0.0
    %108 = vmatprep.subr.mxu0 0.0
    %109 = vmatpush1.msra.mxu0 0.0
    %110 = vmatprep.subr.mxu0 0.0
    %111 = vmatpush1.msra.mxu0 0.0
    %112 = vmatprep.subr.mxu0 0.0
    %113 = vmatpush1.msra.mxu0 0.0
    %114 = vmatprep.subr.mxu0 0.0
    %115 = vmatpush1.msra.mxu0 0.0
    %116 = vmatprep.subr.mxu0 0.0
    %117 = vmatpush1.msra.mxu0 0.0
    %118 = vmatprep.subr.mxu0 0.0
    %119 = vmatpush1.msra.mxu0 0.0
    %120 = vmatprep.subr.mxu0 0.0
    %121 = vmatpush1.msra.mxu0 0.0
    %122 = vmatprep.subr.mxu0 %v54
    %123 = vmatpush1.msra.mxu0 %v53
    %124 = vmatprep.subr.mxu0 %v51
    %125 = vmatpush1.msra.mxu0 %v50
    %126 = vmatprep.subr.mxu0 %v48
    %127 = vmatpush1.msra.mxu0 %v47
    %128 = vmatprep.subr.mxu0 %v45
    %129 = vmatpush1.msra.mxu0 %v44
    %130 = vmatprep.subr.mxu0 0.0
    %131 = vmatpush2.msra.mxu0 0.0
    %132 = vmatprep.subr.mxu0 0.0
    %133 = vmatpush2.msra.mxu0 0.0
    %134 = vmatprep.subr.mxu0 0.0
    %135 = vmatpush2.msra.mxu0 0.0
    %136 = vmatprep.subr.mxu0 0.0
    %137 = vmatpush2.msra.mxu0 0.0
    %138 = vmatprep.subr.mxu0 0.0
    %139 = vmatpush2.msra.mxu0 0.0
    %140 = vmatprep.subr.mxu0 0.0
    %141 = vmatpush2.msra.mxu0 0.0
    %142 = vmatprep.subr.mxu0 0.0
    %143 = vmatpush2.msra.mxu0 0.0
    %144 = vmatprep.subr.mxu0 0.0
    %145 = vmatpush2.msra.mxu0 0.0
    %146 = vmatprep.subr.mxu0 0.0
    %147 = vmatpush2.msra.mxu0 0.0
    %148 = vmatprep.subr.mxu0 0.0
    %149 = vmatpush2.msra.mxu0 0.0
    %150 = vmatprep.subr.mxu0 0.0
    %151 = vmatpush2.msra.mxu0 0.0
    %152 = vmatprep.subr.mxu0 0.0
    %153 = vmatpush2.msra.mxu0 0.0
    %154 = vmatprep.subr.mxu0 0.0
    %155 = vmatpush2.msra.mxu0 0.0
    %156 = vmatprep.subr.mxu0 0.0
    %157 = vmatpush2.msra.mxu0 0.0
    %158 = vmatprep.subr.mxu0 0.0
    %159 = vmatpush2.msra.mxu0 0.0
    %160 = vmatprep.subr.mxu0 0.0
    %161 = vmatpush2.msra.mxu0 0.0
    %162 = vmatprep.mubr.f32.mxu0 0.0
    %163 = vmatmul.mubr.f32.gmra.mxu0 %v75
    %v164 = vpop.f32.mrf.mxu0
    %v165 = vadd.f32 %v61, %v164
    %v166 = vpop.f32.mrf.mxu0
    %v167 = vadd.f32 %v65, %v166
    %168 = vmatprep.mubr.f32.mxu0 0.0
    %169 = vmatmul.mubr.f32.gmra.mxu0 %v78
    %v170 = vpop.f32.mrf.mxu0
    %v171 = vadd.f32 %v61, %v170
    %v172 = vpop.f32.mrf.mxu0
    %v173 = vadd.f32 %v65, %v172
    %174 = vmatprep.mubr.f32.mxu0 0.0
    %175 = vmatmul.mubr.f32.gmra.mxu0 %v81
    %v176 = vpop.f32.mrf.mxu0
    %v177 = vadd.f32 %v61, %v176
    %v178 = vpop.f32.mrf.mxu0
    %v179 = vadd.f32 %v65, %v178
    %180 = vmatprep.mubr.f32.mxu0 0.0
    %181 = vmatmul.mubr.f32.gmra.mxu0 %v84
    %v182 = vpop.f32.mrf.mxu0
    %v183 = vadd.f32 %v61, %v182
    %v184 = vpop.f32.mrf.mxu0
    %v185 = vadd.f32 %v65, %v184
    %186 = vmatprep.mubr.f32.mxu0 0.0
    %187 = vmatmul.mubr.f32.gmra.mxu0 %v87
    %v188 = vpop.f32.mrf.mxu0
    %v189 = vadd.f32 %v61, %v188
    %v190 = vpop.f32.mrf.mxu0
    %v191 = vadd.f32 %v65, %v190
    %192 = vmatprep.mubr.f32.mxu0 0.0
    %193 = vmatmul.mubr.f32.gmra.mxu0 %v90
    %v194 = vpop.f32.mrf.mxu0
    %v195 = vadd.f32 %v61, %v194
    %v196 = vpop.f32.mrf.mxu0
    %v197 = vadd.f32 %v65, %v196
    %198 = vmatprep.mubr.f32.mxu0 0.0
    %199 = vmatmul.mubr.f32.gmra.mxu0 %v93
    %v200 = vpop.f32.mrf.mxu0
    %v201 = vadd.f32 %v61, %v200
    %v202 = vpop.f32.mrf.mxu0
    %v203 = vadd.f32 %v65, %v202
    %204 = vmatprep.mubr.f32.mxu0 0.0
    %205 = vmatmul.mubr.f32.gmra.mxu0 %v96
    %v206 = vpop.f32.mrf.mxu0
    %v207 = vadd.f32 %v61, %v206
    %v208 = vpop.f32.mrf.mxu0
    %v209 = vadd.f32 %v65, %v208
    %210 = vdwg.mxu0
    %211 = vmatprep.subr.mxu0 0.0
    %212 = vmatpush1.msra.mxu0 0.0
    %213 = vmatprep.subr.mxu0 0.0
    %214 = vmatpush1.msra.mxu0 0.0
    %215 = vmatprep.subr.mxu0 0.0
    %216 = vmatpush1.msra.mxu0 0.0
    %217 = vmatprep.subr.mxu0 0.0
    %218 = vmatpush1.msra.mxu0 0.0
    %219 = vmatprep.subr.mxu0 0.0
    %220 = vmatpush1.msra.mxu0 0.0
    %221 = vmatprep.subr.mxu0 0.0
    %222 = vmatpush1.msra.mxu0 0.0
    %223 = vmatprep.subr.mxu0 0.0
    %224 = vmatpush1.msra.mxu0 0.0
    %225 = vmatprep.subr.mxu0 0.0
    %226 = vmatpush1.msra.mxu0 0.0
    %227 = vmatprep.subr.mxu0 0.0
    %228 = vmatpush1.msra.mxu0 0.0
    %229 = vmatprep.subr.mxu0 0.0
    %230 = vmatpush1.msra.mxu0 0.0
    %231 = vmatprep.subr.mxu0 0.0
    %232 = vmatpush1.msra.mxu0 0.0
    %233 = vmatprep.subr.mxu0 0.0
    %234 = vmatpush1.msra.mxu0 0.0
    %235 = vmatprep.subr.mxu0 0.0
    %236 = vmatpush1.msra.mxu0 %v55
    %237 = vmatprep.subr.mxu0 0.0
    %238 = vmatpush1.msra.mxu0 %v52
    %239 = vmatprep.subr.mxu0 0.0
    %240 = vmatpush1.msra.mxu0 %v49
    %241 = vmatprep.subr.mxu0 0.0
    %242 = vmatpush1.msra.mxu0 %v46
    %243 = vmatprep.subr.mxu0 0.0
    %244 = vmatpush2.msra.mxu0 0.0
    %245 = vmatprep.subr.mxu0 0.0
    %246 = vmatpush2.msra.mxu0 0.0
    %247 = vmatprep.subr.mxu0 0.0
    %248 = vmatpush2.msra.mxu0 0.0
    %249 = vmatprep.subr.mxu0 0.0
    %250 = vmatpush2.msra.mxu0 0.0
    %251 = vmatprep.subr.mxu0 0.0
    %252 = vmatpush2.msra.mxu0 0.0
    %253 = vmatprep.subr.mxu0 0.0
    %254 = vmatpush2.msra.mxu0 0.0
    %255 = vmatprep.subr.mxu0 0.0
    %256 = vmatpush2.msra.mxu0 0.0
    %257 = vmatprep.subr.mxu0 0.0
    %258 = vmatpush2.msra.mxu0 0.0
    %259 = vmatprep.subr.mxu0 0.0
    %260 = vmatpush2.msra.mxu0 0.0
    %261 = vmatprep.subr.mxu0 0.0
    %262 = vmatpush2.msra.mxu0 0.0
    %263 = vmatprep.subr.mxu0 0.0
    %264 = vmatpush2.msra.mxu0 0.0
    %265 = vmatprep.subr.mxu0 0.0
    %266 = vmatpush2.msra.mxu0 0.0
    %267 = vmatprep.subr.mxu0 0.0
    %268 = vmatpush2.msra.mxu0 0.0
    %269 = vmatprep.subr.mxu0 0.0
    %270 = vmatpush2.msra.mxu0 0.0
    %271 = vmatprep.subr.mxu0 0.0
    %272 = vmatpush2.msra.mxu0 0.0
    %273 = vmatprep.subr.mxu0 0.0
    %274 = vmatpush2.msra.mxu0 0.0
    %275 = vmatprep.mubr.f32.mxu0 0.0
    %276 = vmatmul.mubr.f32.gmra.mxu0 %v75
    %v277 = vpop.f32.mrf.mxu0
    %v278 = vadd.f32 %v69, %v277
    %v279 = vpop.f32.mrf.mxu0
    %280 = vmatprep.mubr.f32.mxu0 0.0
    %281 = vmatmul.mubr.f32.gmra.mxu0 %v78
    %v282 = vpop.f32.mrf.mxu0
    %v283 = vadd.f32 %v69, %v282
    %v284 = vpop.f32.mrf.mxu0
    %285 = vmatprep.mubr.f32.mxu0 0.0
    %286 = vmatmul.mubr.f32.gmra.mxu0 %v81
    %v287 = vpop.f32.mrf.mxu0
    %v288 = vadd.f32 %v69, %v287
    %v289 = vpop.f32.mrf.mxu0
    %290 = vmatprep.mubr.f32.mxu0 0.0
    %291 = vmatmul.mubr.f32.gmra.mxu0 %v84
    %v292 = vpop.f32.mrf.mxu0
    %v293 = vadd.f32 %v69, %v292
    %v294 = vpop.f32.mrf.mxu0
    %295 = vmatprep.mubr.f32.mxu0 0.0
    %296 = vmatmul.mubr.f32.gmra.mxu0 %v87
    %v297 = vpop.f32.mrf.mxu0
    %v298 = vadd.f32 %v69, %v297
    %v299 = vpop.f32.mrf.mxu0
    %300 = vmatprep.mubr.f32.mxu0 0.0
    %301 = vmatmul.mubr.f32.gmra.mxu0 %v90
    %v302 = vpop.f32.mrf.mxu0
    %v303 = vadd.f32 %v69, %v302
    %v304 = vpop.f32.mrf.mxu0
    %305 = vmatprep.mubr.f32.mxu0 0.0
    %306 = vmatmul.mubr.f32.gmra.mxu0 %v93
    %v307 = vpop.f32.mrf.mxu0
    %v308 = vadd.f32 %v69, %v307
    %v309 = vpop.f32.mrf.mxu0
    %310 = vmatprep.mubr.f32.mxu0 0.0
    %311 = vmatmul.mubr.f32.gmra.mxu0 %v96
    %v312 = vpop.f32.mrf.mxu0
    %v313 = vadd.f32 %v69, %v312
    %v314 = vpop.f32.mrf.mxu0
    %315 = vdwg.mxu0
    %316 = vst [vmem:[#allocation2] sm:$0xff] %v165
    %317 = vst [vmem:[#allocation2 + $0x8] sm:$0xff] %v167
    %318 = vst [vmem:[#allocation2 + $0x10] sm:$0xff] %v278
    %319 = vst [vmem:[#allocation2 + $0x18] sm:$0xff] %v171
    %320 = vst [vmem:[#allocation2 + $0x20] sm:$0xff] %v173
    %321 = vst [vmem:[#allocation2 + $0x28] sm:$0xff] %v283
    %322 = vst [vmem:[#allocation2 + $0x30] sm:$0xff] %v177
    %323 = vst [vmem:[#allocation2 + $0x38] sm:$0xff] %v179
    %324 = vst [vmem:[#allocation2 + $0x40] sm:$0xff] %v288
    %325 = vst [vmem:[#allocation2 + $0x48] sm:$0xff] %v183
    %326 = vst [vmem:[#allocation2 + $0x50] sm:$0xff] %v185
    %327 = vst [vmem:[#allocation2 + $0x58] sm:$0xff] %v293
    %328 = vst [vmem:[#allocation2 + $0x60] sm:$0xff] %v189
    %329 = vst [vmem:[#allocation2 + $0x68] sm:$0xff] %v191
    %330 = vst [vmem:[#allocation2 + $0x70] sm:$0xff] %v298
    %331 = vst [vmem:[#allocation2 + $0x78] sm:$0xff] %v195
    %332 = vst [vmem:[#allocation2 + $0x80] sm:$0xff] %v197
    %333 = vst [vmem:[#allocation2 + $0x88] sm:$0xff] %v303
    %334 = vst [vmem:[#allocation2 + $0x90] sm:$0xff] %v201
    %335 = vst [vmem:[#allocation2 + $0x98] sm:$0xff] %v203
    %336 = vst [vmem:[#allocation2 + $0xa0] sm:$0xff] %v308
    %337 = vst [vmem:[#allocation2 + $0xa8] sm:$0xff] %v207
    %338 = vst [vmem:[#allocation2 + $0xb0] sm:$0xff] %v209
    %339 = vst [vmem:[#allocation2 + $0xb8] sm:$0xff] %v313
    %v340 = vld [vmem:[%s2] sm:$0xff]
    %v341 = vld [vmem:[%s2 + $0x8] sm:$0xff]
    %v342 = vld [vmem:[%s2 + $0x10] sm:$0xff]
    %v343 = vld [vmem:[%s2 + $0x18] sm:$0xff]
    %v344 = vld [vmem:[%s2 + $0x20] sm:$0xff]
    %v345 = vld [vmem:[%s2 + $0x28] sm:$0xff]
    %v346 = vld [vmem:[%s2 + $0x30] sm:$0xff]
    %v347 = vld [vmem:[%s2 + $0x38] sm:$0xff]
    %v348 = vld [vmem:[%s2 + $0x40] sm:$0xff]
    %v349 = vld [vmem:[%s2 + $0x48] sm:$0xff]
    %v350 = vld [vmem:[%s2 + $0x50] sm:$0xff]
    %v351 = vld [vmem:[%s2 + $0x58] sm:$0xff]
    %v352 = vld [vmem:[%s2 + $0x60] sm:$0xff]
    %v353 = vld [vmem:[%s2 + $0x68] sm:$0xff]
    %v354 = vld [vmem:[%s2 + $0x70] sm:$0xff]
    %v355 = vld [vmem:[%s2 + $0x78] sm:$0xff]
    %v356 = vld [vmem:[%s2 + $0x80] sm:$0xff]
    %v357 = vld [vmem:[%s2 + $0x88] sm:$0xff]
    %v358 = vld [vmem:[%s2 + $0x90] sm:$0xff]
    %v359 = vld [vmem:[%s2 + $0x98] sm:$0xff]
    %v360 = vld [vmem:[%s2 + $0xa0] sm:$0xff]
    %v361 = vld [vmem:[%s2 + $0xa8] sm:$0xff]
    %v362 = vld [vmem:[%s2 + $0xb0] sm:$0xff]
    %v363 = vld [vmem:[%s2 + $0xb8] sm:$0xff]
    %v364 = vld [vmem:[%s2 + $0xc0] sm:$0xff]
    %v365 = vld [vmem:[%s2 + $0xc8] sm:$0xff]
    %v366 = vld [vmem:[%s2 + $0xd0] sm:$0xff]
    %v367 = vld [vmem:[%s2 + $0xd8] sm:$0xff]
    %v368 = vld [vmem:[%s2 + $0xe0] sm:$0xff]
    %v369 = vld [vmem:[%s2 + $0xe8] sm:$0xff]
    %v370 = vld [vmem:[%s2 + $0xf0] sm:$0xff]
    %v371 = vld [vmem:[%s2 + $0xf8] sm:$0xff]
    %v372 = vld [vmem:[%s2 + $0x100] sm:$0xff]
    %v373 = vld [vmem:[%s2 + $0x108] sm:$0xff]
    %v374 = vld [vmem:[%s2 + $0x110] sm:$0xff]
    %v375 = vld [vmem:[%s2 + $0x118] sm:$0xff]
    %v376 = vld [vmem:[%s2 + $0x120] sm:$0xff]
    %v377 = vld [vmem:[%s2 + $0x128] sm:$0xff]
    %v378 = vld [vmem:[%s2 + $0x130] sm:$0xff]
    %v379 = vld [vmem:[%s2 + $0x138] sm:$0xff]
    %v380 = vld [vmem:[%s2 + $0x140] sm:$0xff]
    %v381 = vld [vmem:[%s2 + $0x148] sm:$0xff]
    %v382 = vld [vmem:[%s2 + $0x150] sm:$0xff]
    %v383 = vld [vmem:[%s2 + $0x158] sm:$0xff]
    %v384 = vld [vmem:[%s2 + $0x160] sm:$0xff]
    %v385 = vld [vmem:[%s2 + $0x168] sm:$0xff]
    %v386 = vld [vmem:[%s2 + $0x170] sm:$0xff]
    %v387 = vld [vmem:[%s2 + $0x178] sm:$0xff]
    %v388 = vld [vmem:[%s4] sm:$0x1]
    %v390 = vlaneseq
    %v391 = vshrl.u32 %v390, 7
    %v392 = vsub.s32 0, %v391
    %v393 = vrot.slane %v388, %v392
    %v395 = vld [vmem:[#allocation2] sm:$0xff]
    %v396 = vld [vmem:[#allocation2 + $0x8] sm:$0xff]
    %v397 = vld [vmem:[#allocation2 + $0x10] sm:$0xff]
    %398 = vmatprep.subr.mxu0 %v386
    %399 = vmatpush1.msra.mxu0 %v385
    %400 = vmatprep.subr.mxu0 %v383
    %401 = vmatpush1.msra.mxu0 %v382
    %402 = vmatprep.subr.mxu0 %v380
    %403 = vmatpush1.msra.mxu0 %v379
    %404 = vmatprep.subr.mxu0 %v377
    %405 = vmatpush1.msra.mxu0 %v376
    %406 = vmatprep.subr.mxu0 %v374
    %407 = vmatpush1.msra.mxu0 %v373
    %408 = vmatprep.subr.mxu0 %v371
    %409 = vmatpush1.msra.mxu0 %v370
    %410 = vmatprep.subr.mxu0 %v368
    %411 = vmatpush1.msra.mxu0 %v367
    %412 = vmatprep.subr.mxu0 %v365
    %413 = vmatpush1.msra.mxu0 %v364
    %414 = vmatprep.subr.mxu0 %v362
    %415 = vmatpush1.msra.mxu0 %v361
    %416 = vmatprep.subr.mxu0 %v359
    %417 = vmatpush1.msra.mxu0 %v358
    %418 = vmatprep.subr.mxu0 %v356
    %419 = vmatpush1.msra.mxu0 %v355
    %420 = vmatprep.subr.mxu0 %v353
    %421 = vmatpush1.msra.mxu0 %v352
    %422 = vmatprep.subr.mxu0 %v350
    %423 = vmatpush1.msra.mxu0 %v349
    %424 = vmatprep.subr.mxu0 %v347
    %425 = vmatpush1.msra.mxu0 %v346
    %426 = vmatprep.subr.mxu0 %v344
    %427 = vmatpush1.msra.mxu0 %v343
    %428 = vmatprep.subr.mxu0 %v341
    %429 = vmatpush1.msra.mxu0 %v340
    %430 = vmatprep.subr.mxu0 0.0
    %431 = vmatpush2.msra.mxu0 0.0
    %432 = vmatprep.subr.mxu0 0.0
    %433 = vmatpush2.msra.mxu0 0.0
    %434 = vmatprep.subr.mxu0 0.0
    %435 = vmatpush2.msra.mxu0 0.0
    %436 = vmatprep.subr.mxu0 0.0
    %437 = vmatpush2.msra.mxu0 0.0
    %438 = vmatprep.subr.mxu0 0.0
    %439 = vmatpush2.msra.mxu0 0.0
    %440 = vmatprep.subr.mxu0 0.0
    %441 = vmatpush2.msra.mxu0 0.0
    %442 = vmatprep.subr.mxu0 0.0
    %443 = vmatpush2.msra.mxu0 0.0
    %444 = vmatprep.subr.mxu0 0.0
    %445 = vmatpush2.msra.mxu0 0.0
    %446 = vmatprep.subr.mxu0 0.0
    %447 = vmatpush2.msra.mxu0 0.0
    %448 = vmatprep.subr.mxu0 0.0
    %449 = vmatpush2.msra.mxu0 0.0
    %450 = vmatprep.subr.mxu0 0.0
    %451 = vmatpush2.msra.mxu0 0.0
    %452 = vmatprep.subr.mxu0 0.0
    %453 = vmatpush2.msra.mxu0 0.0
    %454 = vmatprep.subr.mxu0 0.0
    %455 = vmatpush2.msra.mxu0 0.0
    %456 = vmatprep.subr.mxu0 0.0
    %457 = vmatpush2.msra.mxu0 0.0
    %458 = vmatprep.subr.mxu0 0.0
    %459 = vmatpush2.msra.mxu0 0.0
    %460 = vmatprep.subr.mxu0 0.0
    %461 = vmatpush2.msra.mxu0 0.0
    %462 = vmatprep.mubr.f32.mxu0 0.0
    %463 = vmatmul.mubr.f32.gmra.mxu0 0.0
    %v464 = vpop.f32.mrf.mxu0
    %v465 = vadd.f32 0.0, %v464
    %v466 = vpop.f32.mrf.mxu0
    %v467 = vadd.f32 0.0, %v466
    %468 = vdwg.mxu0
    %469 = vmatprep.subr.mxu0 0.0
    %470 = vmatpush1.msra.mxu0 %v387
    %471 = vmatprep.subr.mxu0 0.0
    %472 = vmatpush1.msra.mxu0 %v384
    %473 = vmatprep.subr.mxu0 0.0
    %474 = vmatpush1.msra.mxu0 %v381
    %475 = vmatprep.subr.mxu0 0.0
    %476 = vmatpush1.msra.mxu0 %v378
    %477 = vmatprep.subr.mxu0 0.0
    %478 = vmatpush1.msra.mxu0 %v375
    %479 = vmatprep.subr.mxu0 0.0
    %480 = vmatpush1.msra.mxu0 %v372
    %481 = vmatprep.subr.mxu0 0.0
    %482 = vmatpush1.msra.mxu0 %v369
    %483 = vmatprep.subr.mxu0 0.0
    %484 = vmatpush1.msra.mxu0 %v366
    %485 = vmatprep.subr.mxu0 0.0
    %486 = vmatpush1.msra.mxu0 %v363
    %487 = vmatprep.subr.mxu0 0.0
    %488 = vmatpush1.msra.mxu0 %v360
    %489 = vmatprep.subr.mxu0 0.0
    %490 = vmatpush1.msra.mxu0 %v357
    %491 = vmatprep.subr.mxu0 0.0
    %492 = vmatpush1.msra.mxu0 %v354
    %493 = vmatprep.subr.mxu0 0.0
    %494 = vmatpush1.msra.mxu0 %v351
    %495 = vmatprep.subr.mxu0 0.0
    %496 = vmatpush1.msra.mxu0 %v348
    %497 = vmatprep.subr.mxu0 0.0
    %498 = vmatpush1.msra.mxu0 %v345
    %499 = vmatprep.subr.mxu0 0.0
    %500 = vmatpush1.msra.mxu0 %v342
    %501 = vmatprep.subr.mxu0 0.0
    %502 = vmatpush2.msra.mxu0 0.0
    %503 = vmatprep.subr.mxu0 0.0
    %504 = vmatpush2.msra.mxu0 0.0
    %505 = vmatprep.subr.mxu0 0.0
    %506 = vmatpush2.msra.mxu0 0.0
    %507 = vmatprep.subr.mxu0 0.0
    %508 = vmatpush2.msra.mxu0 0.0
    %509 = vmatprep.subr.mxu0 0.0
    %510 = vmatpush2.msra.mxu0 0.0
    %511 = vmatprep.subr.mxu0 0.0
    %512 = vmatpush2.msra.mxu0 0.0
    %513 = vmatprep.subr.mxu0 0.0
    %514 = vmatpush2.msra.mxu0 0.0
    %515 = vmatprep.subr.mxu0 0.0
    %516 = vmatpush2.msra.mxu0 0.0
    %517 = vmatprep.subr.mxu0 0.0
    %518 = vmatpush2.msra.mxu0 0.0
    %519 = vmatprep.subr.mxu0 0.0
    %520 = vmatpush2.msra.mxu0 0.0
    %521 = vmatprep.subr.mxu0 0.0
    %522 = vmatpush2.msra.mxu0 0.0
    %523 = vmatprep.subr.mxu0 0.0
    %524 = vmatpush2.msra.mxu0 0.0
    %525 = vmatprep.subr.mxu0 0.0
    %526 = vmatpush2.msra.mxu0 0.0
    %527 = vmatprep.subr.mxu0 0.0
    %528 = vmatpush2.msra.mxu0 0.0
    %529 = vmatprep.subr.mxu0 0.0
    %530 = vmatpush2.msra.mxu0 0.0
    %531 = vmatprep.subr.mxu0 0.0
    %532 = vmatpush2.msra.mxu0 0.0
    %533 = vmatprep.mubr.f32.mxu0 0.0
    %534 = vmatmul.mubr.f32.gmra.mxu0 0.0
    %v535 = vpop.f32.mrf.mxu0
    %v536 = vadd.f32 0.0, %v535
    %v537 = vpop.f32.mrf.mxu0
    %538 = vdwg.mxu0
    %v539 = vadd.f32 %v395, %v465
    %v540 = vxor.u32 %v539, 2147483648
    %v541 = vmul.f32 %v540, 1.442695
    %v542 = vpow.pop %v541
    %v543 = vadd.f32 %v542, 1.0
    %v544 = vrcp.pop %v543
    %v545 = vmul.f32 1.0, %v544
    %v546 = vadd.f32 %v396, %v467
    %v547 = vxor.u32 %v546, 2147483648
    %v548 = vmul.f32 %v547, 1.442695
    %v549 = vpow.pop %v548
    %v550 = vadd.f32 %v549, 1.0
    %v551 = vrcp.pop %v550
    %v552 = vmul.f32 1.0, %v551
    %v553 = vadd.f32 %v536, %v393
    %v554 = vmul.f32 %v545, %v553
    %v555 = vadd.f32 %v397, %v554
    %v556 = vtanh.pop %v555
    %v557 = vsub.f32 1.0, %v552
    %v558 = vmul.f32 %v557, %v556
    %v559 = vmul.f32 %v552, 0.0
    %v560 = vadd.f32 %v558, %v559
    %561 = vst [vmem:[#allocation3] sm:$0xff] %v560
    %s562 = scalar_lea.vmem [#allocation2], 24
    %v563 = vld [vmem:[%s562] sm:$0xff]
    %v564 = vld [vmem:[%s562 + $0x8] sm:$0xff]
    %v565 = vld [vmem:[%s562 + $0x10] sm:$0xff]
    %566 = vmatprep.subr.mxu0 %v386
    %567 = vmatpush1.msra.mxu0 %v385
    %568 = vmatprep.subr.mxu0 %v383
    %569 = vmatpush1.msra.mxu0 %v382
    %570 = vmatprep.subr.mxu0 %v380
    %571 = vmatpush1.msra.mxu0 %v379
    %572 = vmatprep.subr.mxu0 %v377
    %573 = vmatpush1.msra.mxu0 %v376
    %574 = vmatprep.subr.mxu0 %v374
    %575 = vmatpush1.msra.mxu0 %v373
    %576 = vmatprep.subr.mxu0 %v371
    %577 = vmatpush1.msra.mxu0 %v370
    %578 = vmatprep.subr.mxu0 %v368
    %579 = vmatpush1.msra.mxu0 %v367
    %580 = vmatprep.subr.mxu0 %v365
    %581 = vmatpush1.msra.mxu0 %v364
    %582 = vmatprep.subr.mxu0 %v362
    %583 = vmatpush1.msra.mxu0 %v361
    %584 = vmatprep.subr.mxu0 %v359
    %585 = vmatpush1.msra.mxu0 %v358
    %586 = vmatprep.subr.mxu0 %v356
    %587 = vmatpush1.msra.mxu0 %v355
    %588 = vmatprep.subr.mxu0 %v353
    %589 = vmatpush1.msra.mxu0 %v352
    %590 = vmatprep.subr.mxu0 %v350
    %591 = vmatpush1.msra.mxu0 %v349
    %592 = vmatprep.subr.mxu0 %v347
    %593 = vmatpush1.msra.mxu0 %v346
    %594 = vmatprep.subr.mxu0 %v344
    %595 = vmatpush1.msra.mxu0 %v343
    %596 = vmatprep.subr.mxu0 %v341
    %597 = vmatpush1.msra.mxu0 %v340
    %598 = vmatprep.subr.mxu0 0.0
    %599 = vmatpush2.msra.mxu0 0.0
    %600 = vmatprep.subr.mxu0 0.0
    %601 = vmatpush2.msra.mxu0 0.0
    %602 = vmatprep.subr.mxu0 0.0
    %603 = vmatpush2.msra.mxu0 0.0
    %604 = vmatprep.subr.mxu0 0.0
    %605 = vmatpush2.msra.mxu0 0.0
    %606 = vmatprep.subr.mxu0 0.0
    %607 = vmatpush2.msra.mxu0 0.0
    %608 = vmatprep.subr.mxu0 0.0
    %609 = vmatpush2.msra.mxu0 0.0
    %610 = vmatprep.subr.mxu0 0.0
    %611 = vmatpush2.msra.mxu0 0.0
    %612 = vmatprep.subr.mxu0 0.0
    %613 = vmatpush2.msra.mxu0 0.0
    %614 = vmatprep.subr.mxu0 0.0
    %615 = vmatpush2.msra.mxu0 0.0
    %616 = vmatprep.subr.mxu0 0.0
    %617 = vmatpush2.msra.mxu0 0.0
    %618 = vmatprep.subr.mxu0 0.0
    %619 = vmatpush2.msra.mxu0 0.0
    %620 = vmatprep.subr.mxu0 0.0
    %621 = vmatpush2.msra.mxu0 0.0
    %622 = vmatprep.subr.mxu0 0.0
    %623 = vmatpush2.msra.mxu0 0.0
    %624 = vmatprep.subr.mxu0 0.0
    %625 = vmatpush2.msra.mxu0 0.0
    %626 = vmatprep.subr.mxu0 0.0
    %627 = vmatpush2.msra.mxu0 0.0
    %628 = vmatprep.subr.mxu0 0.0
    %629 = vmatpush2.msra.mxu0 0.0
    %630 = vmatprep.mubr.f32.mxu0 0.0
    %631 = vmatmul.mubr.f32.gmra.mxu0 %v560
    %v632 = vpop.f32.mrf.mxu0
    %v633 = vadd.f32 0.0, %v632
    %v634 = vpop.f32.mrf.mxu0
    %v635 = vadd.f32 0.0, %v634
    %636 = vdwg.mxu0
    %637 = vmatprep.subr.mxu0 0.0
    %638 = vmatpush1.msra.mxu0 %v387
    %639 = vmatprep.subr.mxu0 0.0
    %640 = vmatpush1.msra.mxu0 %v384
    %641 = vmatprep.subr.mxu0 0.0
    %642 = vmatpush1.msra.mxu0 %v381
    %643 = vmatprep.subr.mxu0 0.0
    %644 = vmatpush1.msra.mxu0 %v378
    %645 = vmatprep.subr.mxu0 0.0
    %646 = vmatpush1.msra.mxu0 %v375
    %647 = vmatprep.subr.mxu0 0.0
    %648 = vmatpush1.msra.mxu0 %v372
    %649 = vmatprep.subr.mxu0 0.0
    %650 = vmatpush1.msra.mxu0 %v369
    %651 = vmatprep.subr.mxu0 0.0
    %652 = vmatpush1.msra.mxu0 %v366
    %653 = vmatprep.subr.mxu0 0.0
    %654 = vmatpush1.msra.mxu0 %v363
    %655 = vmatprep.subr.mxu0 0.0
    %656 = vmatpush1.msra.mxu0 %v360
    %657 = vmatprep.subr.mxu0 0.0
    %658 = vmatpush1.msra.mxu0 %v357
    %659 = vmatprep.subr.mxu0 0.0
    %660 = vmatpush1.msra.mxu0 %v354
    %661 = vmatprep.subr.mxu0 0.0
    %662 = vmatpush1.msra.mxu0 %v351
    %663 = vmatprep.subr.mxu0 0.0
    %664 = vmatpush1.msra.mxu0 %v348
    %665 = vmatprep.subr.mxu0 0.0
    %666 = vmatpush1.msra.mxu0 %v345
    %667 = vmatprep.subr.mxu0 0.0
    %668 = vmatpush1.msra.mxu0 %v342
    %669 = vmatprep.subr.mxu0 0.0
    %670 = vmatpush2.msra.mxu0 0.0
    %671 = vmatprep.subr.mxu0 0.0
    %672 = vmatpush2.msra.mxu0 0.0
    %673 = vmatprep.subr.mxu0 0.0
    %674 = vmatpush2.msra.mxu0 0.0
    %675 = vmatprep.subr.mxu0 0.0
    %676 = vmatpush2.msra.mxu0 0.0
    %677 = vmatprep.subr.mxu0 0.0
    %678 = vmatpush2.msra.mxu0 0.0
    %679 = vmatprep.subr.mxu0 0.0
    %680 = vmatpush2.msra.mxu0 0.0
    %681 = vmatprep.subr.mxu0 0.0
    %682 = vmatpush2.msra.mxu0 0.0
    %683 = vmatprep.subr.mxu0 0.0
    %684 = vmatpush2.msra.mxu0 0.0
    %685 = vmatprep.subr.mxu0 0.0
    %686 = vmatpush2.msra.mxu0 0.0
    %687 = vmatprep.subr.mxu0 0.0
    %688 = vmatpush2.msra.mxu0 0.0
    %689 = vmatprep.subr.mxu0 0.0
    %690 = vmatpush2.msra.mxu0 0.0
    %691 = vmatprep.subr.mxu0 0.0
    %692 = vmatpush2.msra.mxu0 0.0
    %693 = vmatprep.subr.mxu0 0.0
    %694 = vmatpush2.msra.mxu0 0.0
    %695 = vmatprep.subr.mxu0 0.0
    %696 = vmatpush2.msra.mxu0 0.0
    %697 = vmatprep.subr.mxu0 0.0
    %698 = vmatpush2.msra.mxu0 0.0
    %699 = vmatprep.subr.mxu0 0.0
    %700 = vmatpush2.msra.mxu0 0.0
    %701 = vmatprep.mubr.f32.mxu0 0.0
    %702 = vmatmul.mubr.f32.gmra.mxu0 %v560
    %v703 = vpop.f32.mrf.mxu0
    %v704 = vadd.f32 0.0, %v703
    %v705 = vpop.f32.mrf.mxu0
    %706 = vdwg.mxu0
    %v707 = vadd.f32 %v563, %v633
    %v708 = vxor.u32 %v707, 2147483648
    %v709 = vmul.f32 %v708, 1.442695
    %v710 = vpow.pop %v709
    %v711 = vadd.f32 %v710, 1.0
    %v712 = vrcp.pop %v711
    %v713 = vmul.f32 1.0, %v712
    %v714 = vadd.f32 %v564, %v635
    %v715 = vxor.u32 %v714, 2147483648
    %v716 = vmul.f32 %v715, 1.442695
    %v717 = vpow.pop %v716
    %v718 = vadd.f32 %v717, 1.0
    %v719 = vrcp.pop %v718
    %v720 = vmul.f32 1.0, %v719
    %v721 = vadd.f32 %v704, %v393
    %v722 = vmul.f32 %v713, %v721
    %v723 = vadd.f32 %v565, %v722
    %v724 = vtanh.pop %v723
    %v725 = vsub.f32 1.0, %v720
    %v726 = vmul.f32 %v725, %v724
    %v727 = vmul.f32 %v720, %v560
    %v728 = vadd.f32 %v726, %v727
    %s729 = scalar_lea.vmem [#allocation3], 8
    %730 = vst [vmem:[%s729] sm:$0xff] %v728
    %s731 = scalar_lea.vmem [#allocation2], 48
    %v732 = vld [vmem:[%s731] sm:$0xff]
    %v733 = vld [vmem:[%s731 + $0x8] sm:$0xff]
    %v734 = vld [vmem:[%s731 + $0x10] sm:$0xff]
    %735 = vmatprep.subr.mxu0 %v386
    %736 = vmatpush1.msra.mxu0 %v385
    %737 = vmatprep.subr.mxu0 %v383
    %738 = vmatpush1.msra.mxu0 %v382
    %739 = vmatprep.subr.mxu0 %v380
    %740 = vmatpush1.msra.mxu0 %v379
    %741 = vmatprep.subr.mxu0 %v377
    %742 = vmatpush1.msra.mxu0 %v376
    %743 = vmatprep.subr.mxu0 %v374
    %744 = vmatpush1.msra.mxu0 %v373
    %745 = vmatprep.subr.mxu0 %v371
    %746 = vmatpush1.msra.mxu0 %v370
    %747 = vmatprep.subr.mxu0 %v368
    %748 = vmatpush1.msra.mxu0 %v367
    %749 = vmatprep.subr.mxu0 %v365
    %750 = vmatpush1.msra.mxu0 %v364
    %751 = vmatprep.subr.mxu0 %v362
    %752 = vmatpush1.msra.mxu0 %v361
    %753 = vmatprep.subr.mxu0 %v359
    %754 = vmatpush1.msra.mxu0 %v358
    %755 = vmatprep.subr.mxu0 %v356
    %756 = vmatpush1.msra.mxu0 %v355
    %757 = vmatprep.subr.mxu0 %v353
    %758 = vmatpush1.msra.mxu0 %v352
    %759 = vmatprep.subr.mxu0 %v350
    %760 = vmatpush1.msra.mxu0 %v349
    %761 = vmatprep.subr.mxu0 %v347
    %762 = vmatpush1.msra.mxu0 %v346
    %763 = vmatprep.subr.mxu0 %v344
    %764 = vmatpush1.msra.mxu0 %v343
    %765 = vmatprep.subr.mxu0 %v341
    %766 = vmatpush1.msra.mxu0 %v340
    %767 = vmatprep.subr.mxu0 0.0
    %768 = vmatpush2.msra.mxu0 0.0
    %769 = vmatprep.subr.mxu0 0.0
    %770 = vmatpush2.msra.mxu0 0.0
    %771 = vmatprep.subr.mxu0 0.0
    %772 = vmatpush2.msra.mxu0 0.0
    %773 = vmatprep.subr.mxu0 0.0
    %774 = vmatpush2.msra.mxu0 0.0
    %775 = vmatprep.subr.mxu0 0.0
    %776 = vmatpush2.msra.mxu0 0.0
    %777 = vmatprep.subr.mxu0 0.0
    %778 = vmatpush2.msra.mxu0 0.0
    %779 = vmatprep.subr.mxu0 0.0
    %780 = vmatpush2.msra.mxu0 0.0
    %781 = vmatprep.subr.mxu0 0.0
    %782 = vmatpush2.msra.mxu0 0.0
    %783 = vmatprep.subr.mxu0 0.0
    %784 = vmatpush2.msra.mxu0 0.0
    %785 = vmatprep.subr.mxu0 0.0
    %786 = vmatpush2.msra.mxu0 0.0
    %787 = vmatprep.subr.mxu0 0.0
    %788 = vmatpush2.msra.mxu0 0.0
    %789 = vmatprep.subr.mxu0 0.0
    %790 = vmatpush2.msra.mxu0 0.0
    %791 = vmatprep.subr.mxu0 0.0
    %792 = vmatpush2.msra.mxu0 0.0
    %793 = vmatprep.subr.mxu0 0.0
    %794 = vmatpush2.msra.mxu0 0.0
    %795 = vmatprep.subr.mxu0 0.0
    %796 = vmatpush2.msra.mxu0 0.0
    %797 = vmatprep.subr.mxu0 0.0
    %798 = vmatpush2.msra.mxu0 0.0
    %799 = vmatprep.mubr.f32.mxu0 0.0
    %800 = vmatmul.mubr.f32.gmra.mxu0 %v728
    %v801 = vpop.f32.mrf.mxu0
    %v802 = vadd.f32 0.0, %v801
    %v803 = vpop.f32.mrf.mxu0
    %v804 = vadd.f32 0.0, %v803
    %805 = vdwg.mxu0
    %806 = vmatprep.subr.mxu0 0.0
    %807 = vmatpush1.msra.mxu0 %v387
    %808 = vmatprep.subr.mxu0 0.0
    %809 = vmatpush1.msra.mxu0 %v384
    %810 = vmatprep.subr.mxu0 0.0
    %811 = vmatpush1.msra.mxu0 %v381
    %812 = vmatprep.subr.mxu0 0.0
    %813 = vmatpush1.msra.mxu0 %v378
    %814 = vmatprep.subr.mxu0 0.0
    %815 = vmatpush1.msra.mxu0 %v375
    %816 = vmatprep.subr.mxu0 0.0
    %817 = vmatpush1.msra.mxu0 %v372
    %818 = vmatprep.subr.mxu0 0.0
    %819 = vmatpush1.msra.mxu0 %v369
    %820 = vmatprep.subr.mxu0 0.0
    %821 = vmatpush1.msra.mxu0 %v366
    %822 = vmatprep.subr.mxu0 0.0
    %823 = vmatpush1.msra.mxu0 %v363
    %824 = vmatprep.subr.mxu0 0.0
    %825 = vmatpush1.msra.mxu0 %v360
    %826 = vmatprep.subr.mxu0 0.0
    %827 = vmatpush1.msra.mxu0 %v357
    %828 = vmatprep.subr.mxu0 0.0
    %829 = vmatpush1.msra.mxu0 %v354
    %830 = vmatprep.subr.mxu0 0.0
    %831 = vmatpush1.msra.mxu0 %v351
    %832 = vmatprep.subr.mxu0 0.0
    %833 = vmatpush1.msra.mxu0 %v348
    %834 = vmatprep.subr.mxu0 0.0
    %835 = vmatpush1.msra.mxu0 %v345
    %836 = vmatprep.subr.mxu0 0.0
    %837 = vmatpush1.msra.mxu0 %v342
    %838 = vmatprep.subr.mxu0 0.0
    %839 = vmatpush2.msra.mxu0 0.0
    %840 = vmatprep.subr.mxu0 0.0
    %841 = vmatpush2.msra.mxu0 0.0
    %842 = vmatprep.subr.mxu0 0.0
    %843 = vmatpush2.msra.mxu0 0.0
    %844 = vmatprep.subr.mxu0 0.0
    %845 = vmatpush2.msra.mxu0 0.0
    %846 = vmatprep.subr.mxu0 0.0
    %847 = vmatpush2.msra.mxu0 0.0
    %848 = vmatprep.subr.mxu0 0.0
    %849 = vmatpush2.msra.mxu0 0.0
    %850 = vmatprep.subr.mxu0 0.0
    %851 = vmatpush2.msra.mxu0 0.0
    %852 = vmatprep.subr.mxu0 0.0
    %853 = vmatpush2.msra.mxu0 0.0
    %854 = vmatprep.subr.mxu0 0.0
    %855 = vmatpush2.msra.mxu0 0.0
    %856 = vmatprep.subr.mxu0 0.0
    %857 = vmatpush2.msra.mxu0 0.0
    %858 = vmatprep.subr.mxu0 0.0
    %859 = vmatpush2.msra.mxu0 0.0
    %860 = vmatprep.subr.mxu0 0.0
    %861 = vmatpush2.msra.mxu0 0.0
    %862 = vmatprep.subr.mxu0 0.0
    %863 = vmatpush2.msra.mxu0 0.0
    %864 = vmatprep.subr.mxu0 0.0
    %865 = vmatpush2.msra.mxu0 0.0
    %866 = vmatprep.subr.mxu0 0.0
    %867 = vmatpush2.msra.mxu0 0.0
    %868 = vmatprep.subr.mxu0 0.0
    %869 = vmatpush2.msra.mxu0 0.0
    %870 = vmatprep.mubr.f32.mxu0 0.0
    %871 = vmatmul.mubr.f32.gmra.mxu0 %v728
    %v872 = vpop.f32.mrf.mxu0
    %v873 = vadd.f32 0.0, %v872
    %v874 = vpop.f32.mrf.mxu0
    %875 = vdwg.mxu0
    %v876 = vadd.f32 %v732, %v802
    %v877 = vxor.u32 %v876, 2147483648
    %v878 = vmul.f32 %v877, 1.442695
    %v879 = vpow.pop %v878
    %v880 = vadd.f32 %v879, 1.0
    %v881 = vrcp.pop %v880
    %v882 = vmul.f32 1.0, %v881
    %v883 = vadd.f32 %v733, %v804
    %v884 = vxor.u32 %v883, 2147483648
    %v885 = vmul.f32 %v884, 1.442695
    %v886 = vpow.pop %v885
    %v887 = vadd.f32 %v886, 1.0
    %v888 = vrcp.pop %v887
    %v889 = vmul.f32 1.0, %v888
    %v890 = vadd.f32 %v873, %v393
    %v891 = vmul.f32 %v882, %v890
    %v892 = vadd.f32 %v734, %v891
    %v893 = vtanh.pop %v892
    %v894 = vsub.f32 1.0, %v889
    %v895 = vmul.f32 %v894, %v893
    %v896 = vmul.f32 %v889, %v728
    %v897 = vadd.f32 %v895, %v896
    %s898 = scalar_lea.vmem [#allocation3], 16
    %899 = vst [vmem:[%s898] sm:$0xff] %v897
    %s900 = scalar_lea.vmem [#allocation2], 72
    %v901 = vld [vmem:[%s900] sm:$0xff]
    %v902 = vld [vmem:[%s900 + $0x8] sm:$0xff]
    %v903 = vld [vmem:[%s900 + $0x10] sm:$0xff]
    %904 = vmatprep.subr.mxu0 %v386
    %905 = vmatpush1.msra.mxu0 %v385
    %906 = vmatprep.subr.mxu0 %v383
    %907 = vmatpush1.msra.mxu0 %v382
    %908 = vmatprep.subr.mxu0 %v380
    %909 = vmatpush1.msra.mxu0 %v379
    %910 = vmatprep.subr.mxu0 %v377
    %911 = vmatpush1.msra.mxu0 %v376
    %912 = vmatprep.subr.mxu0 %v374
    %913 = vmatpush1.msra.mxu0 %v373
    %914 = vmatprep.subr.mxu0 %v371
    %915 = vmatpush1.msra.mxu0 %v370
    %916 = vmatprep.subr.mxu0 %v368
    %917 = vmatpush1.msra.mxu0 %v367
    %918 = vmatprep.subr.mxu0 %v365
    %919 = vmatpush1.msra.mxu0 %v364
    %920 = vmatprep.subr.mxu0 %v362
    %921 = vmatpush1.msra.mxu0 %v361
    %922 = vmatprep.subr.mxu0 %v359
    %923 = vmatpush1.msra.mxu0 %v358
    %924 = vmatprep.subr.mxu0 %v356
    %925 = vmatpush1.msra.mxu0 %v355
    %926 = vmatprep.subr.mxu0 %v353
    %927 = vmatpush1.msra.mxu0 %v352
    %928 = vmatprep.subr.mxu0 %v350
    %929 = vmatpush1.msra.mxu0 %v349
    %930 = vmatprep.subr.mxu0 %v347
    %931 = vmatpush1.msra.mxu0 %v346
    %932 = vmatprep.subr.mxu0 %v344
    %933 = vmatpush1.msra.mxu0 %v343
    %934 = vmatprep.subr.mxu0 %v341
    %935 = vmatpush1.msra.mxu0 %v340
    %936 = vmatprep.subr.mxu0 0.0
    %937 = vmatpush2.msra.mxu0 0.0
    %938 = vmatprep.subr.mxu0 0.0
    %939 = vmatpush2.msra.mxu0 0.0
    %940 = vmatprep.subr.mxu0 0.0
    %941 = vmatpush2.msra.mxu0 0.0
    %942 = vmatprep.subr.mxu0 0.0
    %943 = vmatpush2.msra.mxu0 0.0
    %944 = vmatprep.subr.mxu0 0.0
    %945 = vmatpush2.msra.mxu0 0.0
    %946 = vmatprep.subr.mxu0 0.0
    %947 = vmatpush2.msra.mxu0 0.0
    %948 = vmatprep.subr.mxu0 0.0
    %949 = vmatpush2.msra.mxu0 0.0
    %950 = vmatprep.subr.mxu0 0.0
    %951 = vmatpush2.msra.mxu0 0.0
    %952 = vmatprep.subr.mxu0 0.0
    %953 = vmatpush2.msra.mxu0 0.0
    %954 = vmatprep.subr.mxu0 0.0
    %955 = vmatpush2.msra.mxu0 0.0
    %956 = vmatprep.subr.mxu0 0.0
    %957 = vmatpush2.msra.mxu0 0.0
    %958 = vmatprep.subr.mxu0 0.0
    %959 = vmatpush2.msra.mxu0 0.0
    %960 = vmatprep.subr.mxu0 0.0
    %961 = vmatpush2.msra.mxu0 0.0
    %962 = vmatprep.subr.mxu0 0.0
    %963 = vmatpush2.msra.mxu0 0.0
    %964 = vmatprep.subr.mxu0 0.0
    %965 = vmatpush2.msra.mxu0 0.0
    %966 = vmatprep.subr.mxu0 0.0
    %967 = vmatpush2.msra.mxu0 0.0
    %968 = vmatprep.mubr.f32.mxu0 0.0
    %969 = vmatmul.mubr.f32.gmra.mxu0 %v897
    %v970 = vpop.f32.mrf.mxu0
    %v971 = vadd.f32 0.0, %v970
    %v972 = vpop.f32.mrf.mxu0
    %v973 = vadd.f32 0.0, %v972
    %974 = vdwg.mxu0
    %975 = vmatprep.subr.mxu0 0.0
    %976 = vmatpush1.msra.mxu0 %v387
    %977 = vmatprep.subr.mxu0 0.0
    %978 = vmatpush1.msra.mxu0 %v384
    %979 = vmatprep.subr.mxu0 0.0
    %980 = vmatpush1.msra.mxu0 %v381
    %981 = vmatprep.subr.mxu0 0.0
    %982 = vmatpush1.msra.mxu0 %v378
    %983 = vmatprep.subr.mxu0 0.0
    %984 = vmatpush1.msra.mxu0 %v375
    %985 = vmatprep.subr.mxu0 0.0
    %986 = vmatpush1.msra.mxu0 %v372
    %987 = vmatprep.subr.mxu0 0.0
    %988 = vmatpush1.msra.mxu0 %v369
    %989 = vmatprep.subr.mxu0 0.0
    %990 = vmatpush1.msra.mxu0 %v366
    %991 = vmatprep.subr.mxu0 0.0
    %992 = vmatpush1.msra.mxu0 %v363
    %993 = vmatprep.subr.mxu0 0.0
    %994 = vmatpush1.msra.mxu0 %v360
    %995 = vmatprep.subr.mxu0 0.0
    %996 = vmatpush1.msra.mxu0 %v357
    %997 = vmatprep.subr.mxu0 0.0
    %998 = vmatpush1.msra.mxu0 %v354
    %999 = vmatprep.subr.mxu0 0.0
    %1000 = vmatpush1.msra.mxu0 %v351
    %1001 = vmatprep.subr.mxu0 0.0
    %1002 = vmatpush1.msra.mxu0 %v348
    %1003 = vmatprep.subr.mxu0 0.0
    %1004 = vmatpush1.msra.mxu0 %v345
    %1005 = vmatprep.subr.mxu0 0.0
    %1006 = vmatpush1.msra.mxu0 %v342
    %1007 = vmatprep.subr.mxu0 0.0
    %1008 = vmatpush2.msra.mxu0 0.0
    %1009 = vmatprep.subr.mxu0 0.0
    %1010 = vmatpush2.msra.mxu0 0.0
    %1011 = vmatprep.subr.mxu0 0.0
    %1012 = vmatpush2.msra.mxu0 0.0
    %1013 = vmatprep.subr.mxu0 0.0
    %1014 = vmatpush2.msra.mxu0 0.0
    %1015 = vmatprep.subr.mxu0 0.0
    %1016 = vmatpush2.msra.mxu0 0.0
    %1017 = vmatprep.subr.mxu0 0.0
    %1018 = vmatpush2.msra.mxu0 0.0
    %1019 = vmatprep.subr.mxu0 0.0
    %1020 = vmatpush2.msra.mxu0 0.0
    %1021 = vmatprep.subr.mxu0 0.0
    %1022 = vmatpush2.msra.mxu0 0.0
    %1023 = vmatprep.subr.mxu0 0.0
    %1024 = vmatpush2.msra.mxu0 0.0
    %1025 = vmatprep.subr.mxu0 0.0
    %1026 = vmatpush2.msra.mxu0 0.0
    %1027 = vmatprep.subr.mxu0 0.0
    %1028 = vmatpush2.msra.mxu0 0.0
    %1029 = vmatprep.subr.mxu0 0.0
    %1030 = vmatpush2.msra.mxu0 0.0
    %1031 = vmatprep.subr.mxu0 0.0
    %1032 = vmatpush2.msra.mxu0 0.0
    %1033 = vmatprep.subr.mxu0 0.0
    %1034 = vmatpush2.msra.mxu0 0.0
    %1035 = vmatprep.subr.mxu0 0.0
    %1036 = vmatpush2.msra.mxu0 0.0
    %1037 = vmatprep.subr.mxu0 0.0
    %1038 = vmatpush2.msra.mxu0 0.0
    %1039 = vmatprep.mubr.f32.mxu0 0.0
    %1040 = vmatmul.mubr.f32.gmra.mxu0 %v897
    %v1041 = vpop.f32.mrf.mxu0
    %v1042 = vadd.f32 0.0, %v1041
    %v1043 = vpop.f32.mrf.mxu0
    %1044 = vdwg.mxu0
    %v1045 = vadd.f32 %v901, %v971
    %v1046 = vxor.u32 %v1045, 2147483648
    %v1047 = vmul.f32 %v1046, 1.442695
    %v1048 = vpow.pop %v1047
    %v1049 = vadd.f32 %v1048, 1.0
    %v1050 = vrcp.pop %v1049
    %v1051 = vmul.f32 1.0, %v1050
    %v1052 = vadd.f32 %v902, %v973
    %v1053 = vxor.u32 %v1052, 2147483648
    %v1054 = vmul.f32 %v1053, 1.442695
    %v1055 = vpow.pop %v1054
    %v1056 = vadd.f32 %v1055, 1.0
    %v1057 = vrcp.pop %v1056
    %v1058 = vmul.f32 1.0, %v1057
    %v1059 = vadd.f32 %v1042, %v393
    %v1060 = vmul.f32 %v1051, %v1059
    %v1061 = vadd.f32 %v903, %v1060
    %v1062 = vtanh.pop %v1061
    %v1063 = vsub.f32 1.0, %v1058
    %v1064 = vmul.f32 %v1063, %v1062
    %v1065 = vmul.f32 %v1058, %v897
    %v1066 = vadd.f32 %v1064, %v1065
    %s1067 = scalar_lea.vmem [#allocation3], 24
    %1068 = vst [vmem:[%s1067] sm:$0xff] %v1066
    %s1069 = scalar_lea.vmem [#allocation2], 96
    %v1070 = vld [vmem:[%s1069] sm:$0xff]
    %v1071 = vld [vmem:[%s1069 + $0x8] sm:$0xff]
    %v1072 = vld [vmem:[%s1069 + $0x10] sm:$0xff]
    %1073 = vmatprep.subr.mxu0 %v386
    %1074 = vmatpush1.msra.mxu0 %v385
    %1075 = vmatprep.subr.mxu0 %v383
    %1076 = vmatpush1.msra.mxu0 %v382
    %1077 = vmatprep.subr.mxu0 %v380
    %1078 = vmatpush1.msra.mxu0 %v379
    %1079 = vmatprep.subr.mxu0 %v377
    %1080 = vmatpush1.msra.mxu0 %v376
    %1081 = vmatprep.subr.mxu0 %v374
    %1082 = vmatpush1.msra.mxu0 %v373
    %1083 = vmatprep.subr.mxu0 %v371
    %1084 = vmatpush1.msra.mxu0 %v370
    %1085 = vmatprep.subr.mxu0 %v368
    %1086 = vmatpush1.msra.mxu0 %v367
    %1087 = vmatprep.subr.mxu0 %v365
    %1088 = vmatpush1.msra.mxu0 %v364
    %1089 = vmatprep.subr.mxu0 %v362
    %1090 = vmatpush1.msra.mxu0 %v361
    %1091 = vmatprep.subr.mxu0 %v359
    %1092 = vmatpush1.msra.mxu0 %v358
    %1093 = vmatprep.subr.mxu0 %v356
    %1094 = vmatpush1.msra.mxu0 %v355
    %1095 = vmatprep.subr.mxu0 %v353
    %1096 = vmatpush1.msra.mxu0 %v352
    %1097 = vmatprep.subr.mxu0 %v350
    %1098 = vmatpush1.msra.mxu0 %v349
    %1099 = vmatprep.subr.mxu0 %v347
    %1100 = vmatpush1.msra.mxu0 %v346
    %1101 = vmatprep.subr.mxu0 %v344
    %1102 = vmatpush1.msra.mxu0 %v343
    %1103 = vmatprep.subr.mxu0 %v341
    %1104 = vmatpush1.msra.mxu0 %v340
    %1105 = vmatprep.subr.mxu0 0.0
    %1106 = vmatpush2.msra.mxu0 0.0
    %1107 = vmatprep.subr.mxu0 0.0
    %1108 = vmatpush2.msra.mxu0 0.0
    %1109 = vmatprep.subr.mxu0 0.0
    %1110 = vmatpush2.msra.mxu0 0.0
    %1111 = vmatprep.subr.mxu0 0.0
    %1112 = vmatpush2.msra.mxu0 0.0
    %1113 = vmatprep.subr.mxu0 0.0
    %1114 = vmatpush2.msra.mxu0 0.0
    %1115 = vmatprep.subr.mxu0 0.0
    %1116 = vmatpush2.msra.mxu0 0.0
    %1117 = vmatprep.subr.mxu0 0.0
    %1118 = vmatpush2.msra.mxu0 0.0
    %1119 = vmatprep.subr.mxu0 0.0
    %1120 = vmatpush2.msra.mxu0 0.0
    %1121 = vmatprep.subr.mxu0 0.0
    %1122 = vmatpush2.msra.mxu0 0.0
    %1123 = vmatprep.subr.mxu0 0.0
    %1124 = vmatpush2.msra.mxu0 0.0
    %1125 = vmatprep.subr.mxu0 0.0
    %1126 = vmatpush2.msra.mxu0 0.0
    %1127 = vmatprep.subr.mxu0 0.0
    %1128 = vmatpush2.msra.mxu0 0.0
    %1129 = vmatprep.subr.mxu0 0.0
    %1130 = vmatpush2.msra.mxu0 0.0
    %1131 = vmatprep.subr.mxu0 0.0
    %1132 = vmatpush2.msra.mxu0 0.0
    %1133 = vmatprep.subr.mxu0 0.0
    %1134 = vmatpush2.msra.mxu0 0.0
    %1135 = vmatprep.subr.mxu0 0.0
    %1136 = vmatpush2.msra.mxu0 0.0
    %1137 = vmatprep.mubr.f32.mxu0 0.0
    %1138 = vmatmul.mubr.f32.gmra.mxu0 %v1066
    %v1139 = vpop.f32.mrf.mxu0
    %v1140 = vadd.f32 0.0, %v1139
    %v1141 = vpop.f32.mrf.mxu0
    %v1142 = vadd.f32 0.0, %v1141
    %1143 = vdwg.mxu0
    %1144 = vmatprep.subr.mxu0 0.0
    %1145 = vmatpush1.msra.mxu0 %v387
    %1146 = vmatprep.subr.mxu0 0.0
    %1147 = vmatpush1.msra.mxu0 %v384
    %1148 = vmatprep.subr.mxu0 0.0
    %1149 = vmatpush1.msra.mxu0 %v381
    %1150 = vmatprep.subr.mxu0 0.0
    %1151 = vmatpush1.msra.mxu0 %v378
    %1152 = vmatprep.subr.mxu0 0.0
    %1153 = vmatpush1.msra.mxu0 %v375
    %1154 = vmatprep.subr.mxu0 0.0
    %1155 = vmatpush1.msra.mxu0 %v372
    %1156 = vmatprep.subr.mxu0 0.0
    %1157 = vmatpush1.msra.mxu0 %v369
    %1158 = vmatprep.subr.mxu0 0.0
    %1159 = vmatpush1.msra.mxu0 %v366
    %1160 = vmatprep.subr.mxu0 0.0
    %1161 = vmatpush1.msra.mxu0 %v363
    %1162 = vmatprep.subr.mxu0 0.0
    %1163 = vmatpush1.msra.mxu0 %v360
    %1164 = vmatprep.subr.mxu0 0.0
    %1165 = vmatpush1.msra.mxu0 %v357
    %1166 = vmatprep.subr.mxu0 0.0
    %1167 = vmatpush1.msra.mxu0 %v354
    %1168 = vmatprep.subr.mxu0 0.0
    %1169 = vmatpush1.msra.mxu0 %v351
    %1170 = vmatprep.subr.mxu0 0.0
    %1171 = vmatpush1.msra.mxu0 %v348
    %1172 = vmatprep.subr.mxu0 0.0
    %1173 = vmatpush1.msra.mxu0 %v345
    %1174 = vmatprep.subr.mxu0 0.0
    %1175 = vmatpush1.msra.mxu0 %v342
    %1176 = vmatprep.subr.mxu0 0.0
    %1177 = vmatpush2.msra.mxu0 0.0
    %1178 = vmatprep.subr.mxu0 0.0
    %1179 = vmatpush2.msra.mxu0 0.0
    %1180 = vmatprep.subr.mxu0 0.0
    %1181 = vmatpush2.msra.mxu0 0.0
    %1182 = vmatprep.subr.mxu0 0.0
    %1183 = vmatpush2.msra.mxu0 0.0
    %1184 = vmatprep.subr.mxu0 0.0
    %1185 = vmatpush2.msra.mxu0 0.0
    %1186 = vmatprep.subr.mxu0 0.0
    %1187 = vmatpush2.msra.mxu0 0.0
    %1188 = vmatprep.subr.mxu0 0.0
    %1189 = vmatpush2.msra.mxu0 0.0
    %1190 = vmatprep.subr.mxu0 0.0
    %1191 = vmatpush2.msra.mxu0 0.0
    %1192 = vmatprep.subr.mxu0 0.0
    %1193 = vmatpush2.msra.mxu0 0.0
    %1194 = vmatprep.subr.mxu0 0.0
    %1195 = vmatpush2.msra.mxu0 0.0
    %1196 = vmatprep.subr.mxu0 0.0
    %1197 = vmatpush2.msra.mxu0 0.0
    %1198 = vmatprep.subr.mxu0 0.0
    %1199 = vmatpush2.msra.mxu0 0.0
    %1200 = vmatprep.subr.mxu0 0.0
    %1201 = vmatpush2.msra.mxu0 0.0
    %1202 = vmatprep.subr.mxu0 0.0
    %1203 = vmatpush2.msra.mxu0 0.0
    %1204 = vmatprep.subr.mxu0 0.0
    %1205 = vmatpush2.msra.mxu0 0.0
    %1206 = vmatprep.subr.mxu0 0.0
    %1207 = vmatpush2.msra.mxu0 0.0
    %1208 = vmatprep.mubr.f32.mxu0 0.0
    %1209 = vmatmul.mubr.f32.gmra.mxu0 %v1066
    %v1210 = vpop.f32.mrf.mxu0
    %v1211 = vadd.f32 0.0, %v1210
    %v1212 = vpop.f32.mrf.mxu0
    %1213 = vdwg.mxu0
    %v1214 = vadd.f32 %v1070, %v1140
    %v1215 = vxor.u32 %v1214, 2147483648
    %v1216 = vmul.f32 %v1215, 1.442695
    %v1217 = vpow.pop %v1216
    %v1218 = vadd.f32 %v1217, 1.0
    %v1219 = vrcp.pop %v1218
    %v1220 = vmul.f32 1.0, %v1219
    %v1221 = vadd.f32 %v1071, %v1142
    %v1222 = vxor.u32 %v1221, 2147483648
    %v1223 = vmul.f32 %v1222, 1.442695
    %v1224 = vpow.pop %v1223
    %v1225 = vadd.f32 %v1224, 1.0
    %v1226 = vrcp.pop %v1225
    %v1227 = vmul.f32 1.0, %v1226
    %v1228 = vadd.f32 %v1211, %v393
    %v1229 = vmul.f32 %v1220, %v1228
    %v1230 = vadd.f32 %v1072, %v1229
    %v1231 = vtanh.pop %v1230
    %v1232 = vsub.f32 1.0, %v1227
    %v1233 = vmul.f32 %v1232, %v1231
    %v1234 = vmul.f32 %v1227, %v1066
    %v1235 = vadd.f32 %v1233, %v1234
    %s1236 = scalar_lea.vmem [#allocation3], 32
    %1237 = vst [vmem:[%s1236] sm:$0xff] %v1235
    %s1238 = scalar_lea.vmem [#allocation2], 120
    %v1239 = vld [vmem:[%s1238] sm:$0xff]
    %v1240 = vld [vmem:[%s1238 + $0x8] sm:$0xff]
    %v1241 = vld [vmem:[%s1238 + $0x10] sm:$0xff]
    %1242 = vmatprep.subr.mxu0 %v386
    %1243 = vmatpush1.msra.mxu0 %v385
    %1244 = vmatprep.subr.mxu0 %v383
    %1245 = vmatpush1.msra.mxu0 %v382
    %1246 = vmatprep.subr.mxu0 %v380
    %1247 = vmatpush1.msra.mxu0 %v379
    %1248 = vmatprep.subr.mxu0 %v377
    %1249 = vmatpush1.msra.mxu0 %v376
    %1250 = vmatprep.subr.mxu0 %v374
    %1251 = vmatpush1.msra.mxu0 %v373
    %1252 = vmatprep.subr.mxu0 %v371
    %1253 = vmatpush1.msra.mxu0 %v370
    %1254 = vmatprep.subr.mxu0 %v368
    %1255 = vmatpush1.msra.mxu0 %v367
    %1256 = vmatprep.subr.mxu0 %v365
    %1257 = vmatpush1.msra.mxu0 %v364
    %1258 = vmatprep.subr.mxu0 %v362
    %1259 = vmatpush1.msra.mxu0 %v361
    %1260 = vmatprep.subr.mxu0 %v359
    %1261 = vmatpush1.msra.mxu0 %v358
    %1262 = vmatprep.subr.mxu0 %v356
    %1263 = vmatpush1.msra.mxu0 %v355
    %1264 = vmatprep.subr.mxu0 %v353
    %1265 = vmatpush1.msra.mxu0 %v352
    %1266 = vmatprep.subr.mxu0 %v350
    %1267 = vmatpush1.msra.mxu0 %v349
    %1268 = vmatprep.subr.mxu0 %v347
    %1269 = vmatpush1.msra.mxu0 %v346
    %1270 = vmatprep.subr.mxu0 %v344
    %1271 = vmatpush1.msra.mxu0 %v343
    %1272 = vmatprep.subr.mxu0 %v341
    %1273 = vmatpush1.msra.mxu0 %v340
    %1274 = vmatprep.subr.mxu0 0.0
    %1275 = vmatpush2.msra.mxu0 0.0
    %1276 = vmatprep.subr.mxu0 0.0
    %1277 = vmatpush2.msra.mxu0 0.0
    %1278 = vmatprep.subr.mxu0 0.0
    %1279 = vmatpush2.msra.mxu0 0.0
    %1280 = vmatprep.subr.mxu0 0.0
    %1281 = vmatpush2.msra.mxu0 0.0
    %1282 = vmatprep.subr.mxu0 0.0
    %1283 = vmatpush2.msra.mxu0 0.0
    %1284 = vmatprep.subr.mxu0 0.0
    %1285 = vmatpush2.msra.mxu0 0.0
    %1286 = vmatprep.subr.mxu0 0.0
    %1287 = vmatpush2.msra.mxu0 0.0
    %1288 = vmatprep.subr.mxu0 0.0
    %1289 = vmatpush2.msra.mxu0 0.0
    %1290 = vmatprep.subr.mxu0 0.0
    %1291 = vmatpush2.msra.mxu0 0.0
    %1292 = vmatprep.subr.mxu0 0.0
    %1293 = vmatpush2.msra.mxu0 0.0
    %1294 = vmatprep.subr.mxu0 0.0
    %1295 = vmatpush2.msra.mxu0 0.0
    %1296 = vmatprep.subr.mxu0 0.0
    %1297 = vmatpush2.msra.mxu0 0.0
    %1298 = vmatprep.subr.mxu0 0.0
    %1299 = vmatpush2.msra.mxu0 0.0
    %1300 = vmatprep.subr.mxu0 0.0
    %1301 = vmatpush2.msra.mxu0 0.0
    %1302 = vmatprep.subr.mxu0 0.0
    %1303 = vmatpush2.msra.mxu0 0.0
    %1304 = vmatprep.subr.mxu0 0.0
    %1305 = vmatpush2.msra.mxu0 0.0
    %1306 = vmatprep.mubr.f32.mxu0 0.0
    %1307 = vmatmul.mubr.f32.gmra.mxu0 %v1235
    %v1308 = vpop.f32.mrf.mxu0
    %v1309 = vadd.f32 0.0, %v1308
    %v1310 = vpop.f32.mrf.mxu0
    %v1311 = vadd.f32 0.0, %v1310
    %1312 = vdwg.mxu0
    %1313 = vmatprep.subr.mxu0 0.0
    %1314 = vmatpush1.msra.mxu0 %v387
    %1315 = vmatprep.subr.mxu0 0.0
    %1316 = vmatpush1.msra.mxu0 %v384
    %1317 = vmatprep.subr.mxu0 0.0
    %1318 = vmatpush1.msra.mxu0 %v381
    %1319 = vmatprep.subr.mxu0 0.0
    %1320 = vmatpush1.msra.mxu0 %v378
    %1321 = vmatprep.subr.mxu0 0.0
    %1322 = vmatpush1.msra.mxu0 %v375
    %1323 = vmatprep.subr.mxu0 0.0
    %1324 = vmatpush1.msra.mxu0 %v372
    %1325 = vmatprep.subr.mxu0 0.0
    %1326 = vmatpush1.msra.mxu0 %v369
    %1327 = vmatprep.subr.mxu0 0.0
    %1328 = vmatpush1.msra.mxu0 %v366
    %1329 = vmatprep.subr.mxu0 0.0
    %1330 = vmatpush1.msra.mxu0 %v363
    %1331 = vmatprep.subr.mxu0 0.0
    %1332 = vmatpush1.msra.mxu0 %v360
    %1333 = vmatprep.subr.mxu0 0.0
    %1334 = vmatpush1.msra.mxu0 %v357
    %1335 = vmatprep.subr.mxu0 0.0
    %1336 = vmatpush1.msra.mxu0 %v354
    %1337 = vmatprep.subr.mxu0 0.0
    %1338 = vmatpush1.msra.mxu0 %v351
    %1339 = vmatprep.subr.mxu0 0.0
    %1340 = vmatpush1.msra.mxu0 %v348
    %1341 = vmatprep.subr.mxu0 0.0
    %1342 = vmatpush1.msra.mxu0 %v345
    %1343 = vmatprep.subr.mxu0 0.0
    %1344 = vmatpush1.msra.mxu0 %v342
    %1345 = vmatprep.subr.mxu0 0.0
    %1346 = vmatpush2.msra.mxu0 0.0
    %1347 = vmatprep.subr.mxu0 0.0
    %1348 = vmatpush2.msra.mxu0 0.0
    %1349 = vmatprep.subr.mxu0 0.0
    %1350 = vmatpush2.msra.mxu0 0.0
    %1351 = vmatprep.subr.mxu0 0.0
    %1352 = vmatpush2.msra.mxu0 0.0
    %1353 = vmatprep.subr.mxu0 0.0
    %1354 = vmatpush2.msra.mxu0 0.0
    %1355 = vmatprep.subr.mxu0 0.0
    %1356 = vmatpush2.msra.mxu0 0.0
    %1357 = vmatprep.subr.mxu0 0.0
    %1358 = vmatpush2.msra.mxu0 0.0
    %1359 = vmatprep.subr.mxu0 0.0
    %1360 = vmatpush2.msra.mxu0 0.0
    %1361 = vmatprep.subr.mxu0 0.0
    %1362 = vmatpush2.msra.mxu0 0.0
    %1363 = vmatprep.subr.mxu0 0.0
    %1364 = vmatpush2.msra.mxu0 0.0
    %1365 = vmatprep.subr.mxu0 0.0
    %1366 = vmatpush2.msra.mxu0 0.0
    %1367 = vmatprep.subr.mxu0 0.0
    %1368 = vmatpush2.msra.mxu0 0.0
    %1369 = vmatprep.subr.mxu0 0.0
    %1370 = vmatpush2.msra.mxu0 0.0
    %1371 = vmatprep.subr.mxu0 0.0
    %1372 = vmatpush2.msra.mxu0 0.0
    %1373 = vmatprep.subr.mxu0 0.0
    %1374 = vmatpush2.msra.mxu0 0.0
    %1375 = vmatprep.subr.mxu0 0.0
    %1376 = vmatpush2.msra.mxu0 0.0
    %1377 = vmatprep.mubr.f32.mxu0 0.0
    %1378 = vmatmul.mubr.f32.gmra.mxu0 %v1235
    %v1379 = vpop.f32.mrf.mxu0
    %v1380 = vadd.f32 0.0, %v1379
    %v1381 = vpop.f32.mrf.mxu0
    %1382 = vdwg.mxu0
    %v1383 = vadd.f32 %v1239, %v1309
    %v1384 = vxor.u32 %v1383, 2147483648
    %v1385 = vmul.f32 %v1384, 1.442695
    %v1386 = vpow.pop %v1385
    %v1387 = vadd.f32 %v1386, 1.0
    %v1388 = vrcp.pop %v1387
    %v1389 = vmul.f32 1.0, %v1388
    %v1390 = vadd.f32 %v1240, %v1311
    %v1391 = vxor.u32 %v1390, 2147483648
    %v1392 = vmul.f32 %v1391, 1.442695
    %v1393 = vpow.pop %v1392
    %v1394 = vadd.f32 %v1393, 1.0
    %v1395 = vrcp.pop %v1394
    %v1396 = vmul.f32 1.0, %v1395
    %v1397 = vadd.f32 %v1380, %v393
    %v1398 = vmul.f32 %v1389, %v1397
    %v1399 = vadd.f32 %v1241, %v1398
    %v1400 = vtanh.pop %v1399
    %v1401 = vsub.f32 1.0, %v1396
    %v1402 = vmul.f32 %v1401, %v1400
    %v1403 = vmul.f32 %v1396, %v1235
    %v1404 = vadd.f32 %v1402, %v1403
    %s1405 = scalar_lea.vmem [#allocation3], 40
    %1406 = vst [vmem:[%s1405] sm:$0xff] %v1404
    %s1407 = scalar_lea.vmem [#allocation2], 144
    %v1408 = vld [vmem:[%s1407] sm:$0xff]
    %v1409 = vld [vmem:[%s1407 + $0x8] sm:$0xff]
    %v1410 = vld [vmem:[%s1407 + $0x10] sm:$0xff]
    %1411 = vmatprep.subr.mxu0 %v386
    %1412 = vmatpush1.msra.mxu0 %v385
    %1413 = vmatprep.subr.mxu0 %v383
    %1414 = vmatpush1.msra.mxu0 %v382
    %1415 = vmatprep.subr.mxu0 %v380
    %1416 = vmatpush1.msra.mxu0 %v379
    %1417 = vmatprep.subr.mxu0 %v377
    %1418 = vmatpush1.msra.mxu0 %v376
    %1419 = vmatprep.subr.mxu0 %v374
    %1420 = vmatpush1.msra.mxu0 %v373
    %1421 = vmatprep.subr.mxu0 %v371
    %1422 = vmatpush1.msra.mxu0 %v370
    %1423 = vmatprep.subr.mxu0 %v368
    %1424 = vmatpush1.msra.mxu0 %v367
    %1425 = vmatprep.subr.mxu0 %v365
    %1426 = vmatpush1.msra.mxu0 %v364
    %1427 = vmatprep.subr.mxu0 %v362
    %1428 = vmatpush1.msra.mxu0 %v361
    %1429 = vmatprep.subr.mxu0 %v359
    %1430 = vmatpush1.msra.mxu0 %v358
    %1431 = vmatprep.subr.mxu0 %v356
    %1432 = vmatpush1.msra.mxu0 %v355
    %1433 = vmatprep.subr.mxu0 %v353
    %1434 = vmatpush1.msra.mxu0 %v352
    %1435 = vmatprep.subr.mxu0 %v350
    %1436 = vmatpush1.msra.mxu0 %v349
    %1437 = vmatprep.subr.mxu0 %v347
    %1438 = vmatpush1.msra.mxu0 %v346
    %1439 = vmatprep.subr.mxu0 %v344
    %1440 = vmatpush1.msra.mxu0 %v343
    %1441 = vmatprep.subr.mxu0 %v341
    %1442 = vmatpush1.msra.mxu0 %v340
    %1443 = vmatprep.subr.mxu0 0.0
    %1444 = vmatpush2.msra.mxu0 0.0
    %1445 = vmatprep.subr.mxu0 0.0
    %1446 = vmatpush2.msra.mxu0 0.0
    %1447 = vmatprep.subr.mxu0 0.0
    %1448 = vmatpush2.msra.mxu0 0.0
    %1449 = vmatprep.subr.mxu0 0.0
    %1450 = vmatpush2.msra.mxu0 0.0
    %1451 = vmatprep.subr.mxu0 0.0
    %1452 = vmatpush2.msra.mxu0 0.0
    %1453 = vmatprep.subr.mxu0 0.0
    %1454 = vmatpush2.msra.mxu0 0.0
    %1455 = vmatprep.subr.mxu0 0.0
    %1456 = vmatpush2.msra.mxu0 0.0
    %1457 = vmatprep.subr.mxu0 0.0
    %1458 = vmatpush2.msra.mxu0 0.0
    %1459 = vmatprep.subr.mxu0 0.0
    %1460 = vmatpush2.msra.mxu0 0.0
    %1461 = vmatprep.subr.mxu0 0.0
    %1462 = vmatpush2.msra.mxu0 0.0
    %1463 = vmatprep.subr.mxu0 0.0
    %1464 = vmatpush2.msra.mxu0 0.0
    %1465 = vmatprep.subr.mxu0 0.0
    %1466 = vmatpush2.msra.mxu0 0.0
    %1467 = vmatprep.subr.mxu0 0.0
    %1468 = vmatpush2.msra.mxu0 0.0
    %1469 = vmatprep.subr.mxu0 0.0
    %1470 = vmatpush2.msra.mxu0 0.0
    %1471 = vmatprep.subr.mxu0 0.0
    %1472 = vmatpush2.msra.mxu0 0.0
    %1473 = vmatprep.subr.mxu0 0.0
    %1474 = vmatpush2.msra.mxu0 0.0
    %1475 = vmatprep.mubr.f32.mxu0 0.0
    %1476 = vmatmul.mubr.f32.gmra.mxu0 %v1404
    %v1477 = vpop.f32.mrf.mxu0
    %v1478 = vadd.f32 0.0, %v1477
    %v1479 = vpop.f32.mrf.mxu0
    %v1480 = vadd.f32 0.0, %v1479
    %1481 = vdwg.mxu0
    %1482 = vmatprep.subr.mxu0 0.0
    %1483 = vmatpush1.msra.mxu0 %v387
    %1484 = vmatprep.subr.mxu0 0.0
    %1485 = vmatpush1.msra.mxu0 %v384
    %1486 = vmatprep.subr.mxu0 0.0
    %1487 = vmatpush1.msra.mxu0 %v381
    %1488 = vmatprep.subr.mxu0 0.0
    %1489 = vmatpush1.msra.mxu0 %v378
    %1490 = vmatprep.subr.mxu0 0.0
    %1491 = vmatpush1.msra.mxu0 %v375
    %1492 = vmatprep.subr.mxu0 0.0
    %1493 = vmatpush1.msra.mxu0 %v372
    %1494 = vmatprep.subr.mxu0 0.0
    %1495 = vmatpush1.msra.mxu0 %v369
    %1496 = vmatprep.subr.mxu0 0.0
    %1497 = vmatpush1.msra.mxu0 %v366
    %1498 = vmatprep.subr.mxu0 0.0
    %1499 = vmatpush1.msra.mxu0 %v363
    %1500 = vmatprep.subr.mxu0 0.0
    %1501 = vmatpush1.msra.mxu0 %v360
    %1502 = vmatprep.subr.mxu0 0.0
    %1503 = vmatpush1.msra.mxu0 %v357
    %1504 = vmatprep.subr.mxu0 0.0
    %1505 = vmatpush1.msra.mxu0 %v354
    %1506 = vmatprep.subr.mxu0 0.0
    %1507 = vmatpush1.msra.mxu0 %v351
    %1508 = vmatprep.subr.mxu0 0.0
    %1509 = vmatpush1.msra.mxu0 %v348
    %1510 = vmatprep.subr.mxu0 0.0
    %1511 = vmatpush1.msra.mxu0 %v345
    %1512 = vmatprep.subr.mxu0 0.0
    %1513 = vmatpush1.msra.mxu0 %v342
    %1514 = vmatprep.subr.mxu0 0.0
    %1515 = vmatpush2.msra.mxu0 0.0
    %1516 = vmatprep.subr.mxu0 0.0
    %1517 = vmatpush2.msra.mxu0 0.0
    %1518 = vmatprep.subr.mxu0 0.0
    %1519 = vmatpush2.msra.mxu0 0.0
    %1520 = vmatprep.subr.mxu0 0.0
    %1521 = vmatpush2.msra.mxu0 0.0
    %1522 = vmatprep.subr.mxu0 0.0
    %1523 = vmatpush2.msra.mxu0 0.0
    %1524 = vmatprep.subr.mxu0 0.0
    %1525 = vmatpush2.msra.mxu0 0.0
    %1526 = vmatprep.subr.mxu0 0.0
    %1527 = vmatpush2.msra.mxu0 0.0
    %1528 = vmatprep.subr.mxu0 0.0
    %1529 = vmatpush2.msra.mxu0 0.0
    %1530 = vmatprep.subr.mxu0 0.0
    %1531 = vmatpush2.msra.mxu0 0.0
    %1532 = vmatprep.subr.mxu0 0.0
    %1533 = vmatpush2.msra.mxu0 0.0
    %1534 = vmatprep.subr.mxu0 0.0
    %1535 = vmatpush2.msra.mxu0 0.0
    %1536 = vmatprep.subr.mxu0 0.0
    %1537 = vmatpush2.msra.mxu0 0.0
    %1538 = vmatprep.subr.mxu0 0.0
    %1539 = vmatpush2.msra.mxu0 0.0
    %1540 = vmatprep.subr.mxu0 0.0
    %1541 = vmatpush2.msra.mxu0 0.0
    %1542 = vmatprep.subr.mxu0 0.0
    %1543 = vmatpush2.msra.mxu0 0.0
    %1544 = vmatprep.subr.mxu0 0.0
    %1545 = vmatpush2.msra.mxu0 0.0
    %1546 = vmatprep.mubr.f32.mxu0 0.0
    %1547 = vmatmul.mubr.f32.gmra.mxu0 %v1404
    %v1548 = vpop.f32.mrf.mxu0
    %v1549 = vadd.f32 0.0, %v1548
    %v1550 = vpop.f32.mrf.mxu0
    %1551 = vdwg.mxu0
    %v1552 = vadd.f32 %v1408, %v1478
    %v1553 = vxor.u32 %v1552, 2147483648
    %v1554 = vmul.f32 %v1553, 1.442695
    %v1555 = vpow.pop %v1554
    %v1556 = vadd.f32 %v1555, 1.0
    %v1557 = vrcp.pop %v1556
    %v1558 = vmul.f32 1.0, %v1557
    %v1559 = vadd.f32 %v1409, %v1480
    %v1560 = vxor.u32 %v1559, 2147483648
    %v1561 = vmul.f32 %v1560, 1.442695
    %v1562 = vpow.pop %v1561
    %v1563 = vadd.f32 %v1562, 1.0
    %v1564 = vrcp.pop %v1563
    %v1565 = vmul.f32 1.0, %v1564
    %v1566 = vadd.f32 %v1549, %v393
    %v1567 = vmul.f32 %v1558, %v1566
    %v1568 = vadd.f32 %v1410, %v1567
    %v1569 = vtanh.pop %v1568
    %v1570 = vsub.f32 1.0, %v1565
    %v1571 = vmul.f32 %v1570, %v1569
    %v1572 = vmul.f32 %v1565, %v1404
    %v1573 = vadd.f32 %v1571, %v1572
    %s1574 = scalar_lea.vmem [#allocation3], 48
    %1575 = vst [vmem:[%s1574] sm:$0xff] %v1573
    %s1576 = scalar_lea.vmem [#allocation2], 168
    %v1577 = vld [vmem:[%s1576] sm:$0xff]
    %v1578 = vld [vmem:[%s1576 + $0x8] sm:$0xff]
    %v1579 = vld [vmem:[%s1576 + $0x10] sm:$0xff]
    %1580 = vmatprep.subr.mxu0 %v386
    %1581 = vmatpush1.msra.mxu0 %v385
    %1582 = vmatprep.subr.mxu0 %v383
    %1583 = vmatpush1.msra.mxu0 %v382
    %1584 = vmatprep.subr.mxu0 %v380
    %1585 = vmatpush1.msra.mxu0 %v379
    %1586 = vmatprep.subr.mxu0 %v377
    %1587 = vmatpush1.msra.mxu0 %v376
    %1588 = vmatprep.subr.mxu0 %v374
    %1589 = vmatpush1.msra.mxu0 %v373
    %1590 = vmatprep.subr.mxu0 %v371
    %1591 = vmatpush1.msra.mxu0 %v370
    %1592 = vmatprep.subr.mxu0 %v368
    %1593 = vmatpush1.msra.mxu0 %v367
    %1594 = vmatprep.subr.mxu0 %v365
    %1595 = vmatpush1.msra.mxu0 %v364
    %1596 = vmatprep.subr.mxu0 %v362
    %1597 = vmatpush1.msra.mxu0 %v361
    %1598 = vmatprep.subr.mxu0 %v359
    %1599 = vmatpush1.msra.mxu0 %v358
    %1600 = vmatprep.subr.mxu0 %v356
    %1601 = vmatpush1.msra.mxu0 %v355
    %1602 = vmatprep.subr.mxu0 %v353
    %1603 = vmatpush1.msra.mxu0 %v352
    %1604 = vmatprep.subr.mxu0 %v350
    %1605 = vmatpush1.msra.mxu0 %v349
    %1606 = vmatprep.subr.mxu0 %v347
    %1607 = vmatpush1.msra.mxu0 %v346
    %1608 = vmatprep.subr.mxu0 %v344
    %1609 = vmatpush1.msra.mxu0 %v343
    %1610 = vmatprep.subr.mxu0 %v341
    %1611 = vmatpush1.msra.mxu0 %v340
    %1612 = vmatprep.subr.mxu0 0.0
    %1613 = vmatpush2.msra.mxu0 0.0
    %1614 = vmatprep.subr.mxu0 0.0
    %1615 = vmatpush2.msra.mxu0 0.0
    %1616 = vmatprep.subr.mxu0 0.0
    %1617 = vmatpush2.msra.mxu0 0.0
    %1618 = vmatprep.subr.mxu0 0.0
    %1619 = vmatpush2.msra.mxu0 0.0
    %1620 = vmatprep.subr.mxu0 0.0
    %1621 = vmatpush2.msra.mxu0 0.0
    %1622 = vmatprep.subr.mxu0 0.0
    %1623 = vmatpush2.msra.mxu0 0.0
    %1624 = vmatprep.subr.mxu0 0.0
    %1625 = vmatpush2.msra.mxu0 0.0
    %1626 = vmatprep.subr.mxu0 0.0
    %1627 = vmatpush2.msra.mxu0 0.0
    %1628 = vmatprep.subr.mxu0 0.0
    %1629 = vmatpush2.msra.mxu0 0.0
    %1630 = vmatprep.subr.mxu0 0.0
    %1631 = vmatpush2.msra.mxu0 0.0
    %1632 = vmatprep.subr.mxu0 0.0
    %1633 = vmatpush2.msra.mxu0 0.0
    %1634 = vmatprep.subr.mxu0 0.0
    %1635 = vmatpush2.msra.mxu0 0.0
    %1636 = vmatprep.subr.mxu0 0.0
    %1637 = vmatpush2.msra.mxu0 0.0
    %1638 = vmatprep.subr.mxu0 0.0
    %1639 = vmatpush2.msra.mxu0 0.0
    %1640 = vmatprep.subr.mxu0 0.0
    %1641 = vmatpush2.msra.mxu0 0.0
    %1642 = vmatprep.subr.mxu0 0.0
    %1643 = vmatpush2.msra.mxu0 0.0
    %1644 = vmatprep.mubr.f32.mxu0 0.0
    %1645 = vmatmul.mubr.f32.gmra.mxu0 %v1573
    %v1646 = vpop.f32.mrf.mxu0
    %v1647 = vadd.f32 0.0, %v1646
    %v1648 = vpop.f32.mrf.mxu0
    %v1649 = vadd.f32 0.0, %v1648
    %1650 = vdwg.mxu0
    %1651 = vmatprep.subr.mxu0 0.0
    %1652 = vmatpush1.msra.mxu0 %v387
    %1653 = vmatprep.subr.mxu0 0.0
    %1654 = vmatpush1.msra.mxu0 %v384
    %1655 = vmatprep.subr.mxu0 0.0
    %1656 = vmatpush1.msra.mxu0 %v381
    %1657 = vmatprep.subr.mxu0 0.0
    %1658 = vmatpush1.msra.mxu0 %v378
    %1659 = vmatprep.subr.mxu0 0.0
    %1660 = vmatpush1.msra.mxu0 %v375
    %1661 = vmatprep.subr.mxu0 0.0
    %1662 = vmatpush1.msra.mxu0 %v372
    %1663 = vmatprep.subr.mxu0 0.0
    %1664 = vmatpush1.msra.mxu0 %v369
    %1665 = vmatprep.subr.mxu0 0.0
    %1666 = vmatpush1.msra.mxu0 %v366
    %1667 = vmatprep.subr.mxu0 0.0
    %1668 = vmatpush1.msra.mxu0 %v363
    %1669 = vmatprep.subr.mxu0 0.0
    %1670 = vmatpush1.msra.mxu0 %v360
    %1671 = vmatprep.subr.mxu0 0.0
    %1672 = vmatpush1.msra.mxu0 %v357
    %1673 = vmatprep.subr.mxu0 0.0
    %1674 = vmatpush1.msra.mxu0 %v354
    %1675 = vmatprep.subr.mxu0 0.0
    %1676 = vmatpush1.msra.mxu0 %v351
    %1677 = vmatprep.subr.mxu0 0.0
    %1678 = vmatpush1.msra.mxu0 %v348
    %1679 = vmatprep.subr.mxu0 0.0
    %1680 = vmatpush1.msra.mxu0 %v345
    %1681 = vmatprep.subr.mxu0 0.0
    %1682 = vmatpush1.msra.mxu0 %v342
    %1683 = vmatprep.subr.mxu0 0.0
    %1684 = vmatpush2.msra.mxu0 0.0
    %1685 = vmatprep.subr.mxu0 0.0
    %1686 = vmatpush2.msra.mxu0 0.0
    %1687 = vmatprep.subr.mxu0 0.0
    %1688 = vmatpush2.msra.mxu0 0.0
    %1689 = vmatprep.subr.mxu0 0.0
    %1690 = vmatpush2.msra.mxu0 0.0
    %1691 = vmatprep.subr.mxu0 0.0
    %1692 = vmatpush2.msra.mxu0 0.0
    %1693 = vmatprep.subr.mxu0 0.0
    %1694 = vmatpush2.msra.mxu0 0.0
    %1695 = vmatprep.subr.mxu0 0.0
    %1696 = vmatpush2.msra.mxu0 0.0
    %1697 = vmatprep.subr.mxu0 0.0
    %1698 = vmatpush2.msra.mxu0 0.0
    %1699 = vmatprep.subr.mxu0 0.0
    %1700 = vmatpush2.msra.mxu0 0.0
    %1701 = vmatprep.subr.mxu0 0.0
    %1702 = vmatpush2.msra.mxu0 0.0
    %1703 = vmatprep.subr.mxu0 0.0
    %1704 = vmatpush2.msra.mxu0 0.0
    %1705 = vmatprep.subr.mxu0 0.0
    %1706 = vmatpush2.msra.mxu0 0.0
    %1707 = vmatprep.subr.mxu0 0.0
    %1708 = vmatpush2.msra.mxu0 0.0
    %1709 = vmatprep.subr.mxu0 0.0
    %1710 = vmatpush2.msra.mxu0 0.0
    %1711 = vmatprep.subr.mxu0 0.0
    %1712 = vmatpush2.msra.mxu0 0.0
    %1713 = vmatprep.subr.mxu0 0.0
    %1714 = vmatpush2.msra.mxu0 0.0
    %1715 = vmatprep.mubr.f32.mxu0 0.0
    %1716 = vmatmul.mubr.f32.gmra.mxu0 %v1573
    %v1717 = vpop.f32.mrf.mxu0
    %v1718 = vadd.f32 0.0, %v1717
    %v1719 = vpop.f32.mrf.mxu0
    %1720 = vdwg.mxu0
    %v1721 = vadd.f32 %v1577, %v1647
    %v1722 = vxor.u32 %v1721, 2147483648
    %v1723 = vmul.f32 %v1722, 1.442695
    %v1724 = vpow.pop %v1723
    %v1725 = vadd.f32 %v1724, 1.0
    %v1726 = vrcp.pop %v1725
    %v1727 = vmul.f32 1.0, %v1726
    %v1728 = vadd.f32 %v1578, %v1649
    %v1729 = vxor.u32 %v1728, 2147483648
    %v1730 = vmul.f32 %v1729, 1.442695
    %v1731 = vpow.pop %v1730
    %v1732 = vadd.f32 %v1731, 1.0
    %v1733 = vrcp.pop %v1732
    %v1734 = vmul.f32 1.0, %v1733
    %v1735 = vadd.f32 %v1718, %v393
    %v1736 = vmul.f32 %v1727, %v1735
    %v1737 = vadd.f32 %v1579, %v1736
    %v1738 = vtanh.pop %v1737
    %v1739 = vsub.f32 1.0, %v1734
    %v1740 = vmul.f32 %v1739, %v1738
    %v1741 = vmul.f32 %v1734, %v1573
    %v1742 = vadd.f32 %v1740, %v1741
    %s1743 = scalar_lea.vmem [#allocation3], 56
    %1744 = vst [vmem:[%s1743] sm:$0xff] %v1742
    %1745 = vst [vmem:[#allocation5] sm:$0xff] %v1742
    %v1746 = vld [vmem:[#allocation3] sm:$0xff]
    %v1747 = vld [vmem:[#allocation3 + $0x8] sm:$0xff]
    %v1748 = vld [vmem:[#allocation3 + $0x10] sm:$0xff]
    %v1749 = vld [vmem:[#allocation3 + $0x18] sm:$0xff]
    %v1750 = vld [vmem:[#allocation3 + $0x20] sm:$0xff]
    %v1751 = vld [vmem:[#allocation3 + $0x28] sm:$0xff]
    %v1752 = vld [vmem:[#allocation3 + $0x30] sm:$0xff]
    %v1753 = vld [vmem:[#allocation3 + $0x38] sm:$0xff]
    %v1754 = vld [vmem:[%s5] sm:$0xff]
    %v1755 = vld [vmem:[%s5 + $0x8] sm:$0xff]
    %v1756 = vld [vmem:[%s5 + $0x10] sm:$0xff]
    %v1757 = vld [vmem:[%s5 + $0x18] sm:$0xff]
    %v1758 = vld [vmem:[%s5 + $0x20] sm:$0xff]
    %v1759 = vld [vmem:[%s5 + $0x28] sm:$0xff]
    %v1760 = vld [vmem:[%s5 + $0x30] sm:$0xff]
    %v1761 = vld [vmem:[%s5 + $0x38] sm:$0xff]
    %v1762 = vld [vmem:[%s5 + $0x40] sm:$0xff]
    %v1763 = vld [vmem:[%s5 + $0x48] sm:$0xff]
    %v1764 = vld [vmem:[%s5 + $0x50] sm:$0xff]
    %v1765 = vld [vmem:[%s5 + $0x58] sm:$0xff]
    %v1766 = vld [vmem:[%s5 + $0x60] sm:$0xff]
    %v1767 = vld [vmem:[%s5 + $0x68] sm:$0xff]
    %v1768 = vld [vmem:[%s5 + $0x70] sm:$0xff]
    %v1769 = vld [vmem:[%s5 + $0x78] sm:$0xff]
    %v1770 = vld [vmem:[%s5 + $0x80] sm:$0xff]
    %v1771 = vld [vmem:[%s5 + $0x88] sm:$0xff]
    %v1772 = vld [vmem:[%s5 + $0x90] sm:$0xff]
    %v1773 = vld [vmem:[%s5 + $0x98] sm:$0xff]
    %v1774 = vld [vmem:[%s5 + $0xa0] sm:$0xff]
    %v1775 = vld [vmem:[%s5 + $0xa8] sm:$0xff]
    %v1776 = vld [vmem:[%s5 + $0xb0] sm:$0xff]
    %v1777 = vld [vmem:[%s5 + $0xb8] sm:$0xff]
    %v1778 = vld [vmem:[%s5 + $0xc0] sm:$0xff]
    %v1779 = vld [vmem:[%s5 + $0xc8] sm:$0xff]
    %v1780 = vld [vmem:[%s5 + $0xd0] sm:$0xff]
    %v1781 = vld [vmem:[%s5 + $0xd8] sm:$0xff]
    %v1782 = vld [vmem:[%s5 + $0xe0] sm:$0xff]
    %v1783 = vld [vmem:[%s5 + $0xe8] sm:$0xff]
    %v1784 = vld [vmem:[%s5 + $0xf0] sm:$0xff]
    %v1785 = vld [vmem:[%s5 + $0xf8] sm:$0xff]
    %v1786 = vld [vmem:[%s5 + $0x100] sm:$0xff]
    %v1787 = vld [vmem:[%s5 + $0x108] sm:$0xff]
    %v1788 = vld [vmem:[%s5 + $0x110] sm:$0xff]
    %v1789 = vld [vmem:[%s5 + $0x118] sm:$0xff]
    %v1790 = vld [vmem:[%s5 + $0x120] sm:$0xff]
    %v1791 = vld [vmem:[%s5 + $0x128] sm:$0xff]
    %v1792 = vld [vmem:[%s5 + $0x130] sm:$0xff]
    %v1793 = vld [vmem:[%s5 + $0x138] sm:$0xff]
    %v1794 = vld [vmem:[%s5 + $0x140] sm:$0xff]
    %v1795 = vld [vmem:[%s5 + $0x148] sm:$0xff]
    %v1796 = vld [vmem:[%s5 + $0x150] sm:$0xff]
    %v1797 = vld [vmem:[%s5 + $0x158] sm:$0xff]
    %v1798 = vld [vmem:[%s5 + $0x160] sm:$0xff]
    %v1799 = vld [vmem:[%s5 + $0x168] sm:$0xff]
    %v1800 = vld [vmem:[%s5 + $0x170] sm:$0xff]
    %v1801 = vld [vmem:[%s5 + $0x178] sm:$0xff]
    %v1802 = vld [vmem:[%s7] sm:$0x7]
    %v1804 = vlaneseq
    %v1805 = vshrl.u32 %v1804, 7
    %v1806 = vsub.s32 0, %v1805
    %v1807 = vrot.slane %v1802, %v1806
    %v1808 = vlaneseq
    %v1809 = vshrl.u32 %v1808, 7
    %v1810 = vsub.s32 1, %v1809
    %v1811 = vrot.slane %v1802, %v1810
    %v1812 = vlaneseq
    %v1813 = vshrl.u32 %v1812, 7
    %v1814 = vsub.s32 2, %v1813
    %v1815 = vrot.slane %v1802, %v1814
    %1819 = vmatprep.subr.mxu0 %v1800
    %1820 = vmatpush1.msra.mxu0 %v1799
    %1821 = vmatprep.subr.mxu0 %v1797
    %1822 = vmatpush1.msra.mxu0 %v1796
    %1823 = vmatprep.subr.mxu0 %v1794
    %1824 = vmatpush1.msra.mxu0 %v1793
    %1825 = vmatprep.subr.mxu0 %v1791
    %1826 = vmatpush1.msra.mxu0 %v1790
    %1827 = vmatprep.subr.mxu0 %v1788
    %1828 = vmatpush1.msra.mxu0 %v1787
    %1829 = vmatprep.subr.mxu0 %v1785
    %1830 = vmatpush1.msra.mxu0 %v1784
    %1831 = vmatprep.subr.mxu0 %v1782
    %1832 = vmatpush1.msra.mxu0 %v1781
    %1833 = vmatprep.subr.mxu0 %v1779
    %1834 = vmatpush1.msra.mxu0 %v1778
    %1835 = vmatprep.subr.mxu0 %v1776
    %1836 = vmatpush1.msra.mxu0 %v1775
    %1837 = vmatprep.subr.mxu0 %v1773
    %1838 = vmatpush1.msra.mxu0 %v1772
    %1839 = vmatprep.subr.mxu0 %v1770
    %1840 = vmatpush1.msra.mxu0 %v1769
    %1841 = vmatprep.subr.mxu0 %v1767
    %1842 = vmatpush1.msra.mxu0 %v1766
    %1843 = vmatprep.subr.mxu0 %v1764
    %1844 = vmatpush1.msra.mxu0 %v1763
    %1845 = vmatprep.subr.mxu0 %v1761
    %1846 = vmatpush1.msra.mxu0 %v1760
    %1847 = vmatprep.subr.mxu0 %v1758
    %1848 = vmatpush1.msra.mxu0 %v1757
    %1849 = vmatprep.subr.mxu0 %v1755
    %1850 = vmatpush1.msra.mxu0 %v1754
    %1851 = vmatprep.subr.mxu0 0.0
    %1852 = vmatpush2.msra.mxu0 0.0
    %1853 = vmatprep.subr.mxu0 0.0
    %1854 = vmatpush2.msra.mxu0 0.0
    %1855 = vmatprep.subr.mxu0 0.0
    %1856 = vmatpush2.msra.mxu0 0.0
    %1857 = vmatprep.subr.mxu0 0.0
    %1858 = vmatpush2.msra.mxu0 0.0
    %1859 = vmatprep.subr.mxu0 0.0
    %1860 = vmatpush2.msra.mxu0 0.0
    %1861 = vmatprep.subr.mxu0 0.0
    %1862 = vmatpush2.msra.mxu0 0.0
    %1863 = vmatprep.subr.mxu0 0.0
    %1864 = vmatpush2.msra.mxu0 0.0
    %1865 = vmatprep.subr.mxu0 0.0
    %1866 = vmatpush2.msra.mxu0 0.0
    %1867 = vmatprep.subr.mxu0 0.0
    %1868 = vmatpush2.msra.mxu0 0.0
    %1869 = vmatprep.subr.mxu0 0.0
    %1870 = vmatpush2.msra.mxu0 0.0
    %1871 = vmatprep.subr.mxu0 0.0
    %1872 = vmatpush2.msra.mxu0 0.0
    %1873 = vmatprep.subr.mxu0 0.0
    %1874 = vmatpush2.msra.mxu0 0.0
    %1875 = vmatprep.subr.mxu0 0.0
    %1876 = vmatpush2.msra.mxu0 0.0
    %1877 = vmatprep.subr.mxu0 0.0
    %1878 = vmatpush2.msra.mxu0 0.0
    %1879 = vmatprep.subr.mxu0 0.0
    %1880 = vmatpush2.msra.mxu0 0.0
    %1881 = vmatprep.subr.mxu0 0.0
    %1882 = vmatpush2.msra.mxu0 0.0
    %1883 = vmatprep.mubr.f32.mxu0 0.0
    %1884 = vmatmul.mubr.f32.gmra.mxu0 %v1746
    %v1885 = vpop.f32.mrf.mxu0
    %v1886 = vadd.f32 %v1807, %v1885
    %v1887 = vpop.f32.mrf.mxu0
    %v1888 = vadd.f32 %v1811, %v1887
    %1889 = vmatprep.mubr.f32.mxu0 0.0
    %1890 = vmatmul.mubr.f32.gmra.mxu0 %v1747
    %v1891 = vpop.f32.mrf.mxu0
    %v1892 = vadd.f32 %v1807, %v1891
    %v1893 = vpop.f32.mrf.mxu0
    %v1894 = vadd.f32 %v1811, %v1893
    %1895 = vmatprep.mubr.f32.mxu0 0.0
    %1896 = vmatmul.mubr.f32.gmra.mxu0 %v1748
    %v1897 = vpop.f32.mrf.mxu0
    %v1898 = vadd.f32 %v1807, %v1897
    %v1899 = vpop.f32.mrf.mxu0
    %v1900 = vadd.f32 %v1811, %v1899
    %1901 = vmatprep.mubr.f32.mxu0 0.0
    %1902 = vmatmul.mubr.f32.gmra.mxu0 %v1749
    %v1903 = vpop.f32.mrf.mxu0
    %v1904 = vadd.f32 %v1807, %v1903
    %v1905 = vpop.f32.mrf.mxu0
    %v1906 = vadd.f32 %v1811, %v1905
    %1907 = vmatprep.mubr.f32.mxu0 0.0
    %1908 = vmatmul.mubr.f32.gmra.mxu0 %v1750
    %v1909 = vpop.f32.mrf.mxu0
    %v1910 = vadd.f32 %v1807, %v1909
    %v1911 = vpop.f32.mrf.mxu0
    %v1912 = vadd.f32 %v1811, %v1911
    %1913 = vmatprep.mubr.f32.mxu0 0.0
    %1914 = vmatmul.mubr.f32.gmra.mxu0 %v1751
    %v1915 = vpop.f32.mrf.mxu0
    %v1916 = vadd.f32 %v1807, %v1915
    %v1917 = vpop.f32.mrf.mxu0
    %v1918 = vadd.f32 %v1811, %v1917
    %1919 = vmatprep.mubr.f32.mxu0 0.0
    %1920 = vmatmul.mubr.f32.gmra.mxu0 %v1752
    %v1921 = vpop.f32.mrf.mxu0
    %v1922 = vadd.f32 %v1807, %v1921
    %v1923 = vpop.f32.mrf.mxu0
    %v1924 = vadd.f32 %v1811, %v1923
    %1925 = vmatprep.mubr.f32.mxu0 0.0
    %1926 = vmatmul.mubr.f32.gmra.mxu0 %v1753
    %v1927 = vpop.f32.mrf.mxu0
    %v1928 = vadd.f32 %v1807, %v1927
    %v1929 = vpop.f32.mrf.mxu0
    %v1930 = vadd.f32 %v1811, %v1929
    %1931 = vdwg.mxu0
    %1932 = vmatprep.subr.mxu0 0.0
    %1933 = vmatpush1.msra.mxu0 %v1801
    %1934 = vmatprep.subr.mxu0 0.0
    %1935 = vmatpush1.msra.mxu0 %v1798
    %1936 = vmatprep.subr.mxu0 0.0
    %1937 = vmatpush1.msra.mxu0 %v1795
    %1938 = vmatprep.subr.mxu0 0.0
    %1939 = vmatpush1.msra.mxu0 %v1792
    %1940 = vmatprep.subr.mxu0 0.0
    %1941 = vmatpush1.msra.mxu0 %v1789
    %1942 = vmatprep.subr.mxu0 0.0
    %1943 = vmatpush1.msra.mxu0 %v1786
    %1944 = vmatprep.subr.mxu0 0.0
    %1945 = vmatpush1.msra.mxu0 %v1783
    %1946 = vmatprep.subr.mxu0 0.0
    %1947 = vmatpush1.msra.mxu0 %v1780
    %1948 = vmatprep.subr.mxu0 0.0
    %1949 = vmatpush1.msra.mxu0 %v1777
    %1950 = vmatprep.subr.mxu0 0.0
    %1951 = vmatpush1.msra.mxu0 %v1774
    %1952 = vmatprep.subr.mxu0 0.0
    %1953 = vmatpush1.msra.mxu0 %v1771
    %1954 = vmatprep.subr.mxu0 0.0
    %1955 = vmatpush1.msra.mxu0 %v1768
    %1956 = vmatprep.subr.mxu0 0.0
    %1957 = vmatpush1.msra.mxu0 %v1765
    %1958 = vmatprep.subr.mxu0 0.0
    %1959 = vmatpush1.msra.mxu0 %v1762
    %1960 = vmatprep.subr.mxu0 0.0
    %1961 = vmatpush1.msra.mxu0 %v1759
    %1962 = vmatprep.subr.mxu0 0.0
    %1963 = vmatpush1.msra.mxu0 %v1756
    %1964 = vmatprep.subr.mxu0 0.0
    %1965 = vmatpush2.msra.mxu0 0.0
    %1966 = vmatprep.subr.mxu0 0.0
    %1967 = vmatpush2.msra.mxu0 0.0
    %1968 = vmatprep.subr.mxu0 0.0
    %1969 = vmatpush2.msra.mxu0 0.0
    %1970 = vmatprep.subr.mxu0 0.0
    %1971 = vmatpush2.msra.mxu0 0.0
    %1972 = vmatprep.subr.mxu0 0.0
    %1973 = vmatpush2.msra.mxu0 0.0
    %1974 = vmatprep.subr.mxu0 0.0
    %1975 = vmatpush2.msra.mxu0 0.0
    %1976 = vmatprep.subr.mxu0 0.0
    %1977 = vmatpush2.msra.mxu0 0.0
    %1978 = vmatprep.subr.mxu0 0.0
    %1979 = vmatpush2.msra.mxu0 0.0
    %1980 = vmatprep.subr.mxu0 0.0
    %1981 = vmatpush2.msra.mxu0 0.0
    %1982 = vmatprep.subr.mxu0 0.0
    %1983 = vmatpush2.msra.mxu0 0.0
    %1984 = vmatprep.subr.mxu0 0.0
    %1985 = vmatpush2.msra.mxu0 0.0
    %1986 = vmatprep.subr.mxu0 0.0
    %1987 = vmatpush2.msra.mxu0 0.0
    %1988 = vmatprep.subr.mxu0 0.0
    %1989 = vmatpush2.msra.mxu0 0.0
    %1990 = vmatprep.subr.mxu0 0.0
    %1991 = vmatpush2.msra.mxu0 0.0
    %1992 = vmatprep.subr.mxu0 0.0
    %1993 = vmatpush2.msra.mxu0 0.0
    %1994 = vmatprep.subr.mxu0 0.0
    %1995 = vmatpush2.msra.mxu0 0.0
    %1996 = vmatprep.mubr.f32.mxu0 0.0
    %1997 = vmatmul.mubr.f32.gmra.mxu0 %v1746
    %v1998 = vpop.f32.mrf.mxu0
    %v1999 = vadd.f32 %v1815, %v1998
    %v2000 = vpop.f32.mrf.mxu0
    %2001 = vmatprep.mubr.f32.mxu0 0.0
    %2002 = vmatmul.mubr.f32.gmra.mxu0 %v1747
    %v2003 = vpop.f32.mrf.mxu0
    %v2004 = vadd.f32 %v1815, %v2003
    %v2005 = vpop.f32.mrf.mxu0
    %2006 = vmatprep.mubr.f32.mxu0 0.0
    %2007 = vmatmul.mubr.f32.gmra.mxu0 %v1748
    %v2008 = vpop.f32.mrf.mxu0
    %v2009 = vadd.f32 %v1815, %v2008
    %v2010 = vpop.f32.mrf.mxu0
    %2011 = vmatprep.mubr.f32.mxu0 0.0
    %2012 = vmatmul.mubr.f32.gmra.mxu0 %v1749
    %v2013 = vpop.f32.mrf.mxu0
    %v2014 = vadd.f32 %v1815, %v2013
    %v2015 = vpop.f32.mrf.mxu0
    %2016 = vmatprep.mubr.f32.mxu0 0.0
    %2017 = vmatmul.mubr.f32.gmra.mxu0 %v1750
    %v2018 = vpop.f32.mrf.mxu0
    %v2019 = vadd.f32 %v1815, %v2018
    %v2020 = vpop.f32.mrf.mxu0
    %2021 = vmatprep.mubr.f32.mxu0 0.0
    %2022 = vmatmul.mubr.f32.gmra.mxu0 %v1751
    %v2023 = vpop.f32.mrf.mxu0
    %v2024 = vadd.f32 %v1815, %v2023
    %v2025 = vpop.f32.mrf.mxu0
    %2026 = vmatprep.mubr.f32.mxu0 0.0
    %2027 = vmatmul.mubr.f32.gmra.mxu0 %v1752
    %v2028 = vpop.f32.mrf.mxu0
    %v2029 = vadd.f32 %v1815, %v2028
    %v2030 = vpop.f32.mrf.mxu0
    %2031 = vmatprep.mubr.f32.mxu0 0.0
    %2032 = vmatmul.mubr.f32.gmra.mxu0 %v1753
    %v2033 = vpop.f32.mrf.mxu0
    %v2034 = vadd.f32 %v1815, %v2033
    %v2035 = vpop.f32.mrf.mxu0
    %2036 = vdwg.mxu0
    %2037 = vst [vmem:[#allocation2] sm:$0xff] %v1886
    %2038 = vst [vmem:[#allocation2 + $0x8] sm:$0xff] %v1888
    %2039 = vst [vmem:[#allocation2 + $0x10] sm:$0xff] %v1999
    %2040 = vst [vmem:[#allocation2 + $0x18] sm:$0xff] %v1892
    %2041 = vst [vmem:[#allocation2 + $0x20] sm:$0xff] %v1894
    %2042 = vst [vmem:[#allocation2 + $0x28] sm:$0xff] %v2004
    %2043 = vst [vmem:[#allocation2 + $0x30] sm:$0xff] %v1898
    %2044 = vst [vmem:[#allocation2 + $0x38] sm:$0xff] %v1900
    %2045 = vst [vmem:[#allocation2 + $0x40] sm:$0xff] %v2009
    %2046 = vst [vmem:[#allocation2 + $0x48] sm:$0xff] %v1904
    %2047 = vst [vmem:[#allocation2 + $0x50] sm:$0xff] %v1906
    %2048 = vst [vmem:[#allocation2 + $0x58] sm:$0xff] %v2014
    %2049 = vst [vmem:[#allocation2 + $0x60] sm:$0xff] %v1910
    %2050 = vst [vmem:[#allocation2 + $0x68] sm:$0xff] %v1912
    %2051 = vst [vmem:[#allocation2 + $0x70] sm:$0xff] %v2019
    %2052 = vst [vmem:[#allocation2 + $0x78] sm:$0xff] %v1916
    %2053 = vst [vmem:[#allocation2 + $0x80] sm:$0xff] %v1918
    %2054 = vst [vmem:[#allocation2 + $0x88] sm:$0xff] %v2024
    %2055 = vst [vmem:[#allocation2 + $0x90] sm:$0xff] %v1922
    %2056 = vst [vmem:[#allocation2 + $0x98] sm:$0xff] %v1924
    %2057 = vst [vmem:[#allocation2 + $0xa0] sm:$0xff] %v2029
    %2058 = vst [vmem:[#allocation2 + $0xa8] sm:$0xff] %v1928
    %2059 = vst [vmem:[#allocation2 + $0xb0] sm:$0xff] %v1930
    %2060 = vst [vmem:[#allocation2 + $0xb8] sm:$0xff] %v2034
    %v2061 = vld [vmem:[%s6] sm:$0xff]
    %v2062 = vld [vmem:[%s6 + $0x8] sm:$0xff]
    %v2063 = vld [vmem:[%s6 + $0x10] sm:$0xff]
    %v2064 = vld [vmem:[%s6 + $0x18] sm:$0xff]
    %v2065 = vld [vmem:[%s6 + $0x20] sm:$0xff]
    %v2066 = vld [vmem:[%s6 + $0x28] sm:$0xff]
    %v2067 = vld [vmem:[%s6 + $0x30] sm:$0xff]
    %v2068 = vld [vmem:[%s6 + $0x38] sm:$0xff]
    %v2069 = vld [vmem:[%s6 + $0x40] sm:$0xff]
    %v2070 = vld [vmem:[%s6 + $0x48] sm:$0xff]
    %v2071 = vld [vmem:[%s6 + $0x50] sm:$0xff]
    %v2072 = vld [vmem:[%s6 + $0x58] sm:$0xff]
    %v2073 = vld [vmem:[%s6 + $0x60] sm:$0xff]
    %v2074 = vld [vmem:[%s6 + $0x68] sm:$0xff]
    %v2075 = vld [vmem:[%s6 + $0x70] sm:$0xff]
    %v2076 = vld [vmem:[%s6 + $0x78] sm:$0xff]
    %v2077 = vld [vmem:[%s6 + $0x80] sm:$0xff]
    %v2078 = vld [vmem:[%s6 + $0x88] sm:$0xff]
    %v2079 = vld [vmem:[%s6 + $0x90] sm:$0xff]
    %v2080 = vld [vmem:[%s6 + $0x98] sm:$0xff]
    %v2081 = vld [vmem:[%s6 + $0xa0] sm:$0xff]
    %v2082 = vld [vmem:[%s6 + $0xa8] sm:$0xff]
    %v2083 = vld [vmem:[%s6 + $0xb0] sm:$0xff]
    %v2084 = vld [vmem:[%s6 + $0xb8] sm:$0xff]
    %v2085 = vld [vmem:[%s6 + $0xc0] sm:$0xff]
    %v2086 = vld [vmem:[%s6 + $0xc8] sm:$0xff]
    %v2087 = vld [vmem:[%s6 + $0xd0] sm:$0xff]
    %v2088 = vld [vmem:[%s6 + $0xd8] sm:$0xff]
    %v2089 = vld [vmem:[%s6 + $0xe0] sm:$0xff]
    %v2090 = vld [vmem:[%s6 + $0xe8] sm:$0xff]
    %v2091 = vld [vmem:[%s6 + $0xf0] sm:$0xff]
    %v2092 = vld [vmem:[%s6 + $0xf8] sm:$0xff]
    %v2093 = vld [vmem:[%s6 + $0x100] sm:$0xff]
    %v2094 = vld [vmem:[%s6 + $0x108] sm:$0xff]
    %v2095 = vld [vmem:[%s6 + $0x110] sm:$0xff]
    %v2096 = vld [vmem:[%s6 + $0x118] sm:$0xff]
    %v2097 = vld [vmem:[%s6 + $0x120] sm:$0xff]
    %v2098 = vld [vmem:[%s6 + $0x128] sm:$0xff]
    %v2099 = vld [vmem:[%s6 + $0x130] sm:$0xff]
    %v2100 = vld [vmem:[%s6 + $0x138] sm:$0xff]
    %v2101 = vld [vmem:[%s6 + $0x140] sm:$0xff]
    %v2102 = vld [vmem:[%s6 + $0x148] sm:$0xff]
    %v2103 = vld [vmem:[%s6 + $0x150] sm:$0xff]
    %v2104 = vld [vmem:[%s6 + $0x158] sm:$0xff]
    %v2105 = vld [vmem:[%s6 + $0x160] sm:$0xff]
    %v2106 = vld [vmem:[%s6 + $0x168] sm:$0xff]
    %v2107 = vld [vmem:[%s6 + $0x170] sm:$0xff]
    %v2108 = vld [vmem:[%s6 + $0x178] sm:$0xff]
    %v2109 = vld [vmem:[%s8] sm:$0x1]
    %v2111 = vlaneseq
    %v2112 = vshrl.u32 %v2111, 7
    %v2113 = vsub.s32 0, %v2112
    %v2114 = vrot.slane %v2109, %v2113
    %v2116 = vld [vmem:[#allocation2] sm:$0xff]
    %v2117 = vld [vmem:[#allocation2 + $0x8] sm:$0xff]
    %v2118 = vld [vmem:[#allocation2 + $0x10] sm:$0xff]
    %2119 = vmatprep.subr.mxu0 %v2107
    %2120 = vmatpush1.msra.mxu0 %v2106
    %2121 = vmatprep.subr.mxu0 %v2104
    %2122 = vmatpush1.msra.mxu0 %v2103
    %2123 = vmatprep.subr.mxu0 %v2101
    %2124 = vmatpush1.msra.mxu0 %v2100
    %2125 = vmatprep.subr.mxu0 %v2098
    %2126 = vmatpush1.msra.mxu0 %v2097
    %2127 = vmatprep.subr.mxu0 %v2095
    %2128 = vmatpush1.msra.mxu0 %v2094
    %2129 = vmatprep.subr.mxu0 %v2092
    %2130 = vmatpush1.msra.mxu0 %v2091
    %2131 = vmatprep.subr.mxu0 %v2089
    %2132 = vmatpush1.msra.mxu0 %v2088
    %2133 = vmatprep.subr.mxu0 %v2086
    %2134 = vmatpush1.msra.mxu0 %v2085
    %2135 = vmatprep.subr.mxu0 %v2083
    %2136 = vmatpush1.msra.mxu0 %v2082
    %2137 = vmatprep.subr.mxu0 %v2080
    %2138 = vmatpush1.msra.mxu0 %v2079
    %2139 = vmatprep.subr.mxu0 %v2077
    %2140 = vmatpush1.msra.mxu0 %v2076
    %2141 = vmatprep.subr.mxu0 %v2074
    %2142 = vmatpush1.msra.mxu0 %v2073
    %2143 = vmatprep.subr.mxu0 %v2071
    %2144 = vmatpush1.msra.mxu0 %v2070
    %2145 = vmatprep.subr.mxu0 %v2068
    %2146 = vmatpush1.msra.mxu0 %v2067
    %2147 = vmatprep.subr.mxu0 %v2065
    %2148 = vmatpush1.msra.mxu0 %v2064
    %2149 = vmatprep.subr.mxu0 %v2062
    %2150 = vmatpush1.msra.mxu0 %v2061
    %2151 = vmatprep.subr.mxu0 0.0
    %2152 = vmatpush2.msra.mxu0 0.0
    %2153 = vmatprep.subr.mxu0 0.0
    %2154 = vmatpush2.msra.mxu0 0.0
    %2155 = vmatprep.subr.mxu0 0.0
    %2156 = vmatpush2.msra.mxu0 0.0
    %2157 = vmatprep.subr.mxu0 0.0
    %2158 = vmatpush2.msra.mxu0 0.0
    %2159 = vmatprep.subr.mxu0 0.0
    %2160 = vmatpush2.msra.mxu0 0.0
    %2161 = vmatprep.subr.mxu0 0.0
    %2162 = vmatpush2.msra.mxu0 0.0
    %2163 = vmatprep.subr.mxu0 0.0
    %2164 = vmatpush2.msra.mxu0 0.0
    %2165 = vmatprep.subr.mxu0 0.0
    %2166 = vmatpush2.msra.mxu0 0.0
    %2167 = vmatprep.subr.mxu0 0.0
    %2168 = vmatpush2.msra.mxu0 0.0
    %2169 = vmatprep.subr.mxu0 0.0
    %2170 = vmatpush2.msra.mxu0 0.0
    %2171 = vmatprep.subr.mxu0 0.0
    %2172 = vmatpush2.msra.mxu0 0.0
    %2173 = vmatprep.subr.mxu0 0.0
    %2174 = vmatpush2.msra.mxu0 0.0
    %2175 = vmatprep.subr.mxu0 0.0
    %2176 = vmatpush2.msra.mxu0 0.0
    %2177 = vmatprep.subr.mxu0 0.0
    %2178 = vmatpush2.msra.mxu0 0.0
    %2179 = vmatprep.subr.mxu0 0.0
    %2180 = vmatpush2.msra.mxu0 0.0
    %2181 = vmatprep.subr.mxu0 0.0
    %2182 = vmatpush2.msra.mxu0 0.0
    %2183 = vmatprep.mubr.f32.mxu0 0.0
    %2184 = vmatmul.mubr.f32.gmra.mxu0 0.0
    %v2185 = vpop.f32.mrf.mxu0
    %v2186 = vadd.f32 0.0, %v2185
    %v2187 = vpop.f32.mrf.mxu0
    %v2188 = vadd.f32 0.0, %v2187
    %2189 = vdwg.mxu0
    %2190 = vmatprep.subr.mxu0 0.0
    %2191 = vmatpush1.msra.mxu0 %v2108
    %2192 = vmatprep.subr.mxu0 0.0
    %2193 = vmatpush1.msra.mxu0 %v2105
    %2194 = vmatprep.subr.mxu0 0.0
    %2195 = vmatpush1.msra.mxu0 %v2102
    %2196 = vmatprep.subr.mxu0 0.0
    %2197 = vmatpush1.msra.mxu0 %v2099
    %2198 = vmatprep.subr.mxu0 0.0
    %2199 = vmatpush1.msra.mxu0 %v2096
    %2200 = vmatprep.subr.mxu0 0.0
    %2201 = vmatpush1.msra.mxu0 %v2093
    %2202 = vmatprep.subr.mxu0 0.0
    %2203 = vmatpush1.msra.mxu0 %v2090
    %2204 = vmatprep.subr.mxu0 0.0
    %2205 = vmatpush1.msra.mxu0 %v2087
    %2206 = vmatprep.subr.mxu0 0.0
    %2207 = vmatpush1.msra.mxu0 %v2084
    %2208 = vmatprep.subr.mxu0 0.0
    %2209 = vmatpush1.msra.mxu0 %v2081
    %2210 = vmatprep.subr.mxu0 0.0
    %2211 = vmatpush1.msra.mxu0 %v2078
    %2212 = vmatprep.subr.mxu0 0.0
    %2213 = vmatpush1.msra.mxu0 %v2075
    %2214 = vmatprep.subr.mxu0 0.0
    %2215 = vmatpush1.msra.mxu0 %v2072
    %2216 = vmatprep.subr.mxu0 0.0
    %2217 = vmatpush1.msra.mxu0 %v2069
    %2218 = vmatprep.subr.mxu0 0.0
    %2219 = vmatpush1.msra.mxu0 %v2066
    %2220 = vmatprep.subr.mxu0 0.0
    %2221 = vmatpush1.msra.mxu0 %v2063
    %2222 = vmatprep.subr.mxu0 0.0
    %2223 = vmatpush2.msra.mxu0 0.0
    %2224 = vmatprep.subr.mxu0 0.0
    %2225 = vmatpush2.msra.mxu0 0.0
    %2226 = vmatprep.subr.mxu0 0.0
    %2227 = vmatpush2.msra.mxu0 0.0
    %2228 = vmatprep.subr.mxu0 0.0
    %2229 = vmatpush2.msra.mxu0 0.0
    %2230 = vmatprep.subr.mxu0 0.0
    %2231 = vmatpush2.msra.mxu0 0.0
    %2232 = vmatprep.subr.mxu0 0.0
    %2233 = vmatpush2.msra.mxu0 0.0
    %2234 = vmatprep.subr.mxu0 0.0
    %2235 = vmatpush2.msra.mxu0 0.0
    %2236 = vmatprep.subr.mxu0 0.0
    %2237 = vmatpush2.msra.mxu0 0.0
    %2238 = vmatprep.subr.mxu0 0.0
    %2239 = vmatpush2.msra.mxu0 0.0
    %2240 = vmatprep.subr.mxu0 0.0
    %2241 = vmatpush2.msra.mxu0 0.0
    %2242 = vmatprep.subr.mxu0 0.0
    %2243 = vmatpush2.msra.mxu0 0.0
    %2244 = vmatprep.subr.mxu0 0.0
    %2245 = vmatpush2.msra.mxu0 0.0
    %2246 = vmatprep.subr.mxu0 0.0
    %2247 = vmatpush2.msra.mxu0 0.0
    %2248 = vmatprep.subr.mxu0 0.0
    %2249 = vmatpush2.msra.mxu0 0.0
    %2250 = vmatprep.subr.mxu0 0.0
    %2251 = vmatpush2.msra.mxu0 0.0
    %2252 = vmatprep.subr.mxu0 0.0
    %2253 = vmatpush2.msra.mxu0 0.0
    %2254 = vmatprep.mubr.f32.mxu0 0.0
    %2255 = vmatmul.mubr.f32.gmra.mxu0 0.0
    %v2256 = vpop.f32.mrf.mxu0
    %v2257 = vadd.f32 0.0, %v2256
    %v2258 = vpop.f32.mrf.mxu0
    %2259 = vdwg.mxu0
    %v2260 = vadd.f32 %v2116, %v2186
    %v2261 = vxor.u32 %v2260, 2147483648
    %v2262 = vmul.f32 %v2261, 1.442695
    %v2263 = vpow.pop %v2262
    %v2264 = vadd.f32 %v2263, 1.0
    %v2265 = vrcp.pop %v2264
    %v2266 = vmul.f32 1.0, %v2265
    %v2267 = vadd.f32 %v2117, %v2188
    %v2268 = vxor.u32 %v2267, 2147483648
    %v2269 = vmul.f32 %v2268, 1.442695
    %v2270 = vpow.pop %v2269
    %v2271 = vadd.f32 %v2270, 1.0
    %v2272 = vrcp.pop %v2271
    %v2273 = vmul.f32 1.0, %v2272
    %v2274 = vadd.f32 %v2257, %v2114
    %v2275 = vmul.f32 %v2266, %v2274
    %v2276 = vadd.f32 %v2118, %v2275
    %v2277 = vtanh.pop %v2276
    %v2278 = vsub.f32 1.0, %v2273
    %v2279 = vmul.f32 %v2278, %v2277
    %v2280 = vmul.f32 %v2273, 0.0
    %v2281 = vadd.f32 %v2279, %v2280
    %2282 = vst [vmem:[#allocation3] sm:$0xff] %v2281
    %v2283 = vld [vmem:[%s562] sm:$0xff]
    %v2284 = vld [vmem:[%s562 + $0x8] sm:$0xff]
    %v2285 = vld [vmem:[%s562 + $0x10] sm:$0xff]
    %2286 = vmatprep.subr.mxu0 %v2107
    %2287 = vmatpush1.msra.mxu0 %v2106
    %2288 = vmatprep.subr.mxu0 %v2104
    %2289 = vmatpush1.msra.mxu0 %v2103
    %2290 = vmatprep.subr.mxu0 %v2101
    %2291 = vmatpush1.msra.mxu0 %v2100
    %2292 = vmatprep.subr.mxu0 %v2098
    %2293 = vmatpush1.msra.mxu0 %v2097
    %2294 = vmatprep.subr.mxu0 %v2095
    %2295 = vmatpush1.msra.mxu0 %v2094
    %2296 = vmatprep.subr.mxu0 %v2092
    %2297 = vmatpush1.msra.mxu0 %v2091
    %2298 = vmatprep.subr.mxu0 %v2089
    %2299 = vmatpush1.msra.mxu0 %v2088
    %2300 = vmatprep.subr.mxu0 %v2086
    %2301 = vmatpush1.msra.mxu0 %v2085
    %2302 = vmatprep.subr.mxu0 %v2083
    %2303 = vmatpush1.msra.mxu0 %v2082
    %2304 = vmatprep.subr.mxu0 %v2080
    %2305 = vmatpush1.msra.mxu0 %v2079
    %2306 = vmatprep.subr.mxu0 %v2077
    %2307 = vmatpush1.msra.mxu0 %v2076
    %2308 = vmatprep.subr.mxu0 %v2074
    %2309 = vmatpush1.msra.mxu0 %v2073
    %2310 = vmatprep.subr.mxu0 %v2071
    %2311 = vmatpush1.msra.mxu0 %v2070
    %2312 = vmatprep.subr.mxu0 %v2068
    %2313 = vmatpush1.msra.mxu0 %v2067
    %2314 = vmatprep.subr.mxu0 %v2065
    %2315 = vmatpush1.msra.mxu0 %v2064
    %2316 = vmatprep.subr.mxu0 %v2062
    %2317 = vmatpush1.msra.mxu0 %v2061
    %2318 = vmatprep.subr.mxu0 0.0
    %2319 = vmatpush2.msra.mxu0 0.0
    %2320 = vmatprep.subr.mxu0 0.0
    %2321 = vmatpush2.msra.mxu0 0.0
    %2322 = vmatprep.subr.mxu0 0.0
    %2323 = vmatpush2.msra.mxu0 0.0
    %2324 = vmatprep.subr.mxu0 0.0
    %2325 = vmatpush2.msra.mxu0 0.0
    %2326 = vmatprep.subr.mxu0 0.0
    %2327 = vmatpush2.msra.mxu0 0.0
    %2328 = vmatprep.subr.mxu0 0.0
    %2329 = vmatpush2.msra.mxu0 0.0
    %2330 = vmatprep.subr.mxu0 0.0
    %2331 = vmatpush2.msra.mxu0 0.0
    %2332 = vmatprep.subr.mxu0 0.0
    %2333 = vmatpush2.msra.mxu0 0.0
    %2334 = vmatprep.subr.mxu0 0.0
    %2335 = vmatpush2.msra.mxu0 0.0
    %2336 = vmatprep.subr.mxu0 0.0
    %2337 = vmatpush2.msra.mxu0 0.0
    %2338 = vmatprep.subr.mxu0 0.0
    %2339 = vmatpush2.msra.mxu0 0.0
    %2340 = vmatprep.subr.mxu0 0.0
    %2341 = vmatpush2.msra.mxu0 0.0
    %2342 = vmatprep.subr.mxu0 0.0
    %2343 = vmatpush2.msra.mxu0 0.0
    %2344 = vmatprep.subr.mxu0 0.0
    %2345 = vmatpush2.msra.mxu0 0.0
    %2346 = vmatprep.subr.mxu0 0.0
    %2347 = vmatpush2.msra.mxu0 0.0
    %2348 = vmatprep.subr.mxu0 0.0
    %2349 = vmatpush2.msra.mxu0 0.0
    %2350 = vmatprep.mubr.f32.mxu0 0.0
    %2351 = vmatmul.mubr.f32.gmra.mxu0 %v2281
    %v2352 = vpop.f32.mrf.mxu0
    %v2353 = vadd.f32 0.0, %v2352
    %v2354 = vpop.f32.mrf.mxu0
    %v2355 = vadd.f32 0.0, %v2354
    %2356 = vdwg.mxu0
    %2357 = vmatprep.subr.mxu0 0.0
    %2358 = vmatpush1.msra.mxu0 %v2108
    %2359 = vmatprep.subr.mxu0 0.0
    %2360 = vmatpush1.msra.mxu0 %v2105
    %2361 = vmatprep.subr.mxu0 0.0
    %2362 = vmatpush1.msra.mxu0 %v2102
    %2363 = vmatprep.subr.mxu0 0.0
    %2364 = vmatpush1.msra.mxu0 %v2099
    %2365 = vmatprep.subr.mxu0 0.0
    %2366 = vmatpush1.msra.mxu0 %v2096
    %2367 = vmatprep.subr.mxu0 0.0
    %2368 = vmatpush1.msra.mxu0 %v2093
    %2369 = vmatprep.subr.mxu0 0.0
    %2370 = vmatpush1.msra.mxu0 %v2090
    %2371 = vmatprep.subr.mxu0 0.0
    %2372 = vmatpush1.msra.mxu0 %v2087
    %2373 = vmatprep.subr.mxu0 0.0
    %2374 = vmatpush1.msra.mxu0 %v2084
    %2375 = vmatprep.subr.mxu0 0.0
    %2376 = vmatpush1.msra.mxu0 %v2081
    %2377 = vmatprep.subr.mxu0 0.0
    %2378 = vmatpush1.msra.mxu0 %v2078
    %2379 = vmatprep.subr.mxu0 0.0
    %2380 = vmatpush1.msra.mxu0 %v2075
    %2381 = vmatprep.subr.mxu0 0.0
    %2382 = vmatpush1.msra.mxu0 %v2072
    %2383 = vmatprep.subr.mxu0 0.0
    %2384 = vmatpush1.msra.mxu0 %v2069
    %2385 = vmatprep.subr.mxu0 0.0
    %2386 = vmatpush1.msra.mxu0 %v2066
    %2387 = vmatprep.subr.mxu0 0.0
    %2388 = vmatpush1.msra.mxu0 %v2063
    %2389 = vmatprep.subr.mxu0 0.0
    %2390 = vmatpush2.msra.mxu0 0.0
    %2391 = vmatprep.subr.mxu0 0.0
    %2392 = vmatpush2.msra.mxu0 0.0
    %2393 = vmatprep.subr.mxu0 0.0
    %2394 = vmatpush2.msra.mxu0 0.0
    %2395 = vmatprep.subr.mxu0 0.0
    %2396 = vmatpush2.msra.mxu0 0.0
    %2397 = vmatprep.subr.mxu0 0.0
    %2398 = vmatpush2.msra.mxu0 0.0
    %2399 = vmatprep.subr.mxu0 0.0
    %2400 = vmatpush2.msra.mxu0 0.0
    %2401 = vmatprep.subr.mxu0 0.0
    %2402 = vmatpush2.msra.mxu0 0.0
    %2403 = vmatprep.subr.mxu0 0.0
    %2404 = vmatpush2.msra.mxu0 0.0
    %2405 = vmatprep.subr.mxu0 0.0
    %2406 = vmatpush2.msra.mxu0 0.0
    %2407 = vmatprep.subr.mxu0 0.0
    %2408 = vmatpush2.msra.mxu0 0.0
    %2409 = vmatprep.subr.mxu0 0.0
    %2410 = vmatpush2.msra.mxu0 0.0
    %2411 = vmatprep.subr.mxu0 0.0
    %2412 = vmatpush2.msra.mxu0 0.0
    %2413 = vmatprep.subr.mxu0 0.0
    %2414 = vmatpush2.msra.mxu0 0.0
    %2415 = vmatprep.subr.mxu0 0.0
    %2416 = vmatpush2.msra.mxu0 0.0
    %2417 = vmatprep.subr.mxu0 0.0
    %2418 = vmatpush2.msra.mxu0 0.0
    %2419 = vmatprep.subr.mxu0 0.0
    %2420 = vmatpush2.msra.mxu0 0.0
    %2421 = vmatprep.mubr.f32.mxu0 0.0
    %2422 = vmatmul.mubr.f32.gmra.mxu0 %v2281
    %v2423 = vpop.f32.mrf.mxu0
    %v2424 = vadd.f32 0.0, %v2423
    %v2425 = vpop.f32.mrf.mxu0
    %2426 = vdwg.mxu0
    %v2427 = vadd.f32 %v2283, %v2353
    %v2428 = vxor.u32 %v2427, 2147483648
    %v2429 = vmul.f32 %v2428, 1.442695
    %v2430 = vpow.pop %v2429
    %v2431 = vadd.f32 %v2430, 1.0
    %v2432 = vrcp.pop %v2431
    %v2433 = vmul.f32 1.0, %v2432
    %v2434 = vadd.f32 %v2284, %v2355
    %v2435 = vxor.u32 %v2434, 2147483648
    %v2436 = vmul.f32 %v2435, 1.442695
    %v2437 = vpow.pop %v2436
    %v2438 = vadd.f32 %v2437, 1.0
    %v2439 = vrcp.pop %v2438
    %v2440 = vmul.f32 1.0, %v2439
    %v2441 = vadd.f32 %v2424, %v2114
    %v2442 = vmul.f32 %v2433, %v2441
    %v2443 = vadd.f32 %v2285, %v2442
    %v2444 = vtanh.pop %v2443
    %v2445 = vsub.f32 1.0, %v2440
    %v2446 = vmul.f32 %v2445, %v2444
    %v2447 = vmul.f32 %v2440, %v2281
    %v2448 = vadd.f32 %v2446, %v2447
    %2449 = vst [vmem:[%s729] sm:$0xff] %v2448
    %v2450 = vld [vmem:[%s731] sm:$0xff]
    %v2451 = vld [vmem:[%s731 + $0x8] sm:$0xff]
    %v2452 = vld [vmem:[%s731 + $0x10] sm:$0xff]
    %2453 = vmatprep.subr.mxu0 %v2107
    %2454 = vmatpush1.msra.mxu0 %v2106
    %2455 = vmatprep.subr.mxu0 %v2104
    %2456 = vmatpush1.msra.mxu0 %v2103
    %2457 = vmatprep.subr.mxu0 %v2101
    %2458 = vmatpush1.msra.mxu0 %v2100
    %2459 = vmatprep.subr.mxu0 %v2098
    %2460 = vmatpush1.msra.mxu0 %v2097
    %2461 = vmatprep.subr.mxu0 %v2095
    %2462 = vmatpush1.msra.mxu0 %v2094
    %2463 = vmatprep.subr.mxu0 %v2092
    %2464 = vmatpush1.msra.mxu0 %v2091
    %2465 = vmatprep.subr.mxu0 %v2089
    %2466 = vmatpush1.msra.mxu0 %v2088
    %2467 = vmatprep.subr.mxu0 %v2086
    %2468 = vmatpush1.msra.mxu0 %v2085
    %2469 = vmatprep.subr.mxu0 %v2083
    %2470 = vmatpush1.msra.mxu0 %v2082
    %2471 = vmatprep.subr.mxu0 %v2080
    %2472 = vmatpush1.msra.mxu0 %v2079
    %2473 = vmatprep.subr.mxu0 %v2077
    %2474 = vmatpush1.msra.mxu0 %v2076
    %2475 = vmatprep.subr.mxu0 %v2074
    %2476 = vmatpush1.msra.mxu0 %v2073
    %2477 = vmatprep.subr.mxu0 %v2071
    %2478 = vmatpush1.msra.mxu0 %v2070
    %2479 = vmatprep.subr.mxu0 %v2068
    %2480 = vmatpush1.msra.mxu0 %v2067
    %2481 = vmatprep.subr.mxu0 %v2065
    %2482 = vmatpush1.msra.mxu0 %v2064
    %2483 = vmatprep.subr.mxu0 %v2062
    %2484 = vmatpush1.msra.mxu0 %v2061
    %2485 = vmatprep.subr.mxu0 0.0
    %2486 = vmatpush2.msra.mxu0 0.0
    %2487 = vmatprep.subr.mxu0 0.0
    %2488 = vmatpush2.msra.mxu0 0.0
    %2489 = vmatprep.subr.mxu0 0.0
    %2490 = vmatpush2.msra.mxu0 0.0
    %2491 = vmatprep.subr.mxu0 0.0
    %2492 = vmatpush2.msra.mxu0 0.0
    %2493 = vmatprep.subr.mxu0 0.0
    %2494 = vmatpush2.msra.mxu0 0.0
    %2495 = vmatprep.subr.mxu0 0.0
    %2496 = vmatpush2.msra.mxu0 0.0
    %2497 = vmatprep.subr.mxu0 0.0
    %2498 = vmatpush2.msra.mxu0 0.0
    %2499 = vmatprep.subr.mxu0 0.0
    %2500 = vmatpush2.msra.mxu0 0.0
    %2501 = vmatprep.subr.mxu0 0.0
    %2502 = vmatpush2.msra.mxu0 0.0
    %2503 = vmatprep.subr.mxu0 0.0
    %2504 = vmatpush2.msra.mxu0 0.0
    %2505 = vmatprep.subr.mxu0 0.0
    %2506 = vmatpush2.msra.mxu0 0.0
    %2507 = vmatprep.subr.mxu0 0.0
    %2508 = vmatpush2.msra.mxu0 0.0
    %2509 = vmatprep.subr.mxu0 0.0
    %2510 = vmatpush2.msra.mxu0 0.0
    %2511 = vmatprep.subr.mxu0 0.0
    %2512 = vmatpush2.msra.mxu0 0.0
    %2513 = vmatprep.subr.mxu0 0.0
    %2514 = vmatpush2.msra.mxu0 0.0
    %2515 = vmatprep.subr.mxu0 0.0
    %2516 = vmatpush2.msra.mxu0 0.0
    %2517 = vmatprep.mubr.f32.mxu0 0.0
    %2518 = vmatmul.mubr.f32.gmra.mxu0 %v2448
    %v2519 = vpop.f32.mrf.mxu0
    %v2520 = vadd.f32 0.0, %v2519
    %v2521 = vpop.f32.mrf.mxu0
    %v2522 = vadd.f32 0.0, %v2521
    %2523 = vdwg.mxu0
    %2524 = vmatprep.subr.mxu0 0.0
    %2525 = vmatpush1.msra.mxu0 %v2108
    %2526 = vmatprep.subr.mxu0 0.0
    %2527 = vmatpush1.msra.mxu0 %v2105
    %2528 = vmatprep.subr.mxu0 0.0
    %2529 = vmatpush1.msra.mxu0 %v2102
    %2530 = vmatprep.subr.mxu0 0.0
    %2531 = vmatpush1.msra.mxu0 %v2099
    %2532 = vmatprep.subr.mxu0 0.0
    %2533 = vmatpush1.msra.mxu0 %v2096
    %2534 = vmatprep.subr.mxu0 0.0
    %2535 = vmatpush1.msra.mxu0 %v2093
    %2536 = vmatprep.subr.mxu0 0.0
    %2537 = vmatpush1.msra.mxu0 %v2090
    %2538 = vmatprep.subr.mxu0 0.0
    %2539 = vmatpush1.msra.mxu0 %v2087
    %2540 = vmatprep.subr.mxu0 0.0
    %2541 = vmatpush1.msra.mxu0 %v2084
    %2542 = vmatprep.subr.mxu0 0.0
    %2543 = vmatpush1.msra.mxu0 %v2081
    %2544 = vmatprep.subr.mxu0 0.0
    %2545 = vmatpush1.msra.mxu0 %v2078
    %2546 = vmatprep.subr.mxu0 0.0
    %2547 = vmatpush1.msra.mxu0 %v2075
    %2548 = vmatprep.subr.mxu0 0.0
    %2549 = vmatpush1.msra.mxu0 %v2072
    %2550 = vmatprep.subr.mxu0 0.0
    %2551 = vmatpush1.msra.mxu0 %v2069
    %2552 = vmatprep.subr.mxu0 0.0
    %2553 = vmatpush1.msra.mxu0 %v2066
    %2554 = vmatprep.subr.mxu0 0.0
    %2555 = vmatpush1.msra.mxu0 %v2063
    %2556 = vmatprep.subr.mxu0 0.0
    %2557 = vmatpush2.msra.mxu0 0.0
    %2558 = vmatprep.subr.mxu0 0.0
    %2559 = vmatpush2.msra.mxu0 0.0
    %2560 = vmatprep.subr.mxu0 0.0
    %2561 = vmatpush2.msra.mxu0 0.0
    %2562 = vmatprep.subr.mxu0 0.0
    %2563 = vmatpush2.msra.mxu0 0.0
    %2564 = vmatprep.subr.mxu0 0.0
    %2565 = vmatpush2.msra.mxu0 0.0
    %2566 = vmatprep.subr.mxu0 0.0
    %2567 = vmatpush2.msra.mxu0 0.0
    %2568 = vmatprep.subr.mxu0 0.0
    %2569 = vmatpush2.msra.mxu0 0.0
    %2570 = vmatprep.subr.mxu0 0.0
    %2571 = vmatpush2.msra.mxu0 0.0
    %2572 = vmatprep.subr.mxu0 0.0
    %2573 = vmatpush2.msra.mxu0 0.0
    %2574 = vmatprep.subr.mxu0 0.0
    %2575 = vmatpush2.msra.mxu0 0.0
    %2576 = vmatprep.subr.mxu0 0.0
    %2577 = vmatpush2.msra.mxu0 0.0
    %2578 = vmatprep.subr.mxu0 0.0
    %2579 = vmatpush2.msra.mxu0 0.0
    %2580 = vmatprep.subr.mxu0 0.0
    %2581 = vmatpush2.msra.mxu0 0.0
    %2582 = vmatprep.subr.mxu0 0.0
    %2583 = vmatpush2.msra.mxu0 0.0
    %2584 = vmatprep.subr.mxu0 0.0
    %2585 = vmatpush2.msra.mxu0 0.0
    %2586 = vmatprep.subr.mxu0 0.0
    %2587 = vmatpush2.msra.mxu0 0.0
    %2588 = vmatprep.mubr.f32.mxu0 0.0
    %2589 = vmatmul.mubr.f32.gmra.mxu0 %v2448
    %v2590 = vpop.f32.mrf.mxu0
    %v2591 = vadd.f32 0.0, %v2590
    %v2592 = vpop.f32.mrf.mxu0
    %2593 = vdwg.mxu0
    %v2594 = vadd.f32 %v2450, %v2520
    %v2595 = vxor.u32 %v2594, 2147483648
    %v2596 = vmul.f32 %v2595, 1.442695
    %v2597 = vpow.pop %v2596
    %v2598 = vadd.f32 %v2597, 1.0
    %v2599 = vrcp.pop %v2598
    %v2600 = vmul.f32 1.0, %v2599
    %v2601 = vadd.f32 %v2451, %v2522
    %v2602 = vxor.u32 %v2601, 2147483648
    %v2603 = vmul.f32 %v2602, 1.442695
    %v2604 = vpow.pop %v2603
    %v2605 = vadd.f32 %v2604, 1.0
    %v2606 = vrcp.pop %v2605
    %v2607 = vmul.f32 1.0, %v2606
    %v2608 = vadd.f32 %v2591, %v2114
    %v2609 = vmul.f32 %v2600, %v2608
    %v2610 = vadd.f32 %v2452, %v2609
    %v2611 = vtanh.pop %v2610
    %v2612 = vsub.f32 1.0, %v2607
    %v2613 = vmul.f32 %v2612, %v2611
    %v2614 = vmul.f32 %v2607, %v2448
    %v2615 = vadd.f32 %v2613, %v2614
    %2616 = vst [vmem:[%s898] sm:$0xff] %v2615
    %v2617 = vld [vmem:[%s900] sm:$0xff]
    %v2618 = vld [vmem:[%s900 + $0x8] sm:$0xff]
    %v2619 = vld [vmem:[%s900 + $0x10] sm:$0xff]
    %2620 = vmatprep.subr.mxu0 %v2107
    %2621 = vmatpush1.msra.mxu0 %v2106
    %2622 = vmatprep.subr.mxu0 %v2104
    %2623 = vmatpush1.msra.mxu0 %v2103
    %2624 = vmatprep.subr.mxu0 %v2101
    %2625 = vmatpush1.msra.mxu0 %v2100
    %2626 = vmatprep.subr.mxu0 %v2098
    %2627 = vmatpush1.msra.mxu0 %v2097
    %2628 = vmatprep.subr.mxu0 %v2095
    %2629 = vmatpush1.msra.mxu0 %v2094
    %2630 = vmatprep.subr.mxu0 %v2092
    %2631 = vmatpush1.msra.mxu0 %v2091
    %2632 = vmatprep.subr.mxu0 %v2089
    %2633 = vmatpush1.msra.mxu0 %v2088
    %2634 = vmatprep.subr.mxu0 %v2086
    %2635 = vmatpush1.msra.mxu0 %v2085
    %2636 = vmatprep.subr.mxu0 %v2083
    %2637 = vmatpush1.msra.mxu0 %v2082
    %2638 = vmatprep.subr.mxu0 %v2080
    %2639 = vmatpush1.msra.mxu0 %v2079
    %2640 = vmatprep.subr.mxu0 %v2077
    %2641 = vmatpush1.msra.mxu0 %v2076
    %2642 = vmatprep.subr.mxu0 %v2074
    %2643 = vmatpush1.msra.mxu0 %v2073
    %2644 = vmatprep.subr.mxu0 %v2071
    %2645 = vmatpush1.msra.mxu0 %v2070
    %2646 = vmatprep.subr.mxu0 %v2068
    %2647 = vmatpush1.msra.mxu0 %v2067
    %2648 = vmatprep.subr.mxu0 %v2065
    %2649 = vmatpush1.msra.mxu0 %v2064
    %2650 = vmatprep.subr.mxu0 %v2062
    %2651 = vmatpush1.msra.mxu0 %v2061
    %2652 = vmatprep.subr.mxu0 0.0
    %2653 = vmatpush2.msra.mxu0 0.0
    %2654 = vmatprep.subr.mxu0 0.0
    %2655 = vmatpush2.msra.mxu0 0.0
    %2656 = vmatprep.subr.mxu0 0.0
    %2657 = vmatpush2.msra.mxu0 0.0
    %2658 = vmatprep.subr.mxu0 0.0
    %2659 = vmatpush2.msra.mxu0 0.0
    %2660 = vmatprep.subr.mxu0 0.0
    %2661 = vmatpush2.msra.mxu0 0.0
    %2662 = vmatprep.subr.mxu0 0.0
    %2663 = vmatpush2.msra.mxu0 0.0
    %2664 = vmatprep.subr.mxu0 0.0
    %2665 = vmatpush2.msra.mxu0 0.0
    %2666 = vmatprep.subr.mxu0 0.0
    %2667 = vmatpush2.msra.mxu0 0.0
    %2668 = vmatprep.subr.mxu0 0.0
    %2669 = vmatpush2.msra.mxu0 0.0
    %2670 = vmatprep.subr.mxu0 0.0
    %2671 = vmatpush2.msra.mxu0 0.0
    %2672 = vmatprep.subr.mxu0 0.0
    %2673 = vmatpush2.msra.mxu0 0.0
    %2674 = vmatprep.subr.mxu0 0.0
    %2675 = vmatpush2.msra.mxu0 0.0
    %2676 = vmatprep.subr.mxu0 0.0
    %2677 = vmatpush2.msra.mxu0 0.0
    %2678 = vmatprep.subr.mxu0 0.0
    %2679 = vmatpush2.msra.mxu0 0.0
    %2680 = vmatprep.subr.mxu0 0.0
    %2681 = vmatpush2.msra.mxu0 0.0
    %2682 = vmatprep.subr.mxu0 0.0
    %2683 = vmatpush2.msra.mxu0 0.0
    %2684 = vmatprep.mubr.f32.mxu0 0.0
    %2685 = vmatmul.mubr.f32.gmra.mxu0 %v2615
    %v2686 = vpop.f32.mrf.mxu0
    %v2687 = vadd.f32 0.0, %v2686
    %v2688 = vpop.f32.mrf.mxu0
    %v2689 = vadd.f32 0.0, %v2688
    %2690 = vdwg.mxu0
    %2691 = vmatprep.subr.mxu0 0.0
    %2692 = vmatpush1.msra.mxu0 %v2108
    %2693 = vmatprep.subr.mxu0 0.0
    %2694 = vmatpush1.msra.mxu0 %v2105
    %2695 = vmatprep.subr.mxu0 0.0
    %2696 = vmatpush1.msra.mxu0 %v2102
    %2697 = vmatprep.subr.mxu0 0.0
    %2698 = vmatpush1.msra.mxu0 %v2099
    %2699 = vmatprep.subr.mxu0 0.0
    %2700 = vmatpush1.msra.mxu0 %v2096
    %2701 = vmatprep.subr.mxu0 0.0
    %2702 = vmatpush1.msra.mxu0 %v2093
    %2703 = vmatprep.subr.mxu0 0.0
    %2704 = vmatpush1.msra.mxu0 %v2090
    %2705 = vmatprep.subr.mxu0 0.0
    %2706 = vmatpush1.msra.mxu0 %v2087
    %2707 = vmatprep.subr.mxu0 0.0
    %2708 = vmatpush1.msra.mxu0 %v2084
    %2709 = vmatprep.subr.mxu0 0.0
    %2710 = vmatpush1.msra.mxu0 %v2081
    %2711 = vmatprep.subr.mxu0 0.0
    %2712 = vmatpush1.msra.mxu0 %v2078
    %2713 = vmatprep.subr.mxu0 0.0
    %2714 = vmatpush1.msra.mxu0 %v2075
    %2715 = vmatprep.subr.mxu0 0.0
    %2716 = vmatpush1.msra.mxu0 %v2072
    %2717 = vmatprep.subr.mxu0 0.0
    %2718 = vmatpush1.msra.mxu0 %v2069
    %2719 = vmatprep.subr.mxu0 0.0
    %2720 = vmatpush1.msra.mxu0 %v2066
    %2721 = vmatprep.subr.mxu0 0.0
    %2722 = vmatpush1.msra.mxu0 %v2063
    %2723 = vmatprep.subr.mxu0 0.0
    %2724 = vmatpush2.msra.mxu0 0.0
    %2725 = vmatprep.subr.mxu0 0.0
    %2726 = vmatpush2.msra.mxu0 0.0
    %2727 = vmatprep.subr.mxu0 0.0
    %2728 = vmatpush2.msra.mxu0 0.0
    %2729 = vmatprep.subr.mxu0 0.0
    %2730 = vmatpush2.msra.mxu0 0.0
    %2731 = vmatprep.subr.mxu0 0.0
    %2732 = vmatpush2.msra.mxu0 0.0
    %2733 = vmatprep.subr.mxu0 0.0
    %2734 = vmatpush2.msra.mxu0 0.0
    %2735 = vmatprep.subr.mxu0 0.0
    %2736 = vmatpush2.msra.mxu0 0.0
    %2737 = vmatprep.subr.mxu0 0.0
    %2738 = vmatpush2.msra.mxu0 0.0
    %2739 = vmatprep.subr.mxu0 0.0
    %2740 = vmatpush2.msra.mxu0 0.0
    %2741 = vmatprep.subr.mxu0 0.0
    %2742 = vmatpush2.msra.mxu0 0.0
    %2743 = vmatprep.subr.mxu0 0.0
    %2744 = vmatpush2.msra.mxu0 0.0
    %2745 = vmatprep.subr.mxu0 0.0
    %2746 = vmatpush2.msra.mxu0 0.0
    %2747 = vmatprep.subr.mxu0 0.0
    %2748 = vmatpush2.msra.mxu0 0.0
    %2749 = vmatprep.subr.mxu0 0.0
    %2750 = vmatpush2.msra.mxu0 0.0
    %2751 = vmatprep.subr.mxu0 0.0
    %2752 = vmatpush2.msra.mxu0 0.0
    %2753 = vmatprep.subr.mxu0 0.0
    %2754 = vmatpush2.msra.mxu0 0.0
    %2755 = vmatprep.mubr.f32.mxu0 0.0
    %2756 = vmatmul.mubr.f32.gmra.mxu0 %v2615
    %v2757 = vpop.f32.mrf.mxu0
    %v2758 = vadd.f32 0.0, %v2757
    %v2759 = vpop.f32.mrf.mxu0
    %2760 = vdwg.mxu0
    %v2761 = vadd.f32 %v2617, %v2687
    %v2762 = vxor.u32 %v2761, 2147483648
    %v2763 = vmul.f32 %v2762, 1.442695
    %v2764 = vpow.pop %v2763
    %v2765 = vadd.f32 %v2764, 1.0
    %v2766 = vrcp.pop %v2765
    %v2767 = vmul.f32 1.0, %v2766
    %v2768 = vadd.f32 %v2618, %v2689
    %v2769 = vxor.u32 %v2768, 2147483648
    %v2770 = vmul.f32 %v2769, 1.442695
    %v2771 = vpow.pop %v2770
    %v2772 = vadd.f32 %v2771, 1.0
    %v2773 = vrcp.pop %v2772
    %v2774 = vmul.f32 1.0, %v2773
    %v2775 = vadd.f32 %v2758, %v2114
    %v2776 = vmul.f32 %v2767, %v2775
    %v2777 = vadd.f32 %v2619, %v2776
    %v2778 = vtanh.pop %v2777
    %v2779 = vsub.f32 1.0, %v2774
    %v2780 = vmul.f32 %v2779, %v2778
    %v2781 = vmul.f32 %v2774, %v2615
    %v2782 = vadd.f32 %v2780, %v2781
    %2783 = vst [vmem:[%s1067] sm:$0xff] %v2782
    %v2784 = vld [vmem:[%s1069] sm:$0xff]
    %v2785 = vld [vmem:[%s1069 + $0x8] sm:$0xff]
    %v2786 = vld [vmem:[%s1069 + $0x10] sm:$0xff]
    %2787 = vmatprep.subr.mxu0 %v2107
    %2788 = vmatpush1.msra.mxu0 %v2106
    %2789 = vmatprep.subr.mxu0 %v2104
    %2790 = vmatpush1.msra.mxu0 %v2103
    %2791 = vmatprep.subr.mxu0 %v2101
    %2792 = vmatpush1.msra.mxu0 %v2100
    %2793 = vmatprep.subr.mxu0 %v2098
    %2794 = vmatpush1.msra.mxu0 %v2097
    %2795 = vmatprep.subr.mxu0 %v2095
    %2796 = vmatpush1.msra.mxu0 %v2094
    %2797 = vmatprep.subr.mxu0 %v2092
    %2798 = vmatpush1.msra.mxu0 %v2091
    %2799 = vmatprep.subr.mxu0 %v2089
    %2800 = vmatpush1.msra.mxu0 %v2088
    %2801 = vmatprep.subr.mxu0 %v2086
    %2802 = vmatpush1.msra.mxu0 %v2085
    %2803 = vmatprep.subr.mxu0 %v2083
    %2804 = vmatpush1.msra.mxu0 %v2082
    %2805 = vmatprep.subr.mxu0 %v2080
    %2806 = vmatpush1.msra.mxu0 %v2079
    %2807 = vmatprep.subr.mxu0 %v2077
    %2808 = vmatpush1.msra.mxu0 %v2076
    %2809 = vmatprep.subr.mxu0 %v2074
    %2810 = vmatpush1.msra.mxu0 %v2073
    %2811 = vmatprep.subr.mxu0 %v2071
    %2812 = vmatpush1.msra.mxu0 %v2070
    %2813 = vmatprep.subr.mxu0 %v2068
    %2814 = vmatpush1.msra.mxu0 %v2067
    %2815 = vmatprep.subr.mxu0 %v2065
    %2816 = vmatpush1.msra.mxu0 %v2064
    %2817 = vmatprep.subr.mxu0 %v2062
    %2818 = vmatpush1.msra.mxu0 %v2061
    %2819 = vmatprep.subr.mxu0 0.0
    %2820 = vmatpush2.msra.mxu0 0.0
    %2821 = vmatprep.subr.mxu0 0.0
    %2822 = vmatpush2.msra.mxu0 0.0
    %2823 = vmatprep.subr.mxu0 0.0
    %2824 = vmatpush2.msra.mxu0 0.0
    %2825 = vmatprep.subr.mxu0 0.0
    %2826 = vmatpush2.msra.mxu0 0.0
    %2827 = vmatprep.subr.mxu0 0.0
    %2828 = vmatpush2.msra.mxu0 0.0
    %2829 = vmatprep.subr.mxu0 0.0
    %2830 = vmatpush2.msra.mxu0 0.0
    %2831 = vmatprep.subr.mxu0 0.0
    %2832 = vmatpush2.msra.mxu0 0.0
    %2833 = vmatprep.subr.mxu0 0.0
    %2834 = vmatpush2.msra.mxu0 0.0
    %2835 = vmatprep.subr.mxu0 0.0
    %2836 = vmatpush2.msra.mxu0 0.0
    %2837 = vmatprep.subr.mxu0 0.0
    %2838 = vmatpush2.msra.mxu0 0.0
    %2839 = vmatprep.subr.mxu0 0.0
    %2840 = vmatpush2.msra.mxu0 0.0
    %2841 = vmatprep.subr.mxu0 0.0
    %2842 = vmatpush2.msra.mxu0 0.0
    %2843 = vmatprep.subr.mxu0 0.0
    %2844 = vmatpush2.msra.mxu0 0.0
    %2845 = vmatprep.subr.mxu0 0.0
    %2846 = vmatpush2.msra.mxu0 0.0
    %2847 = vmatprep.subr.mxu0 0.0
    %2848 = vmatpush2.msra.mxu0 0.0
    %2849 = vmatprep.subr.mxu0 0.0
    %2850 = vmatpush2.msra.mxu0 0.0
    %2851 = vmatprep.mubr.f32.mxu0 0.0
    %2852 = vmatmul.mubr.f32.gmra.mxu0 %v2782
    %v2853 = vpop.f32.mrf.mxu0
    %v2854 = vadd.f32 0.0, %v2853
    %v2855 = vpop.f32.mrf.mxu0
    %v2856 = vadd.f32 0.0, %v2855
    %2857 = vdwg.mxu0
    %2858 = vmatprep.subr.mxu0 0.0
    %2859 = vmatpush1.msra.mxu0 %v2108
    %2860 = vmatprep.subr.mxu0 0.0
    %2861 = vmatpush1.msra.mxu0 %v2105
    %2862 = vmatprep.subr.mxu0 0.0
    %2863 = vmatpush1.msra.mxu0 %v2102
    %2864 = vmatprep.subr.mxu0 0.0
    %2865 = vmatpush1.msra.mxu0 %v2099
    %2866 = vmatprep.subr.mxu0 0.0
    %2867 = vmatpush1.msra.mxu0 %v2096
    %2868 = vmatprep.subr.mxu0 0.0
    %2869 = vmatpush1.msra.mxu0 %v2093
    %2870 = vmatprep.subr.mxu0 0.0
    %2871 = vmatpush1.msra.mxu0 %v2090
    %2872 = vmatprep.subr.mxu0 0.0
    %2873 = vmatpush1.msra.mxu0 %v2087
    %2874 = vmatprep.subr.mxu0 0.0
    %2875 = vmatpush1.msra.mxu0 %v2084
    %2876 = vmatprep.subr.mxu0 0.0
    %2877 = vmatpush1.msra.mxu0 %v2081
    %2878 = vmatprep.subr.mxu0 0.0
    %2879 = vmatpush1.msra.mxu0 %v2078
    %2880 = vmatprep.subr.mxu0 0.0
    %2881 = vmatpush1.msra.mxu0 %v2075
    %2882 = vmatprep.subr.mxu0 0.0
    %2883 = vmatpush1.msra.mxu0 %v2072
    %2884 = vmatprep.subr.mxu0 0.0
    %2885 = vmatpush1.msra.mxu0 %v2069
    %2886 = vmatprep.subr.mxu0 0.0
    %2887 = vmatpush1.msra.mxu0 %v2066
    %2888 = vmatprep.subr.mxu0 0.0
    %2889 = vmatpush1.msra.mxu0 %v2063
    %2890 = vmatprep.subr.mxu0 0.0
    %2891 = vmatpush2.msra.mxu0 0.0
    %2892 = vmatprep.subr.mxu0 0.0
    %2893 = vmatpush2.msra.mxu0 0.0
    %2894 = vmatprep.subr.mxu0 0.0
    %2895 = vmatpush2.msra.mxu0 0.0
    %2896 = vmatprep.subr.mxu0 0.0
    %2897 = vmatpush2.msra.mxu0 0.0
    %2898 = vmatprep.subr.mxu0 0.0
    %2899 = vmatpush2.msra.mxu0 0.0
    %2900 = vmatprep.subr.mxu0 0.0
    %2901 = vmatpush2.msra.mxu0 0.0
    %2902 = vmatprep.subr.mxu0 0.0
    %2903 = vmatpush2.msra.mxu0 0.0
    %2904 = vmatprep.subr.mxu0 0.0
    %2905 = vmatpush2.msra.mxu0 0.0
    %2906 = vmatprep.subr.mxu0 0.0
    %2907 = vmatpush2.msra.mxu0 0.0
    %2908 = vmatprep.subr.mxu0 0.0
    %2909 = vmatpush2.msra.mxu0 0.0
    %2910 = vmatprep.subr.mxu0 0.0
    %2911 = vmatpush2.msra.mxu0 0.0
    %2912 = vmatprep.subr.mxu0 0.0
    %2913 = vmatpush2.msra.mxu0 0.0
    %2914 = vmatprep.subr.mxu0 0.0
    %2915 = vmatpush2.msra.mxu0 0.0
    %2916 = vmatprep.subr.mxu0 0.0
    %2917 = vmatpush2.msra.mxu0 0.0
    %2918 = vmatprep.subr.mxu0 0.0
    %2919 = vmatpush2.msra.mxu0 0.0
    %2920 = vmatprep.subr.mxu0 0.0
    %2921 = vmatpush2.msra.mxu0 0.0
    %2922 = vmatprep.mubr.f32.mxu0 0.0
    %2923 = vmatmul.mubr.f32.gmra.mxu0 %v2782
    %v2924 = vpop.f32.mrf.mxu0
    %v2925 = vadd.f32 0.0, %v2924
    %v2926 = vpop.f32.mrf.mxu0
    %2927 = vdwg.mxu0
    %v2928 = vadd.f32 %v2784, %v2854
    %v2929 = vxor.u32 %v2928, 2147483648
    %v2930 = vmul.f32 %v2929, 1.442695
    %v2931 = vpow.pop %v2930
    %v2932 = vadd.f32 %v2931, 1.0
    %v2933 = vrcp.pop %v2932
    %v2934 = vmul.f32 1.0, %v2933
    %v2935 = vadd.f32 %v2785, %v2856
    %v2936 = vxor.u32 %v2935, 2147483648
    %v2937 = vmul.f32 %v2936, 1.442695
    %v2938 = vpow.pop %v2937
    %v2939 = vadd.f32 %v2938, 1.0
    %v2940 = vrcp.pop %v2939
    %v2941 = vmul.f32 1.0, %v2940
    %v2942 = vadd.f32 %v2925, %v2114
    %v2943 = vmul.f32 %v2934, %v2942
    %v2944 = vadd.f32 %v2786, %v2943
    %v2945 = vtanh.pop %v2944
    %v2946 = vsub.f32 1.0, %v2941
    %v2947 = vmul.f32 %v2946, %v2945
    %v2948 = vmul.f32 %v2941, %v2782
    %v2949 = vadd.f32 %v2947, %v2948
    %2950 = vst [vmem:[%s1236] sm:$0xff] %v2949
    %v2951 = vld [vmem:[%s1238] sm:$0xff]
    %v2952 = vld [vmem:[%s1238 + $0x8] sm:$0xff]
    %v2953 = vld [vmem:[%s1238 + $0x10] sm:$0xff]
    %2954 = vmatprep.subr.mxu0 %v2107
    %2955 = vmatpush1.msra.mxu0 %v2106
    %2956 = vmatprep.subr.mxu0 %v2104
    %2957 = vmatpush1.msra.mxu0 %v2103
    %2958 = vmatprep.subr.mxu0 %v2101
    %2959 = vmatpush1.msra.mxu0 %v2100
    %2960 = vmatprep.subr.mxu0 %v2098
    %2961 = vmatpush1.msra.mxu0 %v2097
    %2962 = vmatprep.subr.mxu0 %v2095
    %2963 = vmatpush1.msra.mxu0 %v2094
    %2964 = vmatprep.subr.mxu0 %v2092
    %2965 = vmatpush1.msra.mxu0 %v2091
    %2966 = vmatprep.subr.mxu0 %v2089
    %2967 = vmatpush1.msra.mxu0 %v2088
    %2968 = vmatprep.subr.mxu0 %v2086
    %2969 = vmatpush1.msra.mxu0 %v2085
    %2970 = vmatprep.subr.mxu0 %v2083
    %2971 = vmatpush1.msra.mxu0 %v2082
    %2972 = vmatprep.subr.mxu0 %v2080
    %2973 = vmatpush1.msra.mxu0 %v2079
    %2974 = vmatprep.subr.mxu0 %v2077
    %2975 = vmatpush1.msra.mxu0 %v2076
    %2976 = vmatprep.subr.mxu0 %v2074
    %2977 = vmatpush1.msra.mxu0 %v2073
    %2978 = vmatprep.subr.mxu0 %v2071
    %2979 = vmatpush1.msra.mxu0 %v2070
    %2980 = vmatprep.subr.mxu0 %v2068
    %2981 = vmatpush1.msra.mxu0 %v2067
    %2982 = vmatprep.subr.mxu0 %v2065
    %2983 = vmatpush1.msra.mxu0 %v2064
    %2984 = vmatprep.subr.mxu0 %v2062
    %2985 = vmatpush1.msra.mxu0 %v2061
    %2986 = vmatprep.subr.mxu0 0.0
    %2987 = vmatpush2.msra.mxu0 0.0
    %2988 = vmatprep.subr.mxu0 0.0
    %2989 = vmatpush2.msra.mxu0 0.0
    %2990 = vmatprep.subr.mxu0 0.0
    %2991 = vmatpush2.msra.mxu0 0.0
    %2992 = vmatprep.subr.mxu0 0.0
    %2993 = vmatpush2.msra.mxu0 0.0
    %2994 = vmatprep.subr.mxu0 0.0
    %2995 = vmatpush2.msra.mxu0 0.0
    %2996 = vmatprep.subr.mxu0 0.0
    %2997 = vmatpush2.msra.mxu0 0.0
    %2998 = vmatprep.subr.mxu0 0.0
    %2999 = vmatpush2.msra.mxu0 0.0
    %3000 = vmatprep.subr.mxu0 0.0
    %3001 = vmatpush2.msra.mxu0 0.0
    %3002 = vmatprep.subr.mxu0 0.0
    %3003 = vmatpush2.msra.mxu0 0.0
    %3004 = vmatprep.subr.mxu0 0.0
    %3005 = vmatpush2.msra.mxu0 0.0
    %3006 = vmatprep.subr.mxu0 0.0
    %3007 = vmatpush2.msra.mxu0 0.0
    %3008 = vmatprep.subr.mxu0 0.0
    %3009 = vmatpush2.msra.mxu0 0.0
    %3010 = vmatprep.subr.mxu0 0.0
    %3011 = vmatpush2.msra.mxu0 0.0
    %3012 = vmatprep.subr.mxu0 0.0
    %3013 = vmatpush2.msra.mxu0 0.0
    %3014 = vmatprep.subr.mxu0 0.0
    %3015 = vmatpush2.msra.mxu0 0.0
    %3016 = vmatprep.subr.mxu0 0.0
    %3017 = vmatpush2.msra.mxu0 0.0
    %3018 = vmatprep.mubr.f32.mxu0 0.0
    %3019 = vmatmul.mubr.f32.gmra.mxu0 %v2949
    %v3020 = vpop.f32.mrf.mxu0
    %v3021 = vadd.f32 0.0, %v3020
    %v3022 = vpop.f32.mrf.mxu0
    %v3023 = vadd.f32 0.0, %v3022
    %3024 = vdwg.mxu0
    %3025 = vmatprep.subr.mxu0 0.0
    %3026 = vmatpush1.msra.mxu0 %v2108
    %3027 = vmatprep.subr.mxu0 0.0
    %3028 = vmatpush1.msra.mxu0 %v2105
    %3029 = vmatprep.subr.mxu0 0.0
    %3030 = vmatpush1.msra.mxu0 %v2102
    %3031 = vmatprep.subr.mxu0 0.0
    %3032 = vmatpush1.msra.mxu0 %v2099
    %3033 = vmatprep.subr.mxu0 0.0
    %3034 = vmatpush1.msra.mxu0 %v2096
    %3035 = vmatprep.subr.mxu0 0.0
    %3036 = vmatpush1.msra.mxu0 %v2093
    %3037 = vmatprep.subr.mxu0 0.0
    %3038 = vmatpush1.msra.mxu0 %v2090
    %3039 = vmatprep.subr.mxu0 0.0
    %3040 = vmatpush1.msra.mxu0 %v2087
    %3041 = vmatprep.subr.mxu0 0.0
    %3042 = vmatpush1.msra.mxu0 %v2084
    %3043 = vmatprep.subr.mxu0 0.0
    %3044 = vmatpush1.msra.mxu0 %v2081
    %3045 = vmatprep.subr.mxu0 0.0
    %3046 = vmatpush1.msra.mxu0 %v2078
    %3047 = vmatprep.subr.mxu0 0.0
    %3048 = vmatpush1.msra.mxu0 %v2075
    %3049 = vmatprep.subr.mxu0 0.0
    %3050 = vmatpush1.msra.mxu0 %v2072
    %3051 = vmatprep.subr.mxu0 0.0
    %3052 = vmatpush1.msra.mxu0 %v2069
    %3053 = vmatprep.subr.mxu0 0.0
    %3054 = vmatpush1.msra.mxu0 %v2066
    %3055 = vmatprep.subr.mxu0 0.0
    %3056 = vmatpush1.msra.mxu0 %v2063
    %3057 = vmatprep.subr.mxu0 0.0
    %3058 = vmatpush2.msra.mxu0 0.0
    %3059 = vmatprep.subr.mxu0 0.0
    %3060 = vmatpush2.msra.mxu0 0.0
    %3061 = vmatprep.subr.mxu0 0.0
    %3062 = vmatpush2.msra.mxu0 0.0
    %3063 = vmatprep.subr.mxu0 0.0
    %3064 = vmatpush2.msra.mxu0 0.0
    %3065 = vmatprep.subr.mxu0 0.0
    %3066 = vmatpush2.msra.mxu0 0.0
    %3067 = vmatprep.subr.mxu0 0.0
    %3068 = vmatpush2.msra.mxu0 0.0
    %3069 = vmatprep.subr.mxu0 0.0
    %3070 = vmatpush2.msra.mxu0 0.0
    %3071 = vmatprep.subr.mxu0 0.0
    %3072 = vmatpush2.msra.mxu0 0.0
    %3073 = vmatprep.subr.mxu0 0.0
    %3074 = vmatpush2.msra.mxu0 0.0
    %3075 = vmatprep.subr.mxu0 0.0
    %3076 = vmatpush2.msra.mxu0 0.0
    %3077 = vmatprep.subr.mxu0 0.0
    %3078 = vmatpush2.msra.mxu0 0.0
    %3079 = vmatprep.subr.mxu0 0.0
    %3080 = vmatpush2.msra.mxu0 0.0
    %3081 = vmatprep.subr.mxu0 0.0
    %3082 = vmatpush2.msra.mxu0 0.0
    %3083 = vmatprep.subr.mxu0 0.0
    %3084 = vmatpush2.msra.mxu0 0.0
    %3085 = vmatprep.subr.mxu0 0.0
    %3086 = vmatpush2.msra.mxu0 0.0
    %3087 = vmatprep.subr.mxu0 0.0
    %3088 = vmatpush2.msra.mxu0 0.0
    %3089 = vmatprep.mubr.f32.mxu0 0.0
    %3090 = vmatmul.mubr.f32.gmra.mxu0 %v2949
    %v3091 = vpop.f32.mrf.mxu0
    %v3092 = vadd.f32 0.0, %v3091
    %v3093 = vpop.f32.mrf.mxu0
    %3094 = vdwg.mxu0
    %v3095 = vadd.f32 %v2951, %v3021
    %v3096 = vxor.u32 %v3095, 2147483648
    %v3097 = vmul.f32 %v3096, 1.442695
    %v3098 = vpow.pop %v3097
    %v3099 = vadd.f32 %v3098, 1.0
    %v3100 = vrcp.pop %v3099
    %v3101 = vmul.f32 1.0, %v3100
    %v3102 = vadd.f32 %v2952, %v3023
    %v3103 = vxor.u32 %v3102, 2147483648
    %v3104 = vmul.f32 %v3103, 1.442695
    %v3105 = vpow.pop %v3104
    %v3106 = vadd.f32 %v3105, 1.0
    %v3107 = vrcp.pop %v3106
    %v3108 = vmul.f32 1.0, %v3107
    %v3109 = vadd.f32 %v3092, %v2114
    %v3110 = vmul.f32 %v3101, %v3109
    %v3111 = vadd.f32 %v2953, %v3110
    %v3112 = vtanh.pop %v3111
    %v3113 = vsub.f32 1.0, %v3108
    %v3114 = vmul.f32 %v3113, %v3112
    %v3115 = vmul.f32 %v3108, %v2949
    %v3116 = vadd.f32 %v3114, %v3115
    %3117 = vst [vmem:[%s1405] sm:$0xff] %v3116
    %v3118 = vld [vmem:[%s1407] sm:$0xff]
    %v3119 = vld [vmem:[%s1407 + $0x8] sm:$0xff]
    %v3120 = vld [vmem:[%s1407 + $0x10] sm:$0xff]
    %3121 = vmatprep.subr.mxu0 %v2107
    %3122 = vmatpush1.msra.mxu0 %v2106
    %3123 = vmatprep.subr.mxu0 %v2104
    %3124 = vmatpush1.msra.mxu0 %v2103
    %3125 = vmatprep.subr.mxu0 %v2101
    %3126 = vmatpush1.msra.mxu0 %v2100
    %3127 = vmatprep.subr.mxu0 %v2098
    %3128 = vmatpush1.msra.mxu0 %v2097
    %3129 = vmatprep.subr.mxu0 %v2095
    %3130 = vmatpush1.msra.mxu0 %v2094
    %3131 = vmatprep.subr.mxu0 %v2092
    %3132 = vmatpush1.msra.mxu0 %v2091
    %3133 = vmatprep.subr.mxu0 %v2089
    %3134 = vmatpush1.msra.mxu0 %v2088
    %3135 = vmatprep.subr.mxu0 %v2086
    %3136 = vmatpush1.msra.mxu0 %v2085
    %3137 = vmatprep.subr.mxu0 %v2083
    %3138 = vmatpush1.msra.mxu0 %v2082
    %3139 = vmatprep.subr.mxu0 %v2080
    %3140 = vmatpush1.msra.mxu0 %v2079
    %3141 = vmatprep.subr.mxu0 %v2077
    %3142 = vmatpush1.msra.mxu0 %v2076
    %3143 = vmatprep.subr.mxu0 %v2074
    %3144 = vmatpush1.msra.mxu0 %v2073
    %3145 = vmatprep.subr.mxu0 %v2071
    %3146 = vmatpush1.msra.mxu0 %v2070
    %3147 = vmatprep.subr.mxu0 %v2068
    %3148 = vmatpush1.msra.mxu0 %v2067
    %3149 = vmatprep.subr.mxu0 %v2065
    %3150 = vmatpush1.msra.mxu0 %v2064
    %3151 = vmatprep.subr.mxu0 %v2062
    %3152 = vmatpush1.msra.mxu0 %v2061
    %3153 = vmatprep.subr.mxu0 0.0
    %3154 = vmatpush2.msra.mxu0 0.0
    %3155 = vmatprep.subr.mxu0 0.0
    %3156 = vmatpush2.msra.mxu0 0.0
    %3157 = vmatprep.subr.mxu0 0.0
    %3158 = vmatpush2.msra.mxu0 0.0
    %3159 = vmatprep.subr.mxu0 0.0
    %3160 = vmatpush2.msra.mxu0 0.0
    %3161 = vmatprep.subr.mxu0 0.0
    %3162 = vmatpush2.msra.mxu0 0.0
    %3163 = vmatprep.subr.mxu0 0.0
    %3164 = vmatpush2.msra.mxu0 0.0
    %3165 = vmatprep.subr.mxu0 0.0
    %3166 = vmatpush2.msra.mxu0 0.0
    %3167 = vmatprep.subr.mxu0 0.0
    %3168 = vmatpush2.msra.mxu0 0.0
    %3169 = vmatprep.subr.mxu0 0.0
    %3170 = vmatpush2.msra.mxu0 0.0
    %3171 = vmatprep.subr.mxu0 0.0
    %3172 = vmatpush2.msra.mxu0 0.0
    %3173 = vmatprep.subr.mxu0 0.0
    %3174 = vmatpush2.msra.mxu0 0.0
    %3175 = vmatprep.subr.mxu0 0.0
    %3176 = vmatpush2.msra.mxu0 0.0
    %3177 = vmatprep.subr.mxu0 0.0
    %3178 = vmatpush2.msra.mxu0 0.0
    %3179 = vmatprep.subr.mxu0 0.0
    %3180 = vmatpush2.msra.mxu0 0.0
    %3181 = vmatprep.subr.mxu0 0.0
    %3182 = vmatpush2.msra.mxu0 0.0
    %3183 = vmatprep.subr.mxu0 0.0
    %3184 = vmatpush2.msra.mxu0 0.0
    %3185 = vmatprep.mubr.f32.mxu0 0.0
    %3186 = vmatmul.mubr.f32.gmra.mxu0 %v3116
    %v3187 = vpop.f32.mrf.mxu0
    %v3188 = vadd.f32 0.0, %v3187
    %v3189 = vpop.f32.mrf.mxu0
    %v3190 = vadd.f32 0.0, %v3189
    %3191 = vdwg.mxu0
    %3192 = vmatprep.subr.mxu0 0.0
    %3193 = vmatpush1.msra.mxu0 %v2108
    %3194 = vmatprep.subr.mxu0 0.0
    %3195 = vmatpush1.msra.mxu0 %v2105
    %3196 = vmatprep.subr.mxu0 0.0
    %3197 = vmatpush1.msra.mxu0 %v2102
    %3198 = vmatprep.subr.mxu0 0.0
    %3199 = vmatpush1.msra.mxu0 %v2099
    %3200 = vmatprep.subr.mxu0 0.0
    %3201 = vmatpush1.msra.mxu0 %v2096
    %3202 = vmatprep.subr.mxu0 0.0
    %3203 = vmatpush1.msra.mxu0 %v2093
    %3204 = vmatprep.subr.mxu0 0.0
    %3205 = vmatpush1.msra.mxu0 %v2090
    %3206 = vmatprep.subr.mxu0 0.0
    %3207 = vmatpush1.msra.mxu0 %v2087
    %3208 = vmatprep.subr.mxu0 0.0
    %3209 = vmatpush1.msra.mxu0 %v2084
    %3210 = vmatprep.subr.mxu0 0.0
    %3211 = vmatpush1.msra.mxu0 %v2081
    %3212 = vmatprep.subr.mxu0 0.0
    %3213 = vmatpush1.msra.mxu0 %v2078
    %3214 = vmatprep.subr.mxu0 0.0
    %3215 = vmatpush1.msra.mxu0 %v2075
    %3216 = vmatprep.subr.mxu0 0.0
    %3217 = vmatpush1.msra.mxu0 %v2072
    %3218 = vmatprep.subr.mxu0 0.0
    %3219 = vmatpush1.msra.mxu0 %v2069
    %3220 = vmatprep.subr.mxu0 0.0
    %3221 = vmatpush1.msra.mxu0 %v2066
    %3222 = vmatprep.subr.mxu0 0.0
    %3223 = vmatpush1.msra.mxu0 %v2063
    %3224 = vmatprep.subr.mxu0 0.0
    %3225 = vmatpush2.msra.mxu0 0.0
    %3226 = vmatprep.subr.mxu0 0.0
    %3227 = vmatpush2.msra.mxu0 0.0
    %3228 = vmatprep.subr.mxu0 0.0
    %3229 = vmatpush2.msra.mxu0 0.0
    %3230 = vmatprep.subr.mxu0 0.0
    %3231 = vmatpush2.msra.mxu0 0.0
    %3232 = vmatprep.subr.mxu0 0.0
    %3233 = vmatpush2.msra.mxu0 0.0
    %3234 = vmatprep.subr.mxu0 0.0
    %3235 = vmatpush2.msra.mxu0 0.0
    %3236 = vmatprep.subr.mxu0 0.0
    %3237 = vmatpush2.msra.mxu0 0.0
    %3238 = vmatprep.subr.mxu0 0.0
    %3239 = vmatpush2.msra.mxu0 0.0
    %3240 = vmatprep.subr.mxu0 0.0
    %3241 = vmatpush2.msra.mxu0 0.0
    %3242 = vmatprep.subr.mxu0 0.0
    %3243 = vmatpush2.msra.mxu0 0.0
    %3244 = vmatprep.subr.mxu0 0.0
    %3245 = vmatpush2.msra.mxu0 0.0
    %3246 = vmatprep.subr.mxu0 0.0
    %3247 = vmatpush2.msra.mxu0 0.0
    %3248 = vmatprep.subr.mxu0 0.0
    %3249 = vmatpush2.msra.mxu0 0.0
    %3250 = vmatprep.subr.mxu0 0.0
    %3251 = vmatpush2.msra.mxu0 0.0
    %3252 = vmatprep.subr.mxu0 0.0
    %3253 = vmatpush2.msra.mxu0 0.0
    %3254 = vmatprep.subr.mxu0 0.0
    %3255 = vmatpush2.msra.mxu0 0.0
    %3256 = vmatprep.mubr.f32.mxu0 0.0
    %3257 = vmatmul.mubr.f32.gmra.mxu0 %v3116
    %v3258 = vpop.f32.mrf.mxu0
    %v3259 = vadd.f32 0.0, %v3258
    %v3260 = vpop.f32.mrf.mxu0
    %3261 = vdwg.mxu0
    %v3262 = vadd.f32 %v3118, %v3188
    %v3263 = vxor.u32 %v3262, 2147483648
    %v3264 = vmul.f32 %v3263, 1.442695
    %v3265 = vpow.pop %v3264
    %v3266 = vadd.f32 %v3265, 1.0
    %v3267 = vrcp.pop %v3266
    %v3268 = vmul.f32 1.0, %v3267
    %v3269 = vadd.f32 %v3119, %v3190
    %v3270 = vxor.u32 %v3269, 2147483648
    %v3271 = vmul.f32 %v3270, 1.442695
    %v3272 = vpow.pop %v3271
    %v3273 = vadd.f32 %v3272, 1.0
    %v3274 = vrcp.pop %v3273
    %v3275 = vmul.f32 1.0, %v3274
    %v3276 = vadd.f32 %v3259, %v2114
    %v3277 = vmul.f32 %v3268, %v3276
    %v3278 = vadd.f32 %v3120, %v3277
    %v3279 = vtanh.pop %v3278
    %v3280 = vsub.f32 1.0, %v3275
    %v3281 = vmul.f32 %v3280, %v3279
    %v3282 = vmul.f32 %v3275, %v3116
    %v3283 = vadd.f32 %v3281, %v3282
    %3284 = vst [vmem:[%s1574] sm:$0xff] %v3283
    %v3285 = vld [vmem:[%s1576] sm:$0xff]
    %v3286 = vld [vmem:[%s1576 + $0x8] sm:$0xff]
    %v3287 = vld [vmem:[%s1576 + $0x10] sm:$0xff]
    %3288 = vmatprep.subr.mxu0 %v2107
    %3289 = vmatpush1.msra.mxu0 %v2106
    %3290 = vmatprep.subr.mxu0 %v2104
    %3291 = vmatpush1.msra.mxu0 %v2103
    %3292 = vmatprep.subr.mxu0 %v2101
    %3293 = vmatpush1.msra.mxu0 %v2100
    %3294 = vmatprep.subr.mxu0 %v2098
    %3295 = vmatpush1.msra.mxu0 %v2097
    %3296 = vmatprep.subr.mxu0 %v2095
    %3297 = vmatpush1.msra.mxu0 %v2094
    %3298 = vmatprep.subr.mxu0 %v2092
    %3299 = vmatpush1.msra.mxu0 %v2091
    %3300 = vmatprep.subr.mxu0 %v2089
    %3301 = vmatpush1.msra.mxu0 %v2088
    %3302 = vmatprep.subr.mxu0 %v2086
    %3303 = vmatpush1.msra.mxu0 %v2085
    %3304 = vmatprep.subr.mxu0 %v2083
    %3305 = vmatpush1.msra.mxu0 %v2082
    %3306 = vmatprep.subr.mxu0 %v2080
    %3307 = vmatpush1.msra.mxu0 %v2079
    %3308 = vmatprep.subr.mxu0 %v2077
    %3309 = vmatpush1.msra.mxu0 %v2076
    %3310 = vmatprep.subr.mxu0 %v2074
    %3311 = vmatpush1.msra.mxu0 %v2073
    %3312 = vmatprep.subr.mxu0 %v2071
    %3313 = vmatpush1.msra.mxu0 %v2070
    %3314 = vmatprep.subr.mxu0 %v2068
    %3315 = vmatpush1.msra.mxu0 %v2067
    %3316 = vmatprep.subr.mxu0 %v2065
    %3317 = vmatpush1.msra.mxu0 %v2064
    %3318 = vmatprep.subr.mxu0 %v2062
    %3319 = vmatpush1.msra.mxu0 %v2061
    %3320 = vmatprep.subr.mxu0 0.0
    %3321 = vmatpush2.msra.mxu0 0.0
    %3322 = vmatprep.subr.mxu0 0.0
    %3323 = vmatpush2.msra.mxu0 0.0
    %3324 = vmatprep.subr.mxu0 0.0
    %3325 = vmatpush2.msra.mxu0 0.0
    %3326 = vmatprep.subr.mxu0 0.0
    %3327 = vmatpush2.msra.mxu0 0.0
    %3328 = vmatprep.subr.mxu0 0.0
    %3329 = vmatpush2.msra.mxu0 0.0
    %3330 = vmatprep.subr.mxu0 0.0
    %3331 = vmatpush2.msra.mxu0 0.0
    %3332 = vmatprep.subr.mxu0 0.0
    %3333 = vmatpush2.msra.mxu0 0.0
    %3334 = vmatprep.subr.mxu0 0.0
    %3335 = vmatpush2.msra.mxu0 0.0
    %3336 = vmatprep.subr.mxu0 0.0
    %3337 = vmatpush2.msra.mxu0 0.0
    %3338 = vmatprep.subr.mxu0 0.0
    %3339 = vmatpush2.msra.mxu0 0.0
    %3340 = vmatprep.subr.mxu0 0.0
    %3341 = vmatpush2.msra.mxu0 0.0
    %3342 = vmatprep.subr.mxu0 0.0
    %3343 = vmatpush2.msra.mxu0 0.0
    %3344 = vmatprep.subr.mxu0 0.0
    %3345 = vmatpush2.msra.mxu0 0.0
    %3346 = vmatprep.subr.mxu0 0.0
    %3347 = vmatpush2.msra.mxu0 0.0
    %3348 = vmatprep.subr.mxu0 0.0
    %3349 = vmatpush2.msra.mxu0 0.0
    %3350 = vmatprep.subr.mxu0 0.0
    %3351 = vmatpush2.msra.mxu0 0.0
    %3352 = vmatprep.mubr.f32.mxu0 0.0
    %3353 = vmatmul.mubr.f32.gmra.mxu0 %v3283
    %v3354 = vpop.f32.mrf.mxu0
    %v3355 = vadd.f32 0.0, %v3354
    %v3356 = vpop.f32.mrf.mxu0
    %v3357 = vadd.f32 0.0, %v3356
    %3358 = vdwg.mxu0
    %3359 = vmatprep.subr.mxu0 0.0
    %3360 = vmatpush1.msra.mxu0 %v2108
    %3361 = vmatprep.subr.mxu0 0.0
    %3362 = vmatpush1.msra.mxu0 %v2105
    %3363 = vmatprep.subr.mxu0 0.0
    %3364 = vmatpush1.msra.mxu0 %v2102
    %3365 = vmatprep.subr.mxu0 0.0
    %3366 = vmatpush1.msra.mxu0 %v2099
    %3367 = vmatprep.subr.mxu0 0.0
    %3368 = vmatpush1.msra.mxu0 %v2096
    %3369 = vmatprep.subr.mxu0 0.0
    %3370 = vmatpush1.msra.mxu0 %v2093
    %3371 = vmatprep.subr.mxu0 0.0
    %3372 = vmatpush1.msra.mxu0 %v2090
    %3373 = vmatprep.subr.mxu0 0.0
    %3374 = vmatpush1.msra.mxu0 %v2087
    %3375 = vmatprep.subr.mxu0 0.0
    %3376 = vmatpush1.msra.mxu0 %v2084
    %3377 = vmatprep.subr.mxu0 0.0
    %3378 = vmatpush1.msra.mxu0 %v2081
    %3379 = vmatprep.subr.mxu0 0.0
    %3380 = vmatpush1.msra.mxu0 %v2078
    %3381 = vmatprep.subr.mxu0 0.0
    %3382 = vmatpush1.msra.mxu0 %v2075
    %3383 = vmatprep.subr.mxu0 0.0
    %3384 = vmatpush1.msra.mxu0 %v2072
    %3385 = vmatprep.subr.mxu0 0.0
    %3386 = vmatpush1.msra.mxu0 %v2069
    %3387 = vmatprep.subr.mxu0 0.0
    %3388 = vmatpush1.msra.mxu0 %v2066
    %3389 = vmatprep.subr.mxu0 0.0
    %3390 = vmatpush1.msra.mxu0 %v2063
    %3391 = vmatprep.subr.mxu0 0.0
    %3392 = vmatpush2.msra.mxu0 0.0
    %3393 = vmatprep.subr.mxu0 0.0
    %3394 = vmatpush2.msra.mxu0 0.0
    %3395 = vmatprep.subr.mxu0 0.0
    %3396 = vmatpush2.msra.mxu0 0.0
    %3397 = vmatprep.subr.mxu0 0.0
    %3398 = vmatpush2.msra.mxu0 0.0
    %3399 = vmatprep.subr.mxu0 0.0
    %3400 = vmatpush2.msra.mxu0 0.0
    %3401 = vmatprep.subr.mxu0 0.0
    %3402 = vmatpush2.msra.mxu0 0.0
    %3403 = vmatprep.subr.mxu0 0.0
    %3404 = vmatpush2.msra.mxu0 0.0
    %3405 = vmatprep.subr.mxu0 0.0
    %3406 = vmatpush2.msra.mxu0 0.0
    %3407 = vmatprep.subr.mxu0 0.0
    %3408 = vmatpush2.msra.mxu0 0.0
    %3409 = vmatprep.subr.mxu0 0.0
    %3410 = vmatpush2.msra.mxu0 0.0
    %3411 = vmatprep.subr.mxu0 0.0
    %3412 = vmatpush2.msra.mxu0 0.0
    %3413 = vmatprep.subr.mxu0 0.0
    %3414 = vmatpush2.msra.mxu0 0.0
    %3415 = vmatprep.subr.mxu0 0.0
    %3416 = vmatpush2.msra.mxu0 0.0
    %3417 = vmatprep.subr.mxu0 0.0
    %3418 = vmatpush2.msra.mxu0 0.0
    %3419 = vmatprep.subr.mxu0 0.0
    %3420 = vmatpush2.msra.mxu0 0.0
    %3421 = vmatprep.subr.mxu0 0.0
    %3422 = vmatpush2.msra.mxu0 0.0
    %3423 = vmatprep.mubr.f32.mxu0 0.0
    %3424 = vmatmul.mubr.f32.gmra.mxu0 %v3283
    %v3425 = vpop.f32.mrf.mxu0
    %v3426 = vadd.f32 0.0, %v3425
    %v3427 = vpop.f32.mrf.mxu0
    %3428 = vdwg.mxu0
    %v3429 = vadd.f32 %v3285, %v3355
    %v3430 = vxor.u32 %v3429, 2147483648
    %v3431 = vmul.f32 %v3430, 1.442695
    %v3432 = vpow.pop %v3431
    %v3433 = vadd.f32 %v3432, 1.0
    %v3434 = vrcp.pop %v3433
    %v3435 = vmul.f32 1.0, %v3434
    %v3436 = vadd.f32 %v3286, %v3357
    %v3437 = vxor.u32 %v3436, 2147483648
    %v3438 = vmul.f32 %v3437, 1.442695
    %v3439 = vpow.pop %v3438
    %v3440 = vadd.f32 %v3439, 1.0
    %v3441 = vrcp.pop %v3440
    %v3442 = vmul.f32 1.0, %v3441
    %v3443 = vadd.f32 %v3426, %v2114
    %v3444 = vmul.f32 %v3435, %v3443
    %v3445 = vadd.f32 %v3287, %v3444
    %v3446 = vtanh.pop %v3445
    %v3447 = vsub.f32 1.0, %v3442
    %v3448 = vmul.f32 %v3447, %v3446
    %v3449 = vmul.f32 %v3442, %v3283
    %v3450 = vadd.f32 %v3448, %v3449
    %3451 = vst [vmem:[%s1743] sm:$0xff] %v3450
    %s3452 = scalar_lea.vmem [#allocation5], 8
    %3453 = vst [vmem:[%s3452] sm:$0xff] %v3450
    // Predicated region
    $region38: #{seq2seq_encoder_forward.1} parent=1 // pred_check
      _
    $region39: #{seq2seq_encoder_forward.1} parent=1 // pred_check_branch
      %3455 = sbr.rel (0) target = $region41
    $region40: #{seq2seq_encoder_forward.1} parent=1 // pred_region
      %s3457 = ssub.s32 1024, 1024
      %3458 = vsyncadd [#allocation4], %s3457
      %s3459 = sshll.u32 [#allocation3], 4
      %s3460 = int_to_ptr.vmem [resolvable:$true] %s3459
      %3465 = dma.vmem_to_hbm [thread:$0]  %s3460, 1024, %s9, [#allocation4], 128, 128, 8
    $region41: #{seq2seq_encoder_forward.1} parent=1 // pred_fallthru
      _
    // Predicated region
    $region42: #{seq2seq_encoder_forward.1} parent=1 // pred_check
      _
    $region43: #{seq2seq_encoder_forward.1} parent=1 // pred_check_branch
      %3467 = sbr.rel (0) target = $region45
    $region44: #{seq2seq_encoder_forward.1} parent=1 // pred_region
      %s3469 = ssub.s32 256, 256
      %3470 = vsyncadd [#allocation6], %s3469
      %s3471 = sshll.u32 [#allocation5], 4
      %s3472 = int_to_ptr.vmem [resolvable:$true] %s3471
      %3477 = dma.vmem_to_hbm [thread:$0]  %s3472, 256, %s10, [#allocation6], 128, 128, 8
    $region45: #{seq2seq_encoder_forward.1} parent=1 // pred_fallthru
      _
    // Predicated region
    $region46: #{seq2seq_encoder_forward.1} parent=1 // pred_check
      _
    $region47: #{seq2seq_encoder_forward.1} parent=1 // pred_check_branch
      %3479 = sbr.rel (0) target = $region49
    $region48: #{seq2seq_encoder_forward.1} parent=1 // pred_region
      %3480 = dma.done [#allocation4], 1024
    $region49: #{seq2seq_encoder_forward.1} parent=1 // pred_fallthru
      _
    // Predicated region
    $region50: #{seq2seq_encoder_forward.1} parent=1 // pred_check
      _
    $region51: #{seq2seq_encoder_forward.1} parent=1 // pred_check_branch
      %3482 = sbr.rel (0) target = $region53
    $region52: #{seq2seq_encoder_forward.1} parent=1 // pred_region
      %3483 = dma.done [#allocation6], 256
    $region53: #{seq2seq_encoder_forward.1} parent=1 // pred_fallthru
      _
    %3484 = vsyncpa [#allocation4], 1
    %3485 = vsyncpa [#allocation6], 1

</llo_original>
